<compile_context>
chip_gen: v5e
topology: v5e:2x2
jax: 0.10.0
libtpu: 0.0.40
codegen_flags: <defaults>
</compile_context>

<pallas_src>
import jax
import jax.numpy as jnp
from jax.experimental import pallas as pl
from jax.experimental.pallas import tpu as pltpu

_TILE_M = 512                      # pooled-output rows per grid step (conv layers)
_TILE_N_FC = 256                   # samples per grid step (fused conv3+fc layer)
_VMEM_LIMIT = 32 * 1024 * 1024     # explicit scoped-VMEM budget (safe on all gens)


def _round_up(x, m):
    return ((x + m - 1) // m) * m


# ---------------- Pallas kernels ----------------

def conv_relu_pool_kernel(q_ref, w_ref, b_ref, o_ref):
    """Fused conv (im2col matmul) + 2x2 max-pool + bias + ReLU.

    q_ref : (4, TILE_M, Kp) bf16  -- 4 pool-quadrant im2col slabs, stacked major
    w_ref : (Kp, Cout)      bf16
    b_ref : (1, Cout)       f32
    o_ref : (TILE_M, Cout)  bf16
    """
    _, tm, kp = q_ref.shape
    cout = w_ref.shape[1]
    # One long MXU matmul over all 4 quadrants (major-dim merge; TILE_M is a
    # multiple of 8 so the reshape is layout-free).
    q = q_ref[...].reshape(4 * tm, kp)
    y = jnp.dot(q, w_ref[...], preferred_element_type=jnp.float32)
    y = y.reshape(4, tm, cout)
    # Max over the 2x2 pooling window; bias + ReLU hoisted out of the max.
    pooled = jnp.maximum(jnp.maximum(y[0], y[1]), jnp.maximum(y[2], y[3]))
    o_ref[...] = jnp.maximum(pooled + b_ref[...], 0.0).astype(o_ref.dtype)


def conv_pool_fc_kernel(q_ref, wc_ref, bc_ref, wf_ref, bf_ref, o_ref):
    """Fused conv3 (im2col matmul) + 2x2 max-pool + bias + ReLU + flatten + fc.

    q_ref : (P*4, TN, Kp) bf16  -- P pooled positions x 4 pool quadrants
    wc_ref: (Kp, Cc)      bf16  -- conv weights
    bc_ref: (1, Cc)       f32   -- conv bias
    wf_ref: (P, Cc, 10)   bf16  -- fc weights regrouped by pooled position
    bf_ref: (1, 10)       f32   -- fc bias
    o_ref : (TN, 10)      f32
    """
    pq, tn, kp = q_ref.shape
    p = pq // 4
    cc = wc_ref.shape[1]
    cout = o_ref.shape[1]
    # One long MXU matmul over all positions/quadrants.
    q = q_ref[...].reshape(pq * tn, kp)
    y = jnp.dot(q, wc_ref[...], preferred_element_type=jnp.float32)
    y = y.reshape(pq, tn, cc)
    acc = jnp.zeros((tn, cout), jnp.float32)
    for pos in range(p):                       # static unroll (P == 4)
        y0 = y[4 * pos + 0]
        y1 = y[4 * pos + 1]
        y2 = y[4 * pos + 2]
        y3 = y[4 * pos + 3]
        pooled = jnp.maximum(jnp.maximum(y0, y1), jnp.maximum(y2, y3))
        act = jnp.maximum(pooled + bc_ref[...], 0.0).astype(jnp.bfloat16)
        acc = acc + jnp.dot(act, wf_ref[pos],
                            preferred_element_type=jnp.float32)
    o_ref[...] = (acc + bf_ref[...]).astype(o_ref.dtype)


# ---------------- JAX glue ----------------

def _pool_quadrant_stack(x, kh_sz, kw_sz, k_pad):
    """x: (N, Hp, Wp, Cin) -> (4, N*Hm*Wm, Kp) bf16 quadrant-stacked im2col.

    Quadrant (dh, dw) holds the patches whose conv-output position is
    (2*i + dh, 2*j + dw) -- the 4 members of each 2x2 max-pool window.
    Feature order inside K is (kh, kw, cin), matching the weight reshape.
    """
    n, hp, wp, cin = x.shape
    ho, wo = hp - kh_sz + 1, wp - kw_sz + 1
    hm, wm = ho // 2, wo // 2          # MaxPool2d(2) uses floor
    k = kh_sz * kw_sz * cin
    quads = []
    for dh in range(2):
        for dw in range(2):
            feats = [
                x[:, dh + kh: dh + kh + 2 * hm: 2,
                     dw + kw: dw + kw + 2 * wm: 2, :]
                for kh in range(kh_sz) for kw in range(kw_sz)
            ]
            q = jnp.concatenate(feats, axis=-1).reshape(n * hm * wm, k)
            quads.append(q)
    stack = jnp.stack(quads, axis=0)                       # (4, M, K)
    if k_pad > k:
        stack = jnp.pad(stack, ((0, 0), (0, 0), (0, k_pad - k)))
    return stack, (n, hm, wm)


def _pos_quad_stack(x, kh_sz, kw_sz, k_pad):
    """x: (N, Hp, Wp, Cin) -> (Hm*Wm*4, N, Kp) bf16 im2col stack.

    Axis 0 index = (pi*Wm + pj)*4 + dh*2 + dw, i.e. pooled position major,
    pool quadrant minor.  Feature order inside K is (kh, kw, cin).
    """
    n, hp, wp, cin = x.shape
    ho, wo = hp - kh_sz + 1, wp - kw_sz + 1
    hm, wm = ho // 2, wo // 2
    k = kh_sz * kw_sz * cin
    slabs = []
    for pi in range(hm):
        for pj in range(wm):
            for dh in range(2):
                for dw in range(2):
                    oi, oj = 2 * pi + dh, 2 * pj + dw
                    slabs.append(
                        x[:, oi:oi + kh_sz, oj:oj + kw_sz, :].reshape(n, k))
    stack = jnp.stack(slabs, axis=0)                       # (Hm*Wm*4, N, K)
    if k_pad > k:
        stack = jnp.pad(stack, ((0, 0), (0, 0), (0, k_pad - k)))
    return stack, (hm, wm)


def conv_relu_pool(x_nhwc, w_mat, b_row, *, kh_sz, kw_sz, pad=0,
                   out_dtype=jnp.bfloat16):
    if pad:
        x_nhwc = jnp.pad(x_nhwc, ((0, 0), (pad, pad), (pad, pad), (0, 0)))
    kp, cout = w_mat.shape
    stack, (n, hm, wm) = _pool_quadrant_stack(x_nhwc, kh_sz, kw_sz, kp)
    m = n * hm * wm
    # Pad the row axis so every grid block is full (multiple-of-8 rows).
    m_pad = _round_up(m, 8)
    tile_m = min(_TILE_M, m_pad)
    m_pad = _round_up(m_pad, tile_m)
    if m_pad > m:
        stack = jnp.pad(stack, ((0, 0), (0, m_pad - m), (0, 0)))
    out = pl.pallas_call(
        conv_relu_pool_kernel,
        out_shape=jax.ShapeDtypeStruct((m_pad, cout), out_dtype),
        grid_spec=pltpu.PrefetchScalarGridSpec(
            num_scalar_prefetch=0,
            grid=(m_pad // tile_m,),
            in_specs=[
                pl.BlockSpec((4, tile_m, kp), lambda i: (0, i, 0)),
                pl.BlockSpec((kp, cout), lambda i: (0, 0)),
                pl.BlockSpec((1, cout), lambda i: (0, 0)),
            ],
            out_specs=pl.BlockSpec((tile_m, cout), lambda i: (i, 0)),
        ),
        compiler_params=pltpu.CompilerParams(
            dimension_semantics=("parallel",),
            vmem_limit_bytes=_VMEM_LIMIT),
    )(stack, w_mat, b_row)
    return out[:m].reshape(n, hm, wm, cout)


def conv_pool_fc(x_nhwc, wc_mat, bc_row, wf_3d, bf_row, *, kh_sz, kw_sz):
    """Fused conv3 + ReLU + MaxPool(2) + flatten + fc."""
    n = x_nhwc.shape[0]
    kp, cc = wc_mat.shape
    stack, (hm, wm) = _pos_quad_stack(x_nhwc, kh_sz, kw_sz, kp)  # (P*4, N, Kp)
    p = hm * wm
    cout = wf_3d.shape[-1]
    # Pad batch so every grid block is full and bf16-sublane aligned.
    n_pad = _round_up(max(n, 1), 16)
    tile_n = min(_TILE_N_FC, n_pad)
    n_pad = _round_up(n_pad, tile_n)
    if n_pad > n:
        stack = jnp.pad(stack, ((0, 0), (0, n_pad - n), (0, 0)))
    out = pl.pallas_call(
        conv_pool_fc_kernel,
        out_shape=jax.ShapeDtypeStruct((n_pad, cout), jnp.float32),
        grid_spec=pltpu.PrefetchScalarGridSpec(
            num_scalar_prefetch=0,
            grid=(n_pad // tile_n,),
            in_specs=[
                pl.BlockSpec((4 * p, tile_n, kp), lambda i: (0, i, 0)),
                pl.BlockSpec((kp, cc), lambda i: (0, 0)),
                pl.BlockSpec((1, cc), lambda i: (0, 0)),
                pl.BlockSpec((p, cc, cout), lambda i: (0, 0, 0)),
                pl.BlockSpec((1, cout), lambda i: (0, 0)),
            ],
            out_specs=pl.BlockSpec((tile_n, cout), lambda i: (i, 0)),
        ),
        compiler_params=pltpu.CompilerParams(
            dimension_semantics=("parallel",),
            vmem_limit_bytes=_VMEM_LIMIT),
    )(stack, wc_mat, bc_row, wf_3d, bf_row)
    return out[:n]


# ---------------- Parameter init (deterministic, PyTorch-style uniform) ----------------

def _init_conv(key, kh, kw, cin, cout):
    fan_in = cin * kh * kw
    bound = fan_in ** -0.5
    k1, k2 = jax.random.split(key)
    w = jax.random.uniform(k1, (kh, kw, cin, cout), jnp.float32, -bound, bound)
    b = jax.random.uniform(k2, (1, cout), jnp.float32, -bound, bound)
    w_mat = w.reshape(kh * kw * cin, cout)
    kp = _round_up(w_mat.shape[0], 8)          # zero-pad K to a sublane multiple
    if kp > w_mat.shape[0]:
        w_mat = jnp.pad(w_mat, ((0, kp - w_mat.shape[0]), (0, 0)))
    return w_mat.astype(jnp.bfloat16), b       # bf16 MXU operand, f32 bias


def _init_linear(key, cin, cout, p, cc):
    # fc weights are stored as (pos, c, cout) where pos = h*W + w of the final
    # 2x2 feature map.  The torch model flattens NCHW (feature = c*P + pos), so
    # to load torch weights: wf[pos, c, :] = W_torch.T[c*P + pos, :].
    assert p * cc == cin
    bound = cin ** -0.5
    k1, k2 = jax.random.split(key)
    w = jax.random.uniform(k1, (p, cc, cout), jnp.float32, -bound, bound)
    b = jax.random.uniform(k2, (1, cout), jnp.float32, -bound, bound)
    return w.astype(jnp.bfloat16), b


def init_params(key):
    k1, k2, k3, k4 = jax.random.split(key, 4)
    return {
        "conv1": _init_conv(k1, 5, 5, 1, 16),    # K 25 -> padded 32
        "conv2": _init_conv(k2, 3, 3, 16, 64),   # K 144
        "conv3": _init_conv(k3, 3, 3, 64, 64),   # K 576
        "fc": _init_linear(k4, 256, 10, 4, 64),  # (pos=4, c=64, out=10)
    }


# ---------------- Full forward (mirrors Net.forward) ----------------

@jax.jit
def net_forward(params, x_nchw):
    # NCHW (torch convention) -> NHWC, bf16 for the MXU.
    x = jnp.transpose(x_nchw, (0, 2, 3, 1)).astype(jnp.bfloat16)
    # conv1: Conv2d(1, 16, 5, stride=1, pad=2) + ReLU + MaxPool2d(2)
    x = conv_relu_pool(x, *params["conv1"], kh_sz=5, kw_sz=5, pad=2)   # (N,14,14,16)
    # conv2: Conv2d(16, 64, 3) + ReLU + MaxPool2d(2)
    x = conv_relu_pool(x, *params["conv2"], kh_sz=3, kw_sz=3)          # (N, 6, 6,64)
    # conv3 + ReLU + MaxPool2d(2) + flatten + fc(256, 10), fused in one kernel
    return conv_pool_fc(x, *params["conv3"], *params["fc"],
                        kh_sz=3, kw_sz=3)                              # (N, 10) f32


if __name__ == "__main__":
    key = jax.random.PRNGKey(0)
    k_params, k_x = jax.random.split(key)
    params = init_params(k_params)
    # fc expects 256 = 64 * 2 * 2 features -> input spatial must be 28x28 (MNIST-like)
    x = jax.random.normal(k_x, (2, 1, 28, 28), jnp.float32)
    out = net_forward(params, x)
    out = jax.block_until_ready(out)
    assert out.shape == (2, 10), out.shape
    assert bool(jnp.all(jnp.isfinite(out)))
    print("KERNEL_OK")
</pallas_src>

<mosaic_0001>
module attributes {stable_mosaic.version = 11 : i64} {
  func.func @conv_relu_pool_kernel(%arg0: i32, %arg1: memref<4x392x32xbf16, #tpu.memory_space<vmem>>, %arg2: memref<32x16xbf16, #tpu.memory_space<vmem>>, %arg3: memref<1x16xf32, #tpu.memory_space<vmem>>, %arg4: memref<392x16xbf16, #tpu.memory_space<vmem>>) attributes {dimension_semantics = [#tpu.dimension_semantics<parallel>], iteration_bounds = array<i64: 1>, scalar_prefetch = 0 : i64, scratch_operands = 0 : i64, tpu.core_type = #tpu.core_type<tc>, window_params = [{transform_indices = @transform_0, window_bounds = array<i64: 4, 392, 32>}, {pipeline_mode = #tpu.pipeline_mode<synchronous>, transform_indices = @transform_1, window_bounds = array<i64: 32, 16>}, {pipeline_mode = #tpu.pipeline_mode<synchronous>, transform_indices = @transform_2, window_bounds = array<i64: 1, 16>}, {transform_indices = @transform_3, window_bounds = array<i64: 392, 16>}]} {
    %c0 = arith.constant 0 : index
    %c0_0 = arith.constant 0 : index
    %c0_1 = arith.constant 0 : index
    %0 = vector.load %arg1[%c0, %c0_0, %c0_1] : memref<4x392x32xbf16, #tpu.memory_space<vmem>>, vector<4x392x32xbf16>
    %1 = vector.shape_cast %0 : vector<4x392x32xbf16> to vector<1568x32xbf16>
    %c0_2 = arith.constant 0 : index
    %c0_3 = arith.constant 0 : index
    %2 = vector.load %arg2[%c0_2, %c0_3] : memref<32x16xbf16, #tpu.memory_space<vmem>>, vector<32x16xbf16>
    %cst = arith.constant dense<0.000000e+00> : vector<1568x16xf32>
    %3 = tpu.matmul %1, %2, %cst {dimension_numbers = #tpu.dot_dimension_numbers<[1], [0], [0], [1], [0, 0, 1, 1], [], []>} : vector<1568x32xbf16>, vector<32x16xbf16>, vector<1568x16xf32> -> vector<1568x16xf32>
    %4 = vector.shape_cast %3 : vector<1568x16xf32> to vector<4x392x16xf32>
    %5 = vector.extract_strided_slice %4 {offsets = [0, 0, 0], sizes = [1, 392, 16], strides = [1, 1, 1]} : vector<4x392x16xf32> to vector<1x392x16xf32>
    %6 = vector.shape_cast %5 : vector<1x392x16xf32> to vector<392x16xf32>
    %7 = vector.extract_strided_slice %4 {offsets = [1, 0, 0], sizes = [1, 392, 16], strides = [1, 1, 1]} : vector<4x392x16xf32> to vector<1x392x16xf32>
    %8 = vector.shape_cast %7 : vector<1x392x16xf32> to vector<392x16xf32>
    %9 = arith.maximumf %6, %8 : vector<392x16xf32>
    %10 = vector.extract_strided_slice %4 {offsets = [2, 0, 0], sizes = [1, 392, 16], strides = [1, 1, 1]} : vector<4x392x16xf32> to vector<1x392x16xf32>
    %11 = vector.shape_cast %10 : vector<1x392x16xf32> to vector<392x16xf32>
    %12 = vector.extract_strided_slice %4 {offsets = [3, 0, 0], sizes = [1, 392, 16], strides = [1, 1, 1]} : vector<4x392x16xf32> to vector<1x392x16xf32>
    %13 = vector.shape_cast %12 : vector<1x392x16xf32> to vector<392x16xf32>
    %14 = arith.maximumf %11, %13 : vector<392x16xf32>
    %15 = arith.maximumf %9, %14 : vector<392x16xf32>
    %c0_4 = arith.constant 0 : index
    %c0_5 = arith.constant 0 : index
    %16 = vector.load %arg3[%c0_4, %c0_5] : memref<1x16xf32, #tpu.memory_space<vmem>>, vector<1x16xf32>
    %17 = vector.broadcast %16 : vector<1x16xf32> to vector<392x16xf32>
    %18 = arith.addf %15, %17 : vector<392x16xf32>
    %cst_6 = arith.constant 0.000000e+00 : f32
    %19 = vector.broadcast %cst_6 : f32 to vector<392x16xf32>
    %20 = arith.maximumf %18, %19 : vector<392x16xf32>
    %21 = arith.truncf %20 : vector<392x16xf32> to vector<392x16xbf16>
    %c0_7 = arith.constant 0 : index
    %c0_8 = arith.constant 0 : index
    %22 = vector.load %arg4[%c0_7, %c0_8] : memref<392x16xbf16, #tpu.memory_space<vmem>>, vector<392x16xbf16>
    tpu.vector_store %arg4[%c0_7, %c0_8], %21 {strides = array<i32>} : memref<392x16xbf16, #tpu.memory_space<vmem>>, vector<392x16xbf16>,
    return
  }
  func.func @transform_0(%arg0: i32) -> (i32, i32, i32) {
    %c0_i32 = arith.constant 0 : i32
    %c0_i32_0 = arith.constant 0 : i32
    %c0_i32_1 = arith.constant 0 : i32
    return %c0_i32, %arg0, %c0_i32_0 : i32, i32, i32
  }
  func.func @transform_1(%arg0: i32) -> (i32, i32) {
    %c0_i32 = arith.constant 0 : i32
    %c0_i32_0 = arith.constant 0 : i32
    %c0_i32_1 = arith.constant 0 : i32
    return %c0_i32, %c0_i32_0 : i32, i32
  }
  func.func @transform_2(%arg0: i32) -> (i32, i32) {
    %c0_i32 = arith.constant 0 : i32
    %c0_i32_0 = arith.constant 0 : i32
    %c0_i32_1 = arith.constant 0 : i32
    return %c0_i32, %c0_i32_0 : i32, i32
  }
  func.func @transform_3(%arg0: i32) -> (i32, i32) {
    %c0_i32 = arith.constant 0 : i32
    %c0_i32_0 = arith.constant 0 : i32
    return %arg0, %c0_i32 : i32, i32
  }
}

module attributes {stable_mosaic.version = 11 : i64} {
  func.func @conv_relu_pool_kernel(%arg0: i32, %arg1: memref<4x72x144xbf16, #tpu.memory_space<vmem>>, %arg2: memref<144x64xbf16, #tpu.memory_space<vmem>>, %arg3: memref<1x64xf32, #tpu.memory_space<vmem>>, %arg4: memref<72x64xbf16, #tpu.memory_space<vmem>>) attributes {dimension_semantics = [#tpu.dimension_semantics<parallel>], iteration_bounds = array<i64: 1>, scalar_prefetch = 0 : i64, scratch_operands = 0 : i64, tpu.core_type = #tpu.core_type<tc>, window_params = [{transform_indices = @transform_0, window_bounds = array<i64: 4, 72, 144>}, {pipeline_mode = #tpu.pipeline_mode<synchronous>, transform_indices = @transform_1, window_bounds = array<i64: 144, 64>}, {pipeline_mode = #tpu.pipeline_mode<synchronous>, transform_indices = @transform_2, window_bounds = array<i64: 1, 64>}, {transform_indices = @transform_3, window_bounds = array<i64: 72, 64>}]} {
    %c0 = arith.constant 0 : index
    %c0_0 = arith.constant 0 : index
    %c0_1 = arith.constant 0 : index
    %0 = vector.load %arg1[%c0, %c0_0, %c0_1] : memref<4x72x144xbf16, #tpu.memory_space<vmem>>, vector<4x72x144xbf16>
    %1 = vector.shape_cast %0 : vector<4x72x144xbf16> to vector<288x144xbf16>
    %c0_2 = arith.constant 0 : index
    %c0_3 = arith.constant 0 : index
    %2 = vector.load %arg2[%c0_2, %c0_3] : memref<144x64xbf16, #tpu.memory_space<vmem>>, vector<144x64xbf16>
    %cst = arith.constant dense<0.000000e+00> : vector<288x64xf32>
    %3 = tpu.matmul %1, %2, %cst {dimension_numbers = #tpu.dot_dimension_numbers<[1], [0], [0], [1], [0, 0, 1, 1], [], []>} : vector<288x144xbf16>, vector<144x64xbf16>, vector<288x64xf32> -> vector<288x64xf32>
    %4 = vector.shape_cast %3 : vector<288x64xf32> to vector<4x72x64xf32>
    %5 = vector.extract_strided_slice %4 {offsets = [0, 0, 0], sizes = [1, 72, 64], strides = [1, 1, 1]} : vector<4x72x64xf32> to vector<1x72x64xf32>
    %6 = vector.shape_cast %5 : vector<1x72x64xf32> to vector<72x64xf32>
    %7 = vector.extract_strided_slice %4 {offsets = [1, 0, 0], sizes = [1, 72, 64], strides = [1, 1, 1]} : vector<4x72x64xf32> to vector<1x72x64xf32>
    %8 = vector.shape_cast %7 : vector<1x72x64xf32> to vector<72x64xf32>
    %9 = arith.maximumf %6, %8 : vector<72x64xf32>
    %10 = vector.extract_strided_slice %4 {offsets = [2, 0, 0], sizes = [1, 72, 64], strides = [1, 1, 1]} : vector<4x72x64xf32> to vector<1x72x64xf32>
    %11 = vector.shape_cast %10 : vector<1x72x64xf32> to vector<72x64xf32>
    %12 = vector.extract_strided_slice %4 {offsets = [3, 0, 0], sizes = [1, 72, 64], strides = [1, 1, 1]} : vector<4x72x64xf32> to vector<1x72x64xf32>
    %13 = vector.shape_cast %12 : vector<1x72x64xf32> to vector<72x64xf32>
    %14 = arith.maximumf %11, %13 : vector<72x64xf32>
    %15 = arith.maximumf %9, %14 : vector<72x64xf32>
    %c0_4 = arith.constant 0 : index
    %c0_5 = arith.constant 0 : index
    %16 = vector.load %arg3[%c0_4, %c0_5] : memref<1x64xf32, #tpu.memory_space<vmem>>, vector<1x64xf32>
    %17 = vector.broadcast %16 : vector<1x64xf32> to vector<72x64xf32>
    %18 = arith.addf %15, %17 : vector<72x64xf32>
    %cst_6 = arith.constant 0.000000e+00 : f32
    %19 = vector.broadcast %cst_6 : f32 to vector<72x64xf32>
    %20 = arith.maximumf %18, %19 : vector<72x64xf32>
    %21 = arith.truncf %20 : vector<72x64xf32> to vector<72x64xbf16>
    %c0_7 = arith.constant 0 : index
    %c0_8 = arith.constant 0 : index
    %22 = vector.load %arg4[%c0_7, %c0_8] : memref<72x64xbf16, #tpu.memory_space<vmem>>, vector<72x64xbf16>
    tpu.vector_store %arg4[%c0_7, %c0_8], %21 {strides = array<i32>} : memref<72x64xbf16, #tpu.memory_space<vmem>>, vector<72x64xbf16>,
    return
  }
  func.func @transform_0(%arg0: i32) -> (i32, i32, i32) {
    %c0_i32 = arith.constant 0 : i32
    %c0_i32_0 = arith.constant 0 : i32
    %c0_i32_1 = arith.constant 0 : i32
    return %c0_i32, %arg0, %c0_i32_0 : i32, i32, i32
  }
  func.func @transform_1(%arg0: i32) -> (i32, i32) {
    %c0_i32 = arith.constant 0 : i32
    %c0_i32_0 = arith.constant 0 : i32
    %c0_i32_1 = arith.constant 0 : i32
    return %c0_i32, %c0_i32_0 : i32, i32
  }
  func.func @transform_2(%arg0: i32) -> (i32, i32) {
    %c0_i32 = arith.constant 0 : i32
    %c0_i32_0 = arith.constant 0 : i32
    %c0_i32_1 = arith.constant 0 : i32
    return %c0_i32, %c0_i32_0 : i32, i32
  }
  func.func @transform_3(%arg0: i32) -> (i32, i32) {
    %c0_i32 = arith.constant 0 : i32
    %c0_i32_0 = arith.constant 0 : i32
    return %arg0, %c0_i32 : i32, i32
  }
}

module attributes {stable_mosaic.version = 11 : i64} {
  func.func @conv_pool_fc_kernel(%arg0: i32, %arg1: memref<16x16x576xbf16, #tpu.memory_space<vmem>>, %arg2: memref<576x64xbf16, #tpu.memory_space<vmem>>, %arg3: memref<1x64xf32, #tpu.memory_space<vmem>>, %arg4: memref<4x64x10xbf16, #tpu.memory_space<vmem>>, %arg5: memref<1x10xf32, #tpu.memory_space<vmem>>, %arg6: memref<16x10xf32, #tpu.memory_space<vmem>>) attributes {dimension_semantics = [#tpu.dimension_semantics<parallel>], iteration_bounds = array<i64: 1>, scalar_prefetch = 0 : i64, scratch_operands = 0 : i64, tpu.core_type = #tpu.core_type<tc>, window_params = [{transform_indices = @transform_0, window_bounds = array<i64: 16, 16, 576>}, {pipeline_mode = #tpu.pipeline_mode<synchronous>, transform_indices = @transform_1, window_bounds = array<i64: 576, 64>}, {pipeline_mode = #tpu.pipeline_mode<synchronous>, transform_indices = @transform_2, window_bounds = array<i64: 1, 64>}, {pipeline_mode = #tpu.pipeline_mode<synchronous>, transform_indices = @transform_3, window_bounds = array<i64: 4, 64, 10>}, {pipeline_mode = #tpu.pipeline_mode<synchronous>, transform_indices = @transform_4, window_bounds = array<i64: 1, 10>}, {transform_indices = @transform_5, window_bounds = array<i64: 16, 10>}]} {
    %c0 = arith.constant 0 : index
    %c0_0 = arith.constant 0 : index
    %c0_1 = arith.constant 0 : index
    %0 = vector.load %arg1[%c0, %c0_0, %c0_1] : memref<16x16x576xbf16, #tpu.memory_space<vmem>>, vector<16x16x576xbf16>
    %1 = vector.shape_cast %0 : vector<16x16x576xbf16> to vector<256x576xbf16>
    %c0_2 = arith.constant 0 : index
    %c0_3 = arith.constant 0 : index
    %2 = vector.load %arg2[%c0_2, %c0_3] : memref<576x64xbf16, #tpu.memory_space<vmem>>, vector<576x64xbf16>
    %cst = arith.constant dense<0.000000e+00> : vector<256x64xf32>
    %3 = tpu.matmul %1, %2, %cst {dimension_numbers = #tpu.dot_dimension_numbers<[1], [0], [0], [1], [0, 0, 1, 1], [], []>} : vector<256x576xbf16>, vector<576x64xbf16>, vector<256x64xf32> -> vector<256x64xf32>
    %4 = vector.shape_cast %3 : vector<256x64xf32> to vector<16x16x64xf32>
    %cst_4 = arith.constant 0.000000e+00 : f32
    %5 = vector.broadcast %cst_4 : f32 to vector<16x10xf32>
    %6 = vector.extract_strided_slice %4 {offsets = [0, 0, 0], sizes = [1, 16, 64], strides = [1, 1, 1]} : vector<16x16x64xf32> to vector<1x16x64xf32>
    %7 = vector.shape_cast %6 : vector<1x16x64xf32> to vector<16x64xf32>
    %8 = vector.extract_strided_slice %4 {offsets = [1, 0, 0], sizes = [1, 16, 64], strides = [1, 1, 1]} : vector<16x16x64xf32> to vector<1x16x64xf32>
    %9 = vector.shape_cast %8 : vector<1x16x64xf32> to vector<16x64xf32>
    %10 = vector.extract_strided_slice %4 {offsets = [2, 0, 0], sizes = [1, 16, 64], strides = [1, 1, 1]} : vector<16x16x64xf32> to vector<1x16x64xf32>
    %11 = vector.shape_cast %10 : vector<1x16x64xf32> to vector<16x64xf32>
    %12 = vector.extract_strided_slice %4 {offsets = [3, 0, 0], sizes = [1, 16, 64], strides = [1, 1, 1]} : vector<16x16x64xf32> to vector<1x16x64xf32>
    %13 = vector.shape_cast %12 : vector<1x16x64xf32> to vector<16x64xf32>
    %14 = arith.maximumf %7, %9 : vector<16x64xf32>
    %15 = arith.maximumf %11, %13 : vector<16x64xf32>
    %16 = arith.maximumf %14, %15 : vector<16x64xf32>
    %c0_5 = arith.constant 0 : index
    %c0_6 = arith.constant 0 : index
    %17 = vector.load %arg3[%c0_5, %c0_6] : memref<1x64xf32, #tpu.memory_space<vmem>>, vector<1x64xf32>
    %18 = vector.broadcast %17 : vector<1x64xf32> to vector<16x64xf32>
    %19 = arith.addf %16, %18 : vector<16x64xf32>
    %cst_7 = arith.constant 0.000000e+00 : f32
    %20 = vector.broadcast %cst_7 : f32 to vector<16x64xf32>
    %21 = arith.maximumf %19, %20 : vector<16x64xf32>
    %22 = arith.truncf %21 : vector<16x64xf32> to vector<16x64xbf16>
    %c0_8 = arith.constant 0 : index
    %c0_9 = arith.constant 0 : index
    %c0_10 = arith.constant 0 : index
    %23 = vector.load %arg4[%c0_8, %c0_9, %c0_10] : memref<4x64x10xbf16, #tpu.memory_space<vmem>>, vector<1x64x10xbf16>
    %24 = vector.shape_cast %23 : vector<1x64x10xbf16> to vector<64x10xbf16>
    %cst_11 = arith.constant dense<0.000000e+00> : vector<16x10xf32>
    %25 = tpu.matmul %22, %24, %cst_11 {dimension_numbers = #tpu.dot_dimension_numbers<[1], [0], [0], [1], [0, 0, 1, 1], [], []>} : vector<16x64xbf16>, vector<64x10xbf16>, vector<16x10xf32> -> vector<16x10xf32>
    %26 = arith.addf %5, %25 : vector<16x10xf32>
    %27 = vector.extract_strided_slice %4 {offsets = [4, 0, 0], sizes = [1, 16, 64], strides = [1, 1, 1]} : vector<16x16x64xf32> to vector<1x16x64xf32>
    %28 = vector.shape_cast %27 : vector<1x16x64xf32> to vector<16x64xf32>
    %29 = vector.extract_strided_slice %4 {offsets = [5, 0, 0], sizes = [1, 16, 64], strides = [1, 1, 1]} : vector<16x16x64xf32> to vector<1x16x64xf32>
    %30 = vector.shape_cast %29 : vector<1x16x64xf32> to vector<16x64xf32>
    %31 = vector.extract_strided_slice %4 {offsets = [6, 0, 0], sizes = [1, 16, 64], strides = [1, 1, 1]} : vector<16x16x64xf32> to vector<1x16x64xf32>
    %32 = vector.shape_cast %31 : vector<1x16x64xf32> to vector<16x64xf32>
    %33 = vector.extract_strided_slice %4 {offsets = [7, 0, 0], sizes = [1, 16, 64], strides = [1, 1, 1]} : vector<16x16x64xf32> to vector<1x16x64xf32>
    %34 = vector.shape_cast %33 : vector<1x16x64xf32> to vector<16x64xf32>
    %35 = arith.maximumf %28, %30 : vector<16x64xf32>
    %36 = arith.maximumf %32, %34 : vector<16x64xf32>
    %37 = arith.maximumf %35, %36 : vector<16x64xf32>
    %c0_12 = arith.constant 0 : index
    %c0_13 = arith.constant 0 : index
    %38 = vector.load %arg3[%c0_12, %c0_13] : memref<1x64xf32, #tpu.memory_space<vmem>>, vector<1x64xf32>
    %39 = vector.broadcast %38 : vector<1x64xf32> to vector<16x64xf32>
    %40 = arith.addf %37, %39 : vector<16x64xf32>
    %cst_14 = arith.constant 0.000000e+00 : f32
    %41 = vector.broadcast %cst_14 : f32 to vector<16x64xf32>
    %42 = arith.maximumf %40, %41 : vector<16x64xf32>
    %43 = arith.truncf %42 : vector<16x64xf32> to vector<16x64xbf16>
    %c1 = arith.constant 1 : index
    %c0_15 = arith.constant 0 : index
    %c0_16 = arith.constant 0 : index
    %44 = vector.load %arg4[%c1, %c0_15, %c0_16] : memref<4x64x10xbf16, #tpu.memory_space<vmem>>, vector<1x64x10xbf16>
    %45 = vector.shape_cast %44 : vector<1x64x10xbf16> to vector<64x10xbf16>
    %cst_17 = arith.constant dense<0.000000e+00> : vector<16x10xf32>
    %46 = tpu.matmul %43, %45, %cst_17 {dimension_numbers = #tpu.dot_dimension_numbers<[1], [0], [0], [1], [0, 0, 1, 1], [], []>} : vector<16x64xbf16>, vector<64x10xbf16>, vector<16x10xf32> -> vector<16x10xf32>
    %47 = arith.addf %26, %46 : vector<16x10xf32>
    %48 = vector.extract_strided_slice %4 {offsets = [8, 0, 0], sizes = [1, 16, 64], strides = [1, 1, 1]} : vector<16x16x64xf32> to vector<1x16x64xf32>
    %49 = vector.shape_cast %48 : vector<1x16x64xf32> to vector<16x64xf32>
    %50 = vector.extract_strided_slice %4 {offsets = [9, 0, 0], sizes = [1, 16, 64], strides = [1, 1, 1]} : vector<16x16x64xf32> to vector<1x16x64xf32>
    %51 = vector.shape_cast %50 : vector<1x16x64xf32> to vector<16x64xf32>
    %52 = vector.extract_strided_slice %4 {offsets = [10, 0, 0], sizes = [1, 16, 64], strides = [1, 1, 1]} : vector<16x16x64xf32> to vector<1x16x64xf32>
    %53 = vector.shape_cast %52 : vector<1x16x64xf32> to vector<16x64xf32>
    %54 = vector.extract_strided_slice %4 {offsets = [11, 0, 0], sizes = [1, 16, 64], strides = [1, 1, 1]} : vector<16x16x64xf32> to vector<1x16x64xf32>
    %55 = vector.shape_cast %54 : vector<1x16x64xf32> to vector<16x64xf32>
    %56 = arith.maximumf %49, %51 : vector<16x64xf32>
    %57 = arith.maximumf %53, %55 : vector<16x64xf32>
    %58 = arith.maximumf %56, %57 : vector<16x64xf32>
    %c0_18 = arith.constant 0 : index
    %c0_19 = arith.constant 0 : index
    %59 = vector.load %arg3[%c0_18, %c0_19] : memref<1x64xf32, #tpu.memory_space<vmem>>, vector<1x64xf32>
    %60 = vector.broadcast %59 : vector<1x64xf32> to vector<16x64xf32>
    %61 = arith.addf %58, %60 : vector<16x64xf32>
    %cst_20 = arith.constant 0.000000e+00 : f32
    %62 = vector.broadcast %cst_20 : f32 to vector<16x64xf32>
    %63 = arith.maximumf %61, %62 : vector<16x64xf32>
    %64 = arith.truncf %63 : vector<16x64xf32> to vector<16x64xbf16>
    %c2 = arith.constant 2 : index
    %c0_21 = arith.constant 0 : index
    %c0_22 = arith.constant 0 : index
    %65 = vector.load %arg4[%c2, %c0_21, %c0_22] : memref<4x64x10xbf16, #tpu.memory_space<vmem>>, vector<1x64x10xbf16>
    %66 = vector.shape_cast %65 : vector<1x64x10xbf16> to vector<64x10xbf16>
    %cst_23 = arith.constant dense<0.000000e+00> : vector<16x10xf32>
    %67 = tpu.matmul %64, %66, %cst_23 {dimension_numbers = #tpu.dot_dimension_numbers<[1], [0], [0], [1], [0, 0, 1, 1], [], []>} : vector<16x64xbf16>, vector<64x10xbf16>, vector<16x10xf32> -> vector<16x10xf32>
    %68 = arith.addf %47, %67 : vector<16x10xf32>
    %69 = vector.extract_strided_slice %4 {offsets = [12, 0, 0], sizes = [1, 16, 64], strides = [1, 1, 1]} : vector<16x16x64xf32> to vector<1x16x64xf32>
    %70 = vector.shape_cast %69 : vector<1x16x64xf32> to vector<16x64xf32>
    %71 = vector.extract_strided_slice %4 {offsets = [13, 0, 0], sizes = [1, 16, 64], strides = [1, 1, 1]} : vector<16x16x64xf32> to vector<1x16x64xf32>
    %72 = vector.shape_cast %71 : vector<1x16x64xf32> to vector<16x64xf32>
    %73 = vector.extract_strided_slice %4 {offsets = [14, 0, 0], sizes = [1, 16, 64], strides = [1, 1, 1]} : vector<16x16x64xf32> to vector<1x16x64xf32>
    %74 = vector.shape_cast %73 : vector<1x16x64xf32> to vector<16x64xf32>
    %75 = vector.extract_strided_slice %4 {offsets = [15, 0, 0], sizes = [1, 16, 64], strides = [1, 1, 1]} : vector<16x16x64xf32> to vector<1x16x64xf32>
    %76 = vector.shape_cast %75 : vector<1x16x64xf32> to vector<16x64xf32>
    %77 = arith.maximumf %70, %72 : vector<16x64xf32>
    %78 = arith.maximumf %74, %76 : vector<16x64xf32>
    %79 = arith.maximumf %77, %78 : vector<16x64xf32>
    %c0_24 = arith.constant 0 : index
    %c0_25 = arith.constant 0 : index
    %80 = vector.load %arg3[%c0_24, %c0_25] : memref<1x64xf32, #tpu.memory_space<vmem>>, vector<1x64xf32>
    %81 = vector.broadcast %80 : vector<1x64xf32> to vector<16x64xf32>
    %82 = arith.addf %79, %81 : vector<16x64xf32>
    %cst_26 = arith.constant 0.000000e+00 : f32
    %83 = vector.broadcast %cst_26 : f32 to vector<16x64xf32>
    %84 = arith.maximumf %82, %83 : vector<16x64xf32>
    %85 = arith.truncf %84 : vector<16x64xf32> to vector<16x64xbf16>
    %c3 = arith.constant 3 : index
    %c0_27 = arith.constant 0 : index
    %c0_28 = arith.constant 0 : index
    %86 = vector.load %arg4[%c3, %c0_27, %c0_28] : memref<4x64x10xbf16, #tpu.memory_space<vmem>>, vector<1x64x10xbf16>
    %87 = vector.shape_cast %86 : vector<1x64x10xbf16> to vector<64x10xbf16>
    %cst_29 = arith.constant dense<0.000000e+00> : vector<16x10xf32>
    %88 = tpu.matmul %85, %87, %cst_29 {dimension_numbers = #tpu.dot_dimension_numbers<[1], [0], [0], [1], [0, 0, 1, 1], [], []>} : vector<16x64xbf16>, vector<64x10xbf16>, vector<16x10xf32> -> vector<16x10xf32>
    %89 = arith.addf %68, %88 : vector<16x10xf32>
    %c0_30 = arith.constant 0 : index
    %c0_31 = arith.constant 0 : index
    %90 = vector.load %arg5[%c0_30, %c0_31] : memref<1x10xf32, #tpu.memory_space<vmem>>, vector<1x10xf32>
    %91 = vector.broadcast %90 : vector<1x10xf32> to vector<16x10xf32>
    %92 = arith.addf %89, %91 : vector<16x10xf32>
    %c0_32 = arith.constant 0 : index
    %c0_33 = arith.constant 0 : index
    %93 = vector.load %arg6[%c0_32, %c0_33] : memref<16x10xf32, #tpu.memory_space<vmem>>, vector<16x10xf32>
    tpu.vector_store %arg6[%c0_32, %c0_33], %92 {strides = array<i32>} : memref<16x10xf32, #tpu.memory_space<vmem>>, vector<16x10xf32>,
    return
  }
  func.func @transform_0(%arg0: i32) -> (i32, i32, i32) {
    %c0_i32 = arith.constant 0 : i32
    %c0_i32_0 = arith.constant 0 : i32
    %c0_i32_1 = arith.constant 0 : i32
    return %c0_i32, %arg0, %c0_i32_0 : i32, i32, i32
  }
  func.func @transform_1(%arg0: i32) -> (i32, i32) {
    %c0_i32 = arith.constant 0 : i32
    %c0_i32_0 = arith.constant 0 : i32
    %c0_i32_1 = arith.constant 0 : i32
    return %c0_i32, %c0_i32_0 : i32, i32
  }
  func.func @transform_2(%arg0: i32) -> (i32, i32) {
    %c0_i32 = arith.constant 0 : i32
    %c0_i32_0 = arith.constant 0 : i32
    %c0_i32_1 = arith.constant 0 : i32
    return %c0_i32, %c0_i32_0 : i32, i32
  }
  func.func @transform_3(%arg0: i32) -> (i32, i32, i32) {
    %c0_i32 = arith.constant 0 : i32
    %c0_i32_0 = arith.constant 0 : i32
    %c0_i32_1 = arith.constant 0 : i32
    %c0_i32_2 = arith.constant 0 : i32
    return %c0_i32, %c0_i32_0, %c0_i32_1 : i32, i32, i32
  }
  func.func @transform_4(%arg0: i32) -> (i32, i32) {
    %c0_i32 = arith.constant 0 : i32
    %c0_i32_0 = arith.constant 0 : i32
    %c0_i32_1 = arith.constant 0 : i32
    return %c0_i32, %c0_i32_0 : i32, i32
  }
  func.func @transform_5(%arg0: i32) -> (i32, i32) {
    %c0_i32 = arith.constant 0 : i32
    %c0_i32_0 = arith.constant 0 : i32
    return %arg0, %c0_i32 : i32, i32
  }
}

</mosaic_0001>

<llo_original>
// kernel: net_forward.3
$region0: #{net_forward.3}
  #allocation0 [shape = 'u32[]', space=smem, size = 0x4, offset = 0x4, fixed_abs, tag = 'smem constant byte address 0x4 - core index']
  #allocation1 [shape = 'u32[72,128]{1,0:T(1,128)}', space=vmem, size = 0x9000, scoped, tag = 'internal scratch']
  %s0 = inlined_call_operand.vmem [shape: bf16[4,392,32], index: 0, kind: input, shape index: {}]
  %s1 = inlined_call_operand.vmem [shape: bf16[32,16], index: 1, kind: input, shape index: {}]
  %s2 = inlined_call_operand.vmem [shape: f32[1,16], index: 2, kind: input, shape index: {}]
  %s3 = inlined_call_operand.vmem [shape: bf16[392,16], index: 3, kind: output, shape index: {}]
  %s4 = sld [smem:[#allocation0]]
  $region22: #{net_forward.3} parent=0
    _
  %s6 = ssub.s32 1, %s4
  %s7 = scalar_select 0, %s6, %s4
  // Predicated region
  $region2: #{net_forward.3} parent=0 // pred_check
    _
  $region3: #{net_forward.3} parent=0 // pred_check_branch
    %9 = sbr.rel (0) target = $region5
  $region4: #{net_forward.3} parent=0 // pred_region
    _
  $region5: #{net_forward.3} parent=0 // pred_fallthru
    _
  // Predicated region
  $region6: #{net_forward.3} parent=0 // pred_check
    _
  $region7: #{net_forward.3} parent=0 // pred_check_branch
    %11 = sbr.rel (0) target = $region9
  $region8: #{net_forward.3} parent=0 // pred_region
    _
  $region9: #{net_forward.3} parent=0 // pred_fallthru
    _
  // Predicated region
  $region10: #{net_forward.3} parent=0 // pred_check
    _
  $region11: #{net_forward.3} parent=0 // pred_check_branch
    %13 = sbr.rel (0) target = $region13
  $region12: #{net_forward.3} parent=0 // pred_region
    _
  $region13: #{net_forward.3} parent=0 // pred_fallthru
    _
  %v15 = vld [vmem:[%s0] sm:$0xf]
  %v16 = vld [vmem:[%s0 + $0x4] sm:$0xf]
  %v17 = vld [vmem:[%s0 + $0x8] sm:$0xf]
  %v18 = vld [vmem:[%s0 + $0xc] sm:$0xf]
  %v19 = vld [vmem:[%s0 + $0x10] sm:$0xf]
  %v20 = vld [vmem:[%s0 + $0x14] sm:$0xf]
  %v21 = vld [vmem:[%s0 + $0x18] sm:$0xf]
  %v22 = vld [vmem:[%s0 + $0x1c] sm:$0xf]
  %v23 = vld [vmem:[%s0 + $0x20] sm:$0xf]
  %v24 = vld [vmem:[%s0 + $0x24] sm:$0xf]
  %v25 = vld [vmem:[%s0 + $0x28] sm:$0xf]
  %v26 = vld [vmem:[%s0 + $0x2c] sm:$0xf]
  %v27 = vld [vmem:[%s0 + $0x30] sm:$0xf]
  %v28 = vld [vmem:[%s0 + $0x34] sm:$0xf]
  %v29 = vld [vmem:[%s0 + $0x38] sm:$0xf]
  %v30 = vld [vmem:[%s0 + $0x3c] sm:$0xf]
  %v31 = vld [vmem:[%s0 + $0x40] sm:$0xf]
  %v32 = vld [vmem:[%s0 + $0x44] sm:$0xf]
  %v33 = vld [vmem:[%s0 + $0x48] sm:$0xf]
  %v34 = vld [vmem:[%s0 + $0x4c] sm:$0xf]
  %v35 = vld [vmem:[%s0 + $0x50] sm:$0xf]
  %v36 = vld [vmem:[%s0 + $0x54] sm:$0xf]
  %v37 = vld [vmem:[%s0 + $0x58] sm:$0xf]
  %v38 = vld [vmem:[%s0 + $0x5c] sm:$0xf]
  %v39 = vld [vmem:[%s0 + $0x60] sm:$0xf]
  %v40 = vld [vmem:[%s0 + $0x64] sm:$0xf]
  %v41 = vld [vmem:[%s0 + $0x68] sm:$0xf]
  %v42 = vld [vmem:[%s0 + $0x6c] sm:$0xf]
  %v43 = vld [vmem:[%s0 + $0x70] sm:$0xf]
  %v44 = vld [vmem:[%s0 + $0x74] sm:$0xf]
  %v45 = vld [vmem:[%s0 + $0x78] sm:$0xf]
  %v46 = vld [vmem:[%s0 + $0x7c] sm:$0xf]
  %v47 = vld [vmem:[%s0 + $0x80] sm:$0xf]
  %v48 = vld [vmem:[%s0 + $0x84] sm:$0xf]
  %v49 = vld [vmem:[%s0 + $0x88] sm:$0xf]
  %v50 = vld [vmem:[%s0 + $0x8c] sm:$0xf]
  %v51 = vld [vmem:[%s0 + $0x90] sm:$0xf]
  %v52 = vld [vmem:[%s0 + $0x94] sm:$0xf]
  %v53 = vld [vmem:[%s0 + $0x98] sm:$0xf]
  %v54 = vld [vmem:[%s0 + $0x9c] sm:$0xf]
  %v55 = vld [vmem:[%s0 + $0xa0] sm:$0xf]
  %v56 = vld [vmem:[%s0 + $0xa4] sm:$0xf]
  %v57 = vld [vmem:[%s0 + $0xa8] sm:$0xf]
  %v58 = vld [vmem:[%s0 + $0xac] sm:$0xf]
  %v59 = vld [vmem:[%s0 + $0xb0] sm:$0xf]
  %v60 = vld [vmem:[%s0 + $0xb4] sm:$0xf]
  %v61 = vld [vmem:[%s0 + $0xb8] sm:$0xf]
  %v62 = vld [vmem:[%s0 + $0xbc] sm:$0xf]
  %v63 = vld [vmem:[%s0 + $0xc0] sm:$0xf]
  %v64 = vld [vmem:[%s0 + $0xc4] sm:$0xf]
  %v65 = vld [vmem:[%s0 + $0xc8] sm:$0xf]
  %v66 = vld [vmem:[%s0 + $0xcc] sm:$0xf]
  %v67 = vld [vmem:[%s0 + $0xd0] sm:$0xf]
  %v68 = vld [vmem:[%s0 + $0xd4] sm:$0xf]
  %v69 = vld [vmem:[%s0 + $0xd8] sm:$0xf]
  %v70 = vld [vmem:[%s0 + $0xdc] sm:$0xf]
  %v71 = vld [vmem:[%s0 + $0xe0] sm:$0xf]
  %v72 = vld [vmem:[%s0 + $0xe4] sm:$0xf]
  %v73 = vld [vmem:[%s0 + $0xe8] sm:$0xf]
  %v74 = vld [vmem:[%s0 + $0xec] sm:$0xf]
  %v75 = vld [vmem:[%s0 + $0xf0] sm:$0xf]
  %v76 = vld [vmem:[%s0 + $0xf4] sm:$0xf]
  %v77 = vld [vmem:[%s0 + $0xf8] sm:$0xf]
  %v78 = vld [vmem:[%s0 + $0xfc] sm:$0xf]
  %v79 = vld [vmem:[%s0 + $0x100] sm:$0xf]
  %v80 = vld [vmem:[%s0 + $0x104] sm:$0xf]
  %v81 = vld [vmem:[%s0 + $0x108] sm:$0xf]
  %v82 = vld [vmem:[%s0 + $0x10c] sm:$0xf]
  %v83 = vld [vmem:[%s0 + $0x110] sm:$0xf]
  %v84 = vld [vmem:[%s0 + $0x114] sm:$0xf]
  %v85 = vld [vmem:[%s0 + $0x118] sm:$0xf]
  %v86 = vld [vmem:[%s0 + $0x11c] sm:$0xf]
  %v87 = vld [vmem:[%s0 + $0x120] sm:$0xf]
  %v88 = vld [vmem:[%s0 + $0x124] sm:$0xf]
  %v89 = vld [vmem:[%s0 + $0x128] sm:$0xf]
  %v90 = vld [vmem:[%s0 + $0x12c] sm:$0xf]
  %v91 = vld [vmem:[%s0 + $0x130] sm:$0xf]
  %v92 = vld [vmem:[%s0 + $0x134] sm:$0xf]
  %v93 = vld [vmem:[%s0 + $0x138] sm:$0xf]
  %v94 = vld [vmem:[%s0 + $0x13c] sm:$0xf]
  %v95 = vld [vmem:[%s0 + $0x140] sm:$0xf]
  %v96 = vld [vmem:[%s0 + $0x144] sm:$0xf]
  %v97 = vld [vmem:[%s0 + $0x148] sm:$0xf]
  %v98 = vld [vmem:[%s0 + $0x14c] sm:$0xf]
  %v99 = vld [vmem:[%s0 + $0x150] sm:$0xf]
  %v100 = vld [vmem:[%s0 + $0x154] sm:$0xf]
  %v101 = vld [vmem:[%s0 + $0x158] sm:$0xf]
  %v102 = vld [vmem:[%s0 + $0x15c] sm:$0xf]
  %v103 = vld [vmem:[%s0 + $0x160] sm:$0xf]
  %v104 = vld [vmem:[%s0 + $0x164] sm:$0xf]
  %v105 = vld [vmem:[%s0 + $0x168] sm:$0xf]
  %v106 = vld [vmem:[%s0 + $0x16c] sm:$0xf]
  %v107 = vld [vmem:[%s0 + $0x170] sm:$0xf]
  %v108 = vld [vmem:[%s0 + $0x174] sm:$0xf]
  %v109 = vld [vmem:[%s0 + $0x178] sm:$0xf]
  %v110 = vld [vmem:[%s0 + $0x17c] sm:$0xf]
  %v111 = vld [vmem:[%s0 + $0x180] sm:$0xf]
  %v112 = vld [vmem:[%s0 + $0x184] sm:$0xf]
  %v113 = vld [vmem:[%s0 + $0x188] sm:$0xf]
  %v114 = vld [vmem:[%s0 + $0x18c] sm:$0xf]
  %v115 = vld [vmem:[%s0 + $0x190] sm:$0xf]
  %v116 = vld [vmem:[%s0 + $0x194] sm:$0xf]
  %v117 = vld [vmem:[%s0 + $0x198] sm:$0xf]
  %v118 = vld [vmem:[%s0 + $0x19c] sm:$0xf]
  %v119 = vld [vmem:[%s0 + $0x1a0] sm:$0xf]
  %v120 = vld [vmem:[%s0 + $0x1a4] sm:$0xf]
  %v121 = vld [vmem:[%s0 + $0x1a8] sm:$0xf]
  %v122 = vld [vmem:[%s0 + $0x1ac] sm:$0xf]
  %v123 = vld [vmem:[%s0 + $0x1b0] sm:$0xf]
  %v124 = vld [vmem:[%s0 + $0x1b4] sm:$0xf]
  %v125 = vld [vmem:[%s0 + $0x1b8] sm:$0xf]
  %v126 = vld [vmem:[%s0 + $0x1bc] sm:$0xf]
  %v127 = vld [vmem:[%s0 + $0x1c0] sm:$0xf]
  %v128 = vld [vmem:[%s0 + $0x1c4] sm:$0xf]
  %v129 = vld [vmem:[%s0 + $0x1c8] sm:$0xf]
  %v130 = vld [vmem:[%s0 + $0x1cc] sm:$0xf]
  %v131 = vld [vmem:[%s0 + $0x1d0] sm:$0xf]
  %v132 = vld [vmem:[%s0 + $0x1d4] sm:$0xf]
  %v133 = vld [vmem:[%s0 + $0x1d8] sm:$0xf]
  %v134 = vld [vmem:[%s0 + $0x1dc] sm:$0xf]
  %v135 = vld [vmem:[%s0 + $0x1e0] sm:$0xf]
  %v136 = vld [vmem:[%s0 + $0x1e4] sm:$0xf]
  %v137 = vld [vmem:[%s0 + $0x1e8] sm:$0xf]
  %v138 = vld [vmem:[%s0 + $0x1ec] sm:$0xf]
  %v139 = vld [vmem:[%s0 + $0x1f0] sm:$0xf]
  %v140 = vld [vmem:[%s0 + $0x1f4] sm:$0xf]
  %v141 = vld [vmem:[%s0 + $0x1f8] sm:$0xf]
  %v142 = vld [vmem:[%s0 + $0x1fc] sm:$0xf]
  %v143 = vld [vmem:[%s0 + $0x200] sm:$0xf]
  %v144 = vld [vmem:[%s0 + $0x204] sm:$0xf]
  %v145 = vld [vmem:[%s0 + $0x208] sm:$0xf]
  %v146 = vld [vmem:[%s0 + $0x20c] sm:$0xf]
  %v147 = vld [vmem:[%s0 + $0x210] sm:$0xf]
  %v148 = vld [vmem:[%s0 + $0x214] sm:$0xf]
  %v149 = vld [vmem:[%s0 + $0x218] sm:$0xf]
  %v150 = vld [vmem:[%s0 + $0x21c] sm:$0xf]
  %v151 = vld [vmem:[%s0 + $0x220] sm:$0xf]
  %v152 = vld [vmem:[%s0 + $0x224] sm:$0xf]
  %v153 = vld [vmem:[%s0 + $0x228] sm:$0xf]
  %v154 = vld [vmem:[%s0 + $0x22c] sm:$0xf]
  %v155 = vld [vmem:[%s0 + $0x230] sm:$0xf]
  %v156 = vld [vmem:[%s0 + $0x234] sm:$0xf]
  %v157 = vld [vmem:[%s0 + $0x238] sm:$0xf]
  %v158 = vld [vmem:[%s0 + $0x23c] sm:$0xf]
  %v159 = vld [vmem:[%s0 + $0x240] sm:$0xf]
  %v160 = vld [vmem:[%s0 + $0x244] sm:$0xf]
  %v161 = vld [vmem:[%s0 + $0x248] sm:$0xf]
  %v162 = vld [vmem:[%s0 + $0x24c] sm:$0xf]
  %v163 = vld [vmem:[%s0 + $0x250] sm:$0xf]
  %v164 = vld [vmem:[%s0 + $0x254] sm:$0xf]
  %v165 = vld [vmem:[%s0 + $0x258] sm:$0xf]
  %v166 = vld [vmem:[%s0 + $0x25c] sm:$0xf]
  %v167 = vld [vmem:[%s0 + $0x260] sm:$0xf]
  %v168 = vld [vmem:[%s0 + $0x264] sm:$0xf]
  %v169 = vld [vmem:[%s0 + $0x268] sm:$0xf]
  %v170 = vld [vmem:[%s0 + $0x26c] sm:$0xf]
  %v171 = vld [vmem:[%s0 + $0x270] sm:$0xf]
  %v172 = vld [vmem:[%s0 + $0x274] sm:$0xf]
  %v173 = vld [vmem:[%s0 + $0x278] sm:$0xf]
  %v174 = vld [vmem:[%s0 + $0x27c] sm:$0xf]
  %v175 = vld [vmem:[%s0 + $0x280] sm:$0xf]
  %v176 = vld [vmem:[%s0 + $0x284] sm:$0xf]
  %v177 = vld [vmem:[%s0 + $0x288] sm:$0xf]
  %v178 = vld [vmem:[%s0 + $0x28c] sm:$0xf]
  %v179 = vld [vmem:[%s0 + $0x290] sm:$0xf]
  %v180 = vld [vmem:[%s0 + $0x294] sm:$0xf]
  %v181 = vld [vmem:[%s0 + $0x298] sm:$0xf]
  %v182 = vld [vmem:[%s0 + $0x29c] sm:$0xf]
  %v183 = vld [vmem:[%s0 + $0x2a0] sm:$0xf]
  %v184 = vld [vmem:[%s0 + $0x2a4] sm:$0xf]
  %v185 = vld [vmem:[%s0 + $0x2a8] sm:$0xf]
  %v186 = vld [vmem:[%s0 + $0x2ac] sm:$0xf]
  %v187 = vld [vmem:[%s0 + $0x2b0] sm:$0xf]
  %v188 = vld [vmem:[%s0 + $0x2b4] sm:$0xf]
  %v189 = vld [vmem:[%s0 + $0x2b8] sm:$0xf]
  %v190 = vld [vmem:[%s0 + $0x2bc] sm:$0xf]
  %v191 = vld [vmem:[%s0 + $0x2c0] sm:$0xf]
  %v192 = vld [vmem:[%s0 + $0x2c4] sm:$0xf]
  %v193 = vld [vmem:[%s0 + $0x2c8] sm:$0xf]
  %v194 = vld [vmem:[%s0 + $0x2cc] sm:$0xf]
  %v195 = vld [vmem:[%s0 + $0x2d0] sm:$0xf]
  %v196 = vld [vmem:[%s0 + $0x2d4] sm:$0xf]
  %v197 = vld [vmem:[%s0 + $0x2d8] sm:$0xf]
  %v198 = vld [vmem:[%s0 + $0x2dc] sm:$0xf]
  %v199 = vld [vmem:[%s0 + $0x2e0] sm:$0xf]
  %v200 = vld [vmem:[%s0 + $0x2e4] sm:$0xf]
  %v201 = vld [vmem:[%s0 + $0x2e8] sm:$0xf]
  %v202 = vld [vmem:[%s0 + $0x2ec] sm:$0xf]
  %v203 = vld [vmem:[%s0 + $0x2f0] sm:$0xf]
  %v204 = vld [vmem:[%s0 + $0x2f4] sm:$0xf]
  %v205 = vld [vmem:[%s0 + $0x2f8] sm:$0xf]
  %v206 = vld [vmem:[%s0 + $0x2fc] sm:$0xf]
  %v207 = vld [vmem:[%s0 + $0x300] sm:$0xf]
  %v208 = vld [vmem:[%s0 + $0x304] sm:$0xf]
  %v209 = vld [vmem:[%s0 + $0x308] sm:$0xf]
  %v210 = vld [vmem:[%s0 + $0x30c] sm:$0xf]
  %v211 = vld [vmem:[%s1] sm:$0xf]
  %v212 = vld [vmem:[%s1 + $0x4] sm:$0xf]
  %v213 = vld [vmem:[%s1 + $0x8] sm:$0xf]
  %v214 = vld [vmem:[%s1 + $0xc] sm:$0xf]
  %v411 = vunpack.c.l.b16 %v15
  %v412 = vunpack.c.l.b16 %v16
  %v413 = vunpack.c.l.b16 %v17
  %v414 = vunpack.c.l.b16 %v18
  %v415 = vunpack.c.l.b16 %v19
  %v416 = vunpack.c.l.b16 %v20
  %v417 = vunpack.c.l.b16 %v21
  %v418 = vunpack.c.l.b16 %v22
  %v419 = vunpack.c.l.b16 %v23
  %v420 = vunpack.c.l.b16 %v24
  %v421 = vunpack.c.l.b16 %v25
  %v422 = vunpack.c.l.b16 %v26
  %v423 = vunpack.c.l.b16 %v27
  %v424 = vunpack.c.l.b16 %v28
  %v425 = vunpack.c.l.b16 %v29
  %v426 = vunpack.c.l.b16 %v30
  %v427 = vunpack.c.l.b16 %v31
  %v428 = vunpack.c.l.b16 %v32
  %v429 = vunpack.c.l.b16 %v33
  %v430 = vunpack.c.l.b16 %v34
  %v431 = vunpack.c.l.b16 %v35
  %v432 = vunpack.c.l.b16 %v36
  %v433 = vunpack.c.l.b16 %v37
  %v434 = vunpack.c.l.b16 %v38
  %v435 = vunpack.c.l.b16 %v39
  %v436 = vunpack.c.l.b16 %v40
  %v437 = vunpack.c.l.b16 %v41
  %v438 = vunpack.c.l.b16 %v42
  %v439 = vunpack.c.l.b16 %v43
  %v440 = vunpack.c.l.b16 %v44
  %v441 = vunpack.c.l.b16 %v45
  %v442 = vunpack.c.l.b16 %v46
  %v443 = vunpack.c.l.b16 %v47
  %v444 = vunpack.c.l.b16 %v48
  %v445 = vunpack.c.l.b16 %v49
  %v446 = vunpack.c.l.b16 %v50
  %v447 = vunpack.c.l.b16 %v51
  %v448 = vunpack.c.l.b16 %v52
  %v449 = vunpack.c.l.b16 %v53
  %v450 = vunpack.c.l.b16 %v54
  %v451 = vunpack.c.l.b16 %v55
  %v452 = vunpack.c.l.b16 %v56
  %v453 = vunpack.c.l.b16 %v57
  %v454 = vunpack.c.l.b16 %v58
  %v455 = vunpack.c.l.b16 %v59
  %v456 = vunpack.c.l.b16 %v60
  %v457 = vunpack.c.l.b16 %v61
  %v458 = vunpack.c.l.b16 %v62
  %v459 = vunpack.c.l.b16 %v63
  %v460 = vunpack.c.l.b16 %v64
  %v461 = vunpack.c.l.b16 %v65
  %v462 = vunpack.c.l.b16 %v66
  %v463 = vunpack.c.l.b16 %v67
  %v464 = vunpack.c.l.b16 %v68
  %v465 = vunpack.c.l.b16 %v69
  %v466 = vunpack.c.l.b16 %v70
  %v467 = vunpack.c.l.b16 %v71
  %v468 = vunpack.c.l.b16 %v72
  %v469 = vunpack.c.l.b16 %v73
  %v470 = vunpack.c.l.b16 %v74
  %v471 = vunpack.c.l.b16 %v75
  %v472 = vunpack.c.l.b16 %v76
  %v473 = vunpack.c.l.b16 %v77
  %v474 = vunpack.c.l.b16 %v78
  %v475 = vunpack.c.l.b16 %v79
  %v476 = vunpack.c.l.b16 %v80
  %v477 = vunpack.c.l.b16 %v81
  %v478 = vunpack.c.l.b16 %v82
  %v479 = vunpack.c.l.b16 %v83
  %v480 = vunpack.c.l.b16 %v84
  %v481 = vunpack.c.l.b16 %v85
  %v482 = vunpack.c.l.b16 %v86
  %v483 = vunpack.c.l.b16 %v87
  %v484 = vunpack.c.l.b16 %v88
  %v485 = vunpack.c.l.b16 %v89
  %v486 = vunpack.c.l.b16 %v90
  %v487 = vunpack.c.l.b16 %v91
  %v488 = vunpack.c.l.b16 %v92
  %v489 = vunpack.c.l.b16 %v93
  %v490 = vunpack.c.l.b16 %v94
  %v491 = vunpack.c.l.b16 %v95
  %v492 = vunpack.c.l.b16 %v96
  %v493 = vunpack.c.l.b16 %v97
  %v494 = vunpack.c.l.b16 %v98
  %v495 = vunpack.c.l.b16 %v99
  %v496 = vunpack.c.l.b16 %v100
  %v497 = vunpack.c.l.b16 %v101
  %v498 = vunpack.c.l.b16 %v102
  %v499 = vunpack.c.l.b16 %v103
  %v500 = vunpack.c.l.b16 %v104
  %v501 = vunpack.c.l.b16 %v105
  %v502 = vunpack.c.l.b16 %v106
  %v503 = vunpack.c.l.b16 %v107
  %v504 = vunpack.c.l.b16 %v108
  %v505 = vunpack.c.l.b16 %v109
  %v506 = vunpack.c.l.b16 %v110
  %v507 = vunpack.c.l.b16 %v111
  %v508 = vunpack.c.l.b16 %v112
  %v509 = vunpack.c.l.b16 %v113
  %v510 = vunpack.c.l.b16 %v114
  %v511 = vunpack.c.l.b16 %v115
  %v512 = vunpack.c.l.b16 %v116
  %v513 = vunpack.c.l.b16 %v117
  %v514 = vunpack.c.l.b16 %v118
  %v515 = vunpack.c.l.b16 %v119
  %v516 = vunpack.c.l.b16 %v120
  %v517 = vunpack.c.l.b16 %v121
  %v518 = vunpack.c.l.b16 %v122
  %v519 = vunpack.c.l.b16 %v123
  %v520 = vunpack.c.l.b16 %v124
  %v521 = vunpack.c.l.b16 %v125
  %v522 = vunpack.c.l.b16 %v126
  %v523 = vunpack.c.l.b16 %v127
  %v524 = vunpack.c.l.b16 %v128
  %v525 = vunpack.c.l.b16 %v129
  %v526 = vunpack.c.l.b16 %v130
  %v527 = vunpack.c.l.b16 %v131
  %v528 = vunpack.c.l.b16 %v132
  %v529 = vunpack.c.l.b16 %v133
  %v530 = vunpack.c.l.b16 %v134
  %v531 = vunpack.c.l.b16 %v135
  %v532 = vunpack.c.l.b16 %v136
  %v533 = vunpack.c.l.b16 %v137
  %v534 = vunpack.c.l.b16 %v138
  %v535 = vunpack.c.l.b16 %v139
  %v536 = vunpack.c.l.b16 %v140
  %v537 = vunpack.c.l.b16 %v141
  %v538 = vunpack.c.l.b16 %v142
  %v539 = vunpack.c.l.b16 %v143
  %v540 = vunpack.c.l.b16 %v144
  %v541 = vunpack.c.l.b16 %v145
  %v542 = vunpack.c.l.b16 %v146
  %v543 = vunpack.c.l.b16 %v147
  %v544 = vunpack.c.l.b16 %v148
  %v545 = vunpack.c.l.b16 %v149
  %v546 = vunpack.c.l.b16 %v150
  %v547 = vunpack.c.l.b16 %v151
  %v548 = vunpack.c.l.b16 %v152
  %v549 = vunpack.c.l.b16 %v153
  %v550 = vunpack.c.l.b16 %v154
  %v551 = vunpack.c.l.b16 %v155
  %v552 = vunpack.c.l.b16 %v156
  %v553 = vunpack.c.l.b16 %v157
  %v554 = vunpack.c.l.b16 %v158
  %v555 = vunpack.c.l.b16 %v159
  %v556 = vunpack.c.l.b16 %v160
  %v557 = vunpack.c.l.b16 %v161
  %v558 = vunpack.c.l.b16 %v162
  %v559 = vunpack.c.l.b16 %v163
  %v560 = vunpack.c.l.b16 %v164
  %v561 = vunpack.c.l.b16 %v165
  %v562 = vunpack.c.l.b16 %v166
  %v563 = vunpack.c.l.b16 %v167
  %v564 = vunpack.c.l.b16 %v168
  %v565 = vunpack.c.l.b16 %v169
  %v566 = vunpack.c.l.b16 %v170
  %v567 = vunpack.c.l.b16 %v171
  %v568 = vunpack.c.l.b16 %v172
  %v569 = vunpack.c.l.b16 %v173
  %v570 = vunpack.c.l.b16 %v174
  %v571 = vunpack.c.l.b16 %v175
  %v572 = vunpack.c.l.b16 %v176
  %v573 = vunpack.c.l.b16 %v177
  %v574 = vunpack.c.l.b16 %v178
  %v575 = vunpack.c.l.b16 %v179
  %v576 = vunpack.c.l.b16 %v180
  %v577 = vunpack.c.l.b16 %v181
  %v578 = vunpack.c.l.b16 %v182
  %v579 = vunpack.c.l.b16 %v183
  %v580 = vunpack.c.l.b16 %v184
  %v581 = vunpack.c.l.b16 %v185
  %v582 = vunpack.c.l.b16 %v186
  %v583 = vunpack.c.l.b16 %v187
  %v584 = vunpack.c.l.b16 %v188
  %v585 = vunpack.c.l.b16 %v189
  %v586 = vunpack.c.l.b16 %v190
  %v587 = vunpack.c.l.b16 %v191
  %v588 = vunpack.c.l.b16 %v192
  %v589 = vunpack.c.l.b16 %v193
  %v590 = vunpack.c.l.b16 %v194
  %v591 = vunpack.c.l.b16 %v195
  %v592 = vunpack.c.l.b16 %v196
  %v593 = vunpack.c.l.b16 %v197
  %v594 = vunpack.c.l.b16 %v198
  %v595 = vunpack.c.l.b16 %v199
  %v596 = vunpack.c.l.b16 %v200
  %v597 = vunpack.c.l.b16 %v201
  %v598 = vunpack.c.l.b16 %v202
  %v599 = vunpack.c.l.b16 %v203
  %v600 = vunpack.c.l.b16 %v204
  %v601 = vunpack.c.l.b16 %v205
  %v602 = vunpack.c.l.b16 %v206
  %v603 = vunpack.c.l.b16 %v207
  %v604 = vunpack.c.l.b16 %v208
  %v605 = vunpack.c.l.b16 %v209
  %v606 = vunpack.c.l.b16 %v210
  %v607 = vpack.c.b16 %v412, %v411
  %v608 = vpack.c.b16 %v414, %v413
  %v609 = vpack.c.b16 %v416, %v415
  %v610 = vpack.c.b16 %v418, %v417
  %v611 = vpack.c.b16 %v420, %v419
  %v612 = vpack.c.b16 %v422, %v421
  %v613 = vpack.c.b16 %v424, %v423
  %v614 = vpack.c.b16 %v426, %v425
  %v615 = vpack.c.b16 %v428, %v427
  %v616 = vpack.c.b16 %v430, %v429
  %v617 = vpack.c.b16 %v432, %v431
  %v618 = vpack.c.b16 %v434, %v433
  %v619 = vpack.c.b16 %v436, %v435
  %v620 = vpack.c.b16 %v438, %v437
  %v621 = vpack.c.b16 %v440, %v439
  %v622 = vpack.c.b16 %v442, %v441
  %v623 = vpack.c.b16 %v444, %v443
  %v624 = vpack.c.b16 %v446, %v445
  %v625 = vpack.c.b16 %v448, %v447
  %v626 = vpack.c.b16 %v450, %v449
  %v627 = vpack.c.b16 %v452, %v451
  %v628 = vpack.c.b16 %v454, %v453
  %v629 = vpack.c.b16 %v456, %v455
  %v630 = vpack.c.b16 %v458, %v457
  %v631 = vpack.c.b16 %v460, %v459
  %v632 = vpack.c.b16 %v462, %v461
  %v633 = vpack.c.b16 %v464, %v463
  %v634 = vpack.c.b16 %v466, %v465
  %v635 = vpack.c.b16 %v468, %v467
  %v636 = vpack.c.b16 %v470, %v469
  %v637 = vpack.c.b16 %v472, %v471
  %v638 = vpack.c.b16 %v474, %v473
  %v639 = vpack.c.b16 %v476, %v475
  %v640 = vpack.c.b16 %v478, %v477
  %v641 = vpack.c.b16 %v480, %v479
  %v642 = vpack.c.b16 %v482, %v481
  %v643 = vpack.c.b16 %v484, %v483
  %v644 = vpack.c.b16 %v486, %v485
  %v645 = vpack.c.b16 %v488, %v487
  %v646 = vpack.c.b16 %v490, %v489
  %v647 = vpack.c.b16 %v492, %v491
  %v648 = vpack.c.b16 %v494, %v493
  %v649 = vpack.c.b16 %v496, %v495
  %v650 = vpack.c.b16 %v498, %v497
  %v651 = vpack.c.b16 %v500, %v499
  %v652 = vpack.c.b16 %v502, %v501
  %v653 = vpack.c.b16 %v504, %v503
  %v654 = vpack.c.b16 %v506, %v505
  %v655 = vpack.c.b16 %v508, %v507
  %v656 = vpack.c.b16 %v510, %v509
  %v657 = vpack.c.b16 %v512, %v511
  %v658 = vpack.c.b16 %v514, %v513
  %v659 = vpack.c.b16 %v516, %v515
  %v660 = vpack.c.b16 %v518, %v517
  %v661 = vpack.c.b16 %v520, %v519
  %v662 = vpack.c.b16 %v522, %v521
  %v663 = vpack.c.b16 %v524, %v523
  %v664 = vpack.c.b16 %v526, %v525
  %v665 = vpack.c.b16 %v528, %v527
  %v666 = vpack.c.b16 %v530, %v529
  %v667 = vpack.c.b16 %v532, %v531
  %v668 = vpack.c.b16 %v534, %v533
  %v669 = vpack.c.b16 %v536, %v535
  %v670 = vpack.c.b16 %v538, %v537
  %v671 = vpack.c.b16 %v540, %v539
  %v672 = vpack.c.b16 %v542, %v541
  %v673 = vpack.c.b16 %v544, %v543
  %v674 = vpack.c.b16 %v546, %v545
  %v675 = vpack.c.b16 %v548, %v547
  %v676 = vpack.c.b16 %v550, %v549
  %v677 = vpack.c.b16 %v552, %v551
  %v678 = vpack.c.b16 %v554, %v553
  %v679 = vpack.c.b16 %v556, %v555
  %v680 = vpack.c.b16 %v558, %v557
  %v681 = vpack.c.b16 %v560, %v559
  %v682 = vpack.c.b16 %v562, %v561
  %v683 = vpack.c.b16 %v564, %v563
  %v684 = vpack.c.b16 %v566, %v565
  %v685 = vpack.c.b16 %v568, %v567
  %v686 = vpack.c.b16 %v570, %v569
  %v687 = vpack.c.b16 %v572, %v571
  %v688 = vpack.c.b16 %v574, %v573
  %v689 = vpack.c.b16 %v576, %v575
  %v690 = vpack.c.b16 %v578, %v577
  %v691 = vpack.c.b16 %v580, %v579
  %v692 = vpack.c.b16 %v582, %v581
  %v693 = vpack.c.b16 %v584, %v583
  %v694 = vpack.c.b16 %v586, %v585
  %v695 = vpack.c.b16 %v588, %v587
  %v696 = vpack.c.b16 %v590, %v589
  %v697 = vpack.c.b16 %v592, %v591
  %v698 = vpack.c.b16 %v594, %v593
  %v699 = vpack.c.b16 %v596, %v595
  %v700 = vpack.c.b16 %v598, %v597
  %v701 = vpack.c.b16 %v600, %v599
  %v702 = vpack.c.b16 %v602, %v601
  %v703 = vpack.c.b16 %v604, %v603
  %v704 = vpack.c.b16 %v606, %v605
  %v709 = vunpack.c.l.b16 %v211
  %v710 = vunpack.c.l.b16 %v212
  %v711 = vunpack.c.l.b16 %v213
  %v712 = vunpack.c.l.b16 %v214
  %v713 = vpack.c.b16 %v710, %v709
  %v714 = vpack.c.b16 %v712, %v711
  %vm717 = vcmask 261120
  %v719 = vsel %vm717, %v607, 0
  %v722 = vsel %vm717, %v608, 0
  %v725 = vsel %vm717, %v609, 0
  %v728 = vsel %vm717, %v610, 0
  %v731 = vsel %vm717, %v611, 0
  %v734 = vsel %vm717, %v612, 0
  %v737 = vsel %vm717, %v613, 0
  %v740 = vsel %vm717, %v614, 0
  %v743 = vsel %vm717, %v615, 0
  %v746 = vsel %vm717, %v616, 0
  %v749 = vsel %vm717, %v617, 0
  %v752 = vsel %vm717, %v618, 0
  %v755 = vsel %vm717, %v619, 0
  %v758 = vsel %vm717, %v620, 0
  %v761 = vsel %vm717, %v621, 0
  %v764 = vsel %vm717, %v622, 0
  %v767 = vsel %vm717, %v623, 0
  %v770 = vsel %vm717, %v624, 0
  %v773 = vsel %vm717, %v625, 0
  %v776 = vsel %vm717, %v626, 0
  %v779 = vsel %vm717, %v627, 0
  %v782 = vsel %vm717, %v628, 0
  %v785 = vsel %vm717, %v629, 0
  %v788 = vsel %vm717, %v630, 0
  %v791 = vsel %vm717, %v631, 0
  %v794 = vsel %vm717, %v632, 0
  %v797 = vsel %vm717, %v633, 0
  %v800 = vsel %vm717, %v634, 0
  %v803 = vsel %vm717, %v635, 0
  %v806 = vsel %vm717, %v636, 0
  %v809 = vsel %vm717, %v637, 0
  %v812 = vsel %vm717, %v638, 0
  %v815 = vsel %vm717, %v639, 0
  %v818 = vsel %vm717, %v640, 0
  %v821 = vsel %vm717, %v641, 0
  %v824 = vsel %vm717, %v642, 0
  %v827 = vsel %vm717, %v643, 0
  %v830 = vsel %vm717, %v644, 0
  %v833 = vsel %vm717, %v645, 0
  %v836 = vsel %vm717, %v646, 0
  %v839 = vsel %vm717, %v647, 0
  %v842 = vsel %vm717, %v648, 0
  %v845 = vsel %vm717, %v649, 0
  %v848 = vsel %vm717, %v650, 0
  %v851 = vsel %vm717, %v651, 0
  %v854 = vsel %vm717, %v652, 0
  %v857 = vsel %vm717, %v653, 0
  %v860 = vsel %vm717, %v654, 0
  %v863 = vsel %vm717, %v655, 0
  %v866 = vsel %vm717, %v656, 0
  %v869 = vsel %vm717, %v657, 0
  %v872 = vsel %vm717, %v658, 0
  %v875 = vsel %vm717, %v659, 0
  %v878 = vsel %vm717, %v660, 0
  %v881 = vsel %vm717, %v661, 0
  %v884 = vsel %vm717, %v662, 0
  %v887 = vsel %vm717, %v663, 0
  %v890 = vsel %vm717, %v664, 0
  %v893 = vsel %vm717, %v665, 0
  %v896 = vsel %vm717, %v666, 0
  %v899 = vsel %vm717, %v667, 0
  %v902 = vsel %vm717, %v668, 0
  %v905 = vsel %vm717, %v669, 0
  %v908 = vsel %vm717, %v670, 0
  %v911 = vsel %vm717, %v671, 0
  %v914 = vsel %vm717, %v672, 0
  %v917 = vsel %vm717, %v673, 0
  %v920 = vsel %vm717, %v674, 0
  %v923 = vsel %vm717, %v675, 0
  %v926 = vsel %vm717, %v676, 0
  %v929 = vsel %vm717, %v677, 0
  %v932 = vsel %vm717, %v678, 0
  %v935 = vsel %vm717, %v679, 0
  %v938 = vsel %vm717, %v680, 0
  %v941 = vsel %vm717, %v681, 0
  %v944 = vsel %vm717, %v682, 0
  %v947 = vsel %vm717, %v683, 0
  %v950 = vsel %vm717, %v684, 0
  %v953 = vsel %vm717, %v685, 0
  %v956 = vsel %vm717, %v686, 0
  %v959 = vsel %vm717, %v687, 0
  %v962 = vsel %vm717, %v688, 0
  %v965 = vsel %vm717, %v689, 0
  %v968 = vsel %vm717, %v690, 0
  %v971 = vsel %vm717, %v691, 0
  %v974 = vsel %vm717, %v692, 0
  %v977 = vsel %vm717, %v693, 0
  %v980 = vsel %vm717, %v694, 0
  %v983 = vsel %vm717, %v695, 0
  %v986 = vsel %vm717, %v696, 0
  %v989 = vsel %vm717, %v697, 0
  %v992 = vsel %vm717, %v698, 0
  %v995 = vsel %vm717, %v699, 0
  %v998 = vsel %vm717, %v700, 0
  %v1001 = vsel %vm717, %v701, 0
  %v1004 = vsel %vm717, %v702, 0
  %v1007 = vsel %vm717, %v703, 0
  %v1010 = vsel %vm717, %v704, 0
  %1012 = vmatpush.bf16.msra.mxu0 0
  %1013 = vmatpush.bf16.msra.mxu0 0
  %1014 = vmatpush.bf16.msra.mxu0 0
  %1015 = vmatpush.bf16.msra.mxu0 0
  %1016 = vmatpush.bf16.msra.mxu0 0
  %1017 = vmatpush.bf16.msra.mxu0 0
  %1018 = vmatpush.bf16.msra.mxu0 %v714
  %1019 = vmatpush.bf16.msra.mxu0 %v713
  %1020 = vmatmul.bf16.gmra.mxu0 %v719
  %v1021 = vpop.f32.mrf.mxu0
  %v1022 = vadd.f32 0.0, %v1021
  %v1023 = vpop.f32.mrf.mxu0
  %v1024 = vadd.f32 0.0, %v1023
  %1025 = vmatmul.bf16.gmra.mxu0 %v722
  %v1026 = vpop.f32.mrf.mxu0
  %v1027 = vadd.f32 0.0, %v1026
  %v1028 = vpop.f32.mrf.mxu0
  %v1029 = vadd.f32 0.0, %v1028
  %1030 = vmatmul.bf16.gmra.mxu0 %v725
  %v1031 = vpop.f32.mrf.mxu0
  %v1032 = vadd.f32 0.0, %v1031
  %v1033 = vpop.f32.mrf.mxu0
  %v1034 = vadd.f32 0.0, %v1033
  %1035 = vmatmul.bf16.gmra.mxu0 %v728
  %v1036 = vpop.f32.mrf.mxu0
  %v1037 = vadd.f32 0.0, %v1036
  %v1038 = vpop.f32.mrf.mxu0
  %v1039 = vadd.f32 0.0, %v1038
  %1040 = vmatmul.bf16.gmra.mxu0 %v731
  %v1041 = vpop.f32.mrf.mxu0
  %v1042 = vadd.f32 0.0, %v1041
  %v1043 = vpop.f32.mrf.mxu0
  %v1044 = vadd.f32 0.0, %v1043
  %1045 = vmatmul.bf16.gmra.mxu0 %v734
  %v1046 = vpop.f32.mrf.mxu0
  %v1047 = vadd.f32 0.0, %v1046
  %v1048 = vpop.f32.mrf.mxu0
  %v1049 = vadd.f32 0.0, %v1048
  %1050 = vmatmul.bf16.gmra.mxu0 %v737
  %v1051 = vpop.f32.mrf.mxu0
  %v1052 = vadd.f32 0.0, %v1051
  %v1053 = vpop.f32.mrf.mxu0
  %v1054 = vadd.f32 0.0, %v1053
  %1055 = vmatmul.bf16.gmra.mxu0 %v740
  %v1056 = vpop.f32.mrf.mxu0
  %v1057 = vadd.f32 0.0, %v1056
  %v1058 = vpop.f32.mrf.mxu0
  %v1059 = vadd.f32 0.0, %v1058
  %1060 = vmatmul.bf16.gmra.mxu0 %v743
  %v1061 = vpop.f32.mrf.mxu0
  %v1062 = vadd.f32 0.0, %v1061
  %v1063 = vpop.f32.mrf.mxu0
  %v1064 = vadd.f32 0.0, %v1063
  %1065 = vmatmul.bf16.gmra.mxu0 %v746
  %v1066 = vpop.f32.mrf.mxu0
  %v1067 = vadd.f32 0.0, %v1066
  %v1068 = vpop.f32.mrf.mxu0
  %v1069 = vadd.f32 0.0, %v1068
  %1070 = vmatmul.bf16.gmra.mxu0 %v749
  %v1071 = vpop.f32.mrf.mxu0
  %v1072 = vadd.f32 0.0, %v1071
  %v1073 = vpop.f32.mrf.mxu0
  %v1074 = vadd.f32 0.0, %v1073
  %1075 = vmatmul.bf16.gmra.mxu0 %v752
  %v1076 = vpop.f32.mrf.mxu0
  %v1077 = vadd.f32 0.0, %v1076
  %v1078 = vpop.f32.mrf.mxu0
  %v1079 = vadd.f32 0.0, %v1078
  %1080 = vmatmul.bf16.gmra.mxu0 %v755
  %v1081 = vpop.f32.mrf.mxu0
  %v1082 = vadd.f32 0.0, %v1081
  %v1083 = vpop.f32.mrf.mxu0
  %v1084 = vadd.f32 0.0, %v1083
  %1085 = vmatmul.bf16.gmra.mxu0 %v758
  %v1086 = vpop.f32.mrf.mxu0
  %v1087 = vadd.f32 0.0, %v1086
  %v1088 = vpop.f32.mrf.mxu0
  %v1089 = vadd.f32 0.0, %v1088
  %1090 = vmatmul.bf16.gmra.mxu0 %v761
  %v1091 = vpop.f32.mrf.mxu0
  %v1092 = vadd.f32 0.0, %v1091
  %v1093 = vpop.f32.mrf.mxu0
  %v1094 = vadd.f32 0.0, %v1093
  %1095 = vmatmul.bf16.gmra.mxu0 %v764
  %v1096 = vpop.f32.mrf.mxu0
  %v1097 = vadd.f32 0.0, %v1096
  %v1098 = vpop.f32.mrf.mxu0
  %v1099 = vadd.f32 0.0, %v1098
  %1100 = vmatmul.bf16.gmra.mxu0 %v767
  %v1101 = vpop.f32.mrf.mxu0
  %v1102 = vadd.f32 0.0, %v1101
  %v1103 = vpop.f32.mrf.mxu0
  %v1104 = vadd.f32 0.0, %v1103
  %1105 = vmatmul.bf16.gmra.mxu0 %v770
  %v1106 = vpop.f32.mrf.mxu0
  %v1107 = vadd.f32 0.0, %v1106
  %v1108 = vpop.f32.mrf.mxu0
  %v1109 = vadd.f32 0.0, %v1108
  %1110 = vmatmul.bf16.gmra.mxu0 %v773
  %v1111 = vpop.f32.mrf.mxu0
  %v1112 = vadd.f32 0.0, %v1111
  %v1113 = vpop.f32.mrf.mxu0
  %v1114 = vadd.f32 0.0, %v1113
  %1115 = vmatmul.bf16.gmra.mxu0 %v776
  %v1116 = vpop.f32.mrf.mxu0
  %v1117 = vadd.f32 0.0, %v1116
  %v1118 = vpop.f32.mrf.mxu0
  %v1119 = vadd.f32 0.0, %v1118
  %1120 = vmatmul.bf16.gmra.mxu0 %v779
  %v1121 = vpop.f32.mrf.mxu0
  %v1122 = vadd.f32 0.0, %v1121
  %v1123 = vpop.f32.mrf.mxu0
  %v1124 = vadd.f32 0.0, %v1123
  %1125 = vmatmul.bf16.gmra.mxu0 %v782
  %v1126 = vpop.f32.mrf.mxu0
  %v1127 = vadd.f32 0.0, %v1126
  %v1128 = vpop.f32.mrf.mxu0
  %v1129 = vadd.f32 0.0, %v1128
  %1130 = vmatmul.bf16.gmra.mxu0 %v785
  %v1131 = vpop.f32.mrf.mxu0
  %v1132 = vadd.f32 0.0, %v1131
  %v1133 = vpop.f32.mrf.mxu0
  %v1134 = vadd.f32 0.0, %v1133
  %1135 = vmatmul.bf16.gmra.mxu0 %v788
  %v1136 = vpop.f32.mrf.mxu0
  %v1137 = vadd.f32 0.0, %v1136
  %v1138 = vpop.f32.mrf.mxu0
  %v1139 = vadd.f32 0.0, %v1138
  %1140 = vmatmul.bf16.gmra.mxu0 %v791
  %v1141 = vpop.f32.mrf.mxu0
  %v1142 = vadd.f32 0.0, %v1141
  %v1143 = vpop.f32.mrf.mxu0
  %v1144 = vadd.f32 0.0, %v1143
  %1145 = vmatmul.bf16.gmra.mxu0 %v794
  %v1146 = vpop.f32.mrf.mxu0
  %v1147 = vadd.f32 0.0, %v1146
  %v1148 = vpop.f32.mrf.mxu0
  %v1149 = vadd.f32 0.0, %v1148
  %1150 = vmatmul.bf16.gmra.mxu0 %v797
  %v1151 = vpop.f32.mrf.mxu0
  %v1152 = vadd.f32 0.0, %v1151
  %v1153 = vpop.f32.mrf.mxu0
  %v1154 = vadd.f32 0.0, %v1153
  %1155 = vmatmul.bf16.gmra.mxu0 %v800
  %v1156 = vpop.f32.mrf.mxu0
  %v1157 = vadd.f32 0.0, %v1156
  %v1158 = vpop.f32.mrf.mxu0
  %v1159 = vadd.f32 0.0, %v1158
  %1160 = vmatmul.bf16.gmra.mxu0 %v803
  %v1161 = vpop.f32.mrf.mxu0
  %v1162 = vadd.f32 0.0, %v1161
  %v1163 = vpop.f32.mrf.mxu0
  %v1164 = vadd.f32 0.0, %v1163
  %1165 = vmatmul.bf16.gmra.mxu0 %v806
  %v1166 = vpop.f32.mrf.mxu0
  %v1167 = vadd.f32 0.0, %v1166
  %v1168 = vpop.f32.mrf.mxu0
  %v1169 = vadd.f32 0.0, %v1168
  %1170 = vmatmul.bf16.gmra.mxu0 %v809
  %v1171 = vpop.f32.mrf.mxu0
  %v1172 = vadd.f32 0.0, %v1171
  %v1173 = vpop.f32.mrf.mxu0
  %v1174 = vadd.f32 0.0, %v1173
  %1175 = vmatmul.bf16.gmra.mxu0 %v812
  %v1176 = vpop.f32.mrf.mxu0
  %v1177 = vadd.f32 0.0, %v1176
  %v1178 = vpop.f32.mrf.mxu0
  %v1179 = vadd.f32 0.0, %v1178
  %1180 = vmatmul.bf16.gmra.mxu0 %v815
  %v1181 = vpop.f32.mrf.mxu0
  %v1182 = vadd.f32 0.0, %v1181
  %v1183 = vpop.f32.mrf.mxu0
  %v1184 = vadd.f32 0.0, %v1183
  %1185 = vmatmul.bf16.gmra.mxu0 %v818
  %v1186 = vpop.f32.mrf.mxu0
  %v1187 = vadd.f32 0.0, %v1186
  %v1188 = vpop.f32.mrf.mxu0
  %v1189 = vadd.f32 0.0, %v1188
  %1190 = vmatmul.bf16.gmra.mxu0 %v821
  %v1191 = vpop.f32.mrf.mxu0
  %v1192 = vadd.f32 0.0, %v1191
  %v1193 = vpop.f32.mrf.mxu0
  %v1194 = vadd.f32 0.0, %v1193
  %1195 = vmatmul.bf16.gmra.mxu0 %v824
  %v1196 = vpop.f32.mrf.mxu0
  %v1197 = vadd.f32 0.0, %v1196
  %v1198 = vpop.f32.mrf.mxu0
  %v1199 = vadd.f32 0.0, %v1198
  %1200 = vmatmul.bf16.gmra.mxu0 %v827
  %v1201 = vpop.f32.mrf.mxu0
  %v1202 = vadd.f32 0.0, %v1201
  %v1203 = vpop.f32.mrf.mxu0
  %v1204 = vadd.f32 0.0, %v1203
  %1205 = vmatmul.bf16.gmra.mxu0 %v830
  %v1206 = vpop.f32.mrf.mxu0
  %v1207 = vadd.f32 0.0, %v1206
  %v1208 = vpop.f32.mrf.mxu0
  %v1209 = vadd.f32 0.0, %v1208
  %1210 = vmatmul.bf16.gmra.mxu0 %v833
  %v1211 = vpop.f32.mrf.mxu0
  %v1212 = vadd.f32 0.0, %v1211
  %v1213 = vpop.f32.mrf.mxu0
  %v1214 = vadd.f32 0.0, %v1213
  %1215 = vmatmul.bf16.gmra.mxu0 %v836
  %v1216 = vpop.f32.mrf.mxu0
  %v1217 = vadd.f32 0.0, %v1216
  %v1218 = vpop.f32.mrf.mxu0
  %v1219 = vadd.f32 0.0, %v1218
  %1220 = vmatmul.bf16.gmra.mxu0 %v839
  %v1221 = vpop.f32.mrf.mxu0
  %v1222 = vadd.f32 0.0, %v1221
  %v1223 = vpop.f32.mrf.mxu0
  %v1224 = vadd.f32 0.0, %v1223
  %1225 = vmatmul.bf16.gmra.mxu0 %v842
  %v1226 = vpop.f32.mrf.mxu0
  %v1227 = vadd.f32 0.0, %v1226
  %v1228 = vpop.f32.mrf.mxu0
  %v1229 = vadd.f32 0.0, %v1228
  %1230 = vmatmul.bf16.gmra.mxu0 %v845
  %v1231 = vpop.f32.mrf.mxu0
  %v1232 = vadd.f32 0.0, %v1231
  %v1233 = vpop.f32.mrf.mxu0
  %v1234 = vadd.f32 0.0, %v1233
  %1235 = vmatmul.bf16.gmra.mxu0 %v848
  %v1236 = vpop.f32.mrf.mxu0
  %v1237 = vadd.f32 0.0, %v1236
  %v1238 = vpop.f32.mrf.mxu0
  %v1239 = vadd.f32 0.0, %v1238
  %1240 = vmatmul.bf16.gmra.mxu0 %v851
  %v1241 = vpop.f32.mrf.mxu0
  %v1242 = vadd.f32 0.0, %v1241
  %v1243 = vpop.f32.mrf.mxu0
  %v1244 = vadd.f32 0.0, %v1243
  %1245 = vmatmul.bf16.gmra.mxu0 %v854
  %v1246 = vpop.f32.mrf.mxu0
  %v1247 = vadd.f32 0.0, %v1246
  %v1248 = vpop.f32.mrf.mxu0
  %v1249 = vadd.f32 0.0, %v1248
  %1250 = vmatmul.bf16.gmra.mxu0 %v857
  %v1251 = vpop.f32.mrf.mxu0
  %v1252 = vadd.f32 0.0, %v1251
  %v1253 = vpop.f32.mrf.mxu0
  %v1254 = vadd.f32 0.0, %v1253
  %1255 = vmatmul.bf16.gmra.mxu0 %v860
  %v1256 = vpop.f32.mrf.mxu0
  %v1257 = vadd.f32 0.0, %v1256
  %v1258 = vpop.f32.mrf.mxu0
  %v1259 = vadd.f32 0.0, %v1258
  %1260 = vmatmul.bf16.gmra.mxu0 %v863
  %v1261 = vpop.f32.mrf.mxu0
  %v1262 = vadd.f32 0.0, %v1261
  %v1263 = vpop.f32.mrf.mxu0
  %v1264 = vadd.f32 0.0, %v1263
  %1265 = vmatmul.bf16.gmra.mxu0 %v866
  %v1266 = vpop.f32.mrf.mxu0
  %v1267 = vadd.f32 0.0, %v1266
  %v1268 = vpop.f32.mrf.mxu0
  %v1269 = vadd.f32 0.0, %v1268
  %1270 = vmatmul.bf16.gmra.mxu0 %v869
  %v1271 = vpop.f32.mrf.mxu0
  %v1272 = vadd.f32 0.0, %v1271
  %v1273 = vpop.f32.mrf.mxu0
  %v1274 = vadd.f32 0.0, %v1273
  %1275 = vmatmul.bf16.gmra.mxu0 %v872
  %v1276 = vpop.f32.mrf.mxu0
  %v1277 = vadd.f32 0.0, %v1276
  %v1278 = vpop.f32.mrf.mxu0
  %v1279 = vadd.f32 0.0, %v1278
  %1280 = vmatmul.bf16.gmra.mxu0 %v875
  %v1281 = vpop.f32.mrf.mxu0
  %v1282 = vadd.f32 0.0, %v1281
  %v1283 = vpop.f32.mrf.mxu0
  %v1284 = vadd.f32 0.0, %v1283
  %1285 = vmatmul.bf16.gmra.mxu0 %v878
  %v1286 = vpop.f32.mrf.mxu0
  %v1287 = vadd.f32 0.0, %v1286
  %v1288 = vpop.f32.mrf.mxu0
  %v1289 = vadd.f32 0.0, %v1288
  %1290 = vmatmul.bf16.gmra.mxu0 %v881
  %v1291 = vpop.f32.mrf.mxu0
  %v1292 = vadd.f32 0.0, %v1291
  %v1293 = vpop.f32.mrf.mxu0
  %v1294 = vadd.f32 0.0, %v1293
  %1295 = vmatmul.bf16.gmra.mxu0 %v884
  %v1296 = vpop.f32.mrf.mxu0
  %v1297 = vadd.f32 0.0, %v1296
  %v1298 = vpop.f32.mrf.mxu0
  %v1299 = vadd.f32 0.0, %v1298
  %1300 = vmatmul.bf16.gmra.mxu0 %v887
  %v1301 = vpop.f32.mrf.mxu0
  %v1302 = vadd.f32 0.0, %v1301
  %v1303 = vpop.f32.mrf.mxu0
  %v1304 = vadd.f32 0.0, %v1303
  %1305 = vmatmul.bf16.gmra.mxu0 %v890
  %v1306 = vpop.f32.mrf.mxu0
  %v1307 = vadd.f32 0.0, %v1306
  %v1308 = vpop.f32.mrf.mxu0
  %v1309 = vadd.f32 0.0, %v1308
  %1310 = vmatmul.bf16.gmra.mxu0 %v893
  %v1311 = vpop.f32.mrf.mxu0
  %v1312 = vadd.f32 0.0, %v1311
  %v1313 = vpop.f32.mrf.mxu0
  %v1314 = vadd.f32 0.0, %v1313
  %1315 = vmatmul.bf16.gmra.mxu0 %v896
  %v1316 = vpop.f32.mrf.mxu0
  %v1317 = vadd.f32 0.0, %v1316
  %v1318 = vpop.f32.mrf.mxu0
  %v1319 = vadd.f32 0.0, %v1318
  %1320 = vmatmul.bf16.gmra.mxu0 %v899
  %v1321 = vpop.f32.mrf.mxu0
  %v1322 = vadd.f32 0.0, %v1321
  %v1323 = vpop.f32.mrf.mxu0
  %v1324 = vadd.f32 0.0, %v1323
  %1325 = vmatmul.bf16.gmra.mxu0 %v902
  %v1326 = vpop.f32.mrf.mxu0
  %v1327 = vadd.f32 0.0, %v1326
  %v1328 = vpop.f32.mrf.mxu0
  %v1329 = vadd.f32 0.0, %v1328
  %1330 = vmatmul.bf16.gmra.mxu0 %v905
  %v1331 = vpop.f32.mrf.mxu0
  %v1332 = vadd.f32 0.0, %v1331
  %v1333 = vpop.f32.mrf.mxu0
  %v1334 = vadd.f32 0.0, %v1333
  %1335 = vmatmul.bf16.gmra.mxu0 %v908
  %v1336 = vpop.f32.mrf.mxu0
  %v1337 = vadd.f32 0.0, %v1336
  %v1338 = vpop.f32.mrf.mxu0
  %v1339 = vadd.f32 0.0, %v1338
  %1340 = vmatmul.bf16.gmra.mxu0 %v911
  %v1341 = vpop.f32.mrf.mxu0
  %v1342 = vadd.f32 0.0, %v1341
  %v1343 = vpop.f32.mrf.mxu0
  %v1344 = vadd.f32 0.0, %v1343
  %1345 = vmatmul.bf16.gmra.mxu0 %v914
  %v1346 = vpop.f32.mrf.mxu0
  %v1347 = vadd.f32 0.0, %v1346
  %v1348 = vpop.f32.mrf.mxu0
  %v1349 = vadd.f32 0.0, %v1348
  %1350 = vmatmul.bf16.gmra.mxu0 %v917
  %v1351 = vpop.f32.mrf.mxu0
  %v1352 = vadd.f32 0.0, %v1351
  %v1353 = vpop.f32.mrf.mxu0
  %v1354 = vadd.f32 0.0, %v1353
  %1355 = vmatmul.bf16.gmra.mxu0 %v920
  %v1356 = vpop.f32.mrf.mxu0
  %v1357 = vadd.f32 0.0, %v1356
  %v1358 = vpop.f32.mrf.mxu0
  %v1359 = vadd.f32 0.0, %v1358
  %1360 = vmatmul.bf16.gmra.mxu0 %v923
  %v1361 = vpop.f32.mrf.mxu0
  %v1362 = vadd.f32 0.0, %v1361
  %v1363 = vpop.f32.mrf.mxu0
  %v1364 = vadd.f32 0.0, %v1363
  %1365 = vmatmul.bf16.gmra.mxu0 %v926
  %v1366 = vpop.f32.mrf.mxu0
  %v1367 = vadd.f32 0.0, %v1366
  %v1368 = vpop.f32.mrf.mxu0
  %v1369 = vadd.f32 0.0, %v1368
  %1370 = vmatmul.bf16.gmra.mxu0 %v929
  %v1371 = vpop.f32.mrf.mxu0
  %v1372 = vadd.f32 0.0, %v1371
  %v1373 = vpop.f32.mrf.mxu0
  %v1374 = vadd.f32 0.0, %v1373
  %1375 = vmatmul.bf16.gmra.mxu0 %v932
  %v1376 = vpop.f32.mrf.mxu0
  %v1377 = vadd.f32 0.0, %v1376
  %v1378 = vpop.f32.mrf.mxu0
  %v1379 = vadd.f32 0.0, %v1378
  %1380 = vmatmul.bf16.gmra.mxu0 %v935
  %v1381 = vpop.f32.mrf.mxu0
  %v1382 = vadd.f32 0.0, %v1381
  %v1383 = vpop.f32.mrf.mxu0
  %v1384 = vadd.f32 0.0, %v1383
  %1385 = vmatmul.bf16.gmra.mxu0 %v938
  %v1386 = vpop.f32.mrf.mxu0
  %v1387 = vadd.f32 0.0, %v1386
  %v1388 = vpop.f32.mrf.mxu0
  %v1389 = vadd.f32 0.0, %v1388
  %1390 = vmatmul.bf16.gmra.mxu0 %v941
  %v1391 = vpop.f32.mrf.mxu0
  %v1392 = vadd.f32 0.0, %v1391
  %v1393 = vpop.f32.mrf.mxu0
  %v1394 = vadd.f32 0.0, %v1393
  %1395 = vmatmul.bf16.gmra.mxu0 %v944
  %v1396 = vpop.f32.mrf.mxu0
  %v1397 = vadd.f32 0.0, %v1396
  %v1398 = vpop.f32.mrf.mxu0
  %v1399 = vadd.f32 0.0, %v1398
  %1400 = vmatmul.bf16.gmra.mxu0 %v947
  %v1401 = vpop.f32.mrf.mxu0
  %v1402 = vadd.f32 0.0, %v1401
  %v1403 = vpop.f32.mrf.mxu0
  %v1404 = vadd.f32 0.0, %v1403
  %1405 = vmatmul.bf16.gmra.mxu0 %v950
  %v1406 = vpop.f32.mrf.mxu0
  %v1407 = vadd.f32 0.0, %v1406
  %v1408 = vpop.f32.mrf.mxu0
  %v1409 = vadd.f32 0.0, %v1408
  %1410 = vmatmul.bf16.gmra.mxu0 %v953
  %v1411 = vpop.f32.mrf.mxu0
  %v1412 = vadd.f32 0.0, %v1411
  %v1413 = vpop.f32.mrf.mxu0
  %v1414 = vadd.f32 0.0, %v1413
  %1415 = vmatmul.bf16.gmra.mxu0 %v956
  %v1416 = vpop.f32.mrf.mxu0
  %v1417 = vadd.f32 0.0, %v1416
  %v1418 = vpop.f32.mrf.mxu0
  %v1419 = vadd.f32 0.0, %v1418
  %1420 = vmatmul.bf16.gmra.mxu0 %v959
  %v1421 = vpop.f32.mrf.mxu0
  %v1422 = vadd.f32 0.0, %v1421
  %v1423 = vpop.f32.mrf.mxu0
  %v1424 = vadd.f32 0.0, %v1423
  %1425 = vmatmul.bf16.gmra.mxu0 %v962
  %v1426 = vpop.f32.mrf.mxu0
  %v1427 = vadd.f32 0.0, %v1426
  %v1428 = vpop.f32.mrf.mxu0
  %v1429 = vadd.f32 0.0, %v1428
  %1430 = vmatmul.bf16.gmra.mxu0 %v965
  %v1431 = vpop.f32.mrf.mxu0
  %v1432 = vadd.f32 0.0, %v1431
  %v1433 = vpop.f32.mrf.mxu0
  %v1434 = vadd.f32 0.0, %v1433
  %1435 = vmatmul.bf16.gmra.mxu0 %v968
  %v1436 = vpop.f32.mrf.mxu0
  %v1437 = vadd.f32 0.0, %v1436
  %v1438 = vpop.f32.mrf.mxu0
  %v1439 = vadd.f32 0.0, %v1438
  %1440 = vmatmul.bf16.gmra.mxu0 %v971
  %v1441 = vpop.f32.mrf.mxu0
  %v1442 = vadd.f32 0.0, %v1441
  %v1443 = vpop.f32.mrf.mxu0
  %v1444 = vadd.f32 0.0, %v1443
  %1445 = vmatmul.bf16.gmra.mxu0 %v974
  %v1446 = vpop.f32.mrf.mxu0
  %v1447 = vadd.f32 0.0, %v1446
  %v1448 = vpop.f32.mrf.mxu0
  %v1449 = vadd.f32 0.0, %v1448
  %1450 = vmatmul.bf16.gmra.mxu0 %v977
  %v1451 = vpop.f32.mrf.mxu0
  %v1452 = vadd.f32 0.0, %v1451
  %v1453 = vpop.f32.mrf.mxu0
  %v1454 = vadd.f32 0.0, %v1453
  %1455 = vmatmul.bf16.gmra.mxu0 %v980
  %v1456 = vpop.f32.mrf.mxu0
  %v1457 = vadd.f32 0.0, %v1456
  %v1458 = vpop.f32.mrf.mxu0
  %v1459 = vadd.f32 0.0, %v1458
  %1460 = vmatmul.bf16.gmra.mxu0 %v983
  %v1461 = vpop.f32.mrf.mxu0
  %v1462 = vadd.f32 0.0, %v1461
  %v1463 = vpop.f32.mrf.mxu0
  %v1464 = vadd.f32 0.0, %v1463
  %1465 = vmatmul.bf16.gmra.mxu0 %v986
  %v1466 = vpop.f32.mrf.mxu0
  %v1467 = vadd.f32 0.0, %v1466
  %v1468 = vpop.f32.mrf.mxu0
  %v1469 = vadd.f32 0.0, %v1468
  %1470 = vmatmul.bf16.gmra.mxu0 %v989
  %v1471 = vpop.f32.mrf.mxu0
  %v1472 = vadd.f32 0.0, %v1471
  %v1473 = vpop.f32.mrf.mxu0
  %v1474 = vadd.f32 0.0, %v1473
  %1475 = vmatmul.bf16.gmra.mxu0 %v992
  %v1476 = vpop.f32.mrf.mxu0
  %v1477 = vadd.f32 0.0, %v1476
  %v1478 = vpop.f32.mrf.mxu0
  %v1479 = vadd.f32 0.0, %v1478
  %1480 = vmatmul.bf16.gmra.mxu0 %v995
  %v1481 = vpop.f32.mrf.mxu0
  %v1482 = vadd.f32 0.0, %v1481
  %v1483 = vpop.f32.mrf.mxu0
  %v1484 = vadd.f32 0.0, %v1483
  %1485 = vmatmul.bf16.gmra.mxu0 %v998
  %v1486 = vpop.f32.mrf.mxu0
  %v1487 = vadd.f32 0.0, %v1486
  %v1488 = vpop.f32.mrf.mxu0
  %v1489 = vadd.f32 0.0, %v1488
  %1490 = vmatmul.bf16.gmra.mxu0 %v1001
  %v1491 = vpop.f32.mrf.mxu0
  %v1492 = vadd.f32 0.0, %v1491
  %v1493 = vpop.f32.mrf.mxu0
  %v1494 = vadd.f32 0.0, %v1493
  %1495 = vmatmul.bf16.gmra.mxu0 %v1004
  %v1496 = vpop.f32.mrf.mxu0
  %v1497 = vadd.f32 0.0, %v1496
  %v1498 = vpop.f32.mrf.mxu0
  %v1499 = vadd.f32 0.0, %v1498
  %1500 = vmatmul.bf16.gmra.mxu0 %v1007
  %v1501 = vpop.f32.mrf.mxu0
  %v1502 = vadd.f32 0.0, %v1501
  %v1503 = vpop.f32.mrf.mxu0
  %v1504 = vadd.f32 0.0, %v1503
  %1505 = vmatmul.bf16.gmra.mxu0 %v1010
  %v1506 = vpop.f32.mrf.mxu0
  %v1507 = vadd.f32 0.0, %v1506
  %v1508 = vpop.f32.mrf.mxu0
  %v1509 = vadd.f32 0.0, %v1508
  %1510 = vdwg.mxu0
  %v1511 = vmax.f32 %v1022, %v1144
  %v1512 = vmax.f32 %v1024, %v1147
  %v1513 = vmax.f32 %v1027, %v1149
  %v1514 = vmax.f32 %v1029, %v1152
  %v1515 = vmax.f32 %v1032, %v1154
  %v1516 = vmax.f32 %v1034, %v1157
  %v1517 = vmax.f32 %v1037, %v1159
  %v1518 = vmax.f32 %v1039, %v1162
  %v1519 = vmax.f32 %v1042, %v1164
  %v1520 = vmax.f32 %v1044, %v1167
  %v1521 = vmax.f32 %v1047, %v1169
  %v1522 = vmax.f32 %v1049, %v1172
  %v1523 = vmax.f32 %v1052, %v1174
  %v1524 = vmax.f32 %v1054, %v1177
  %v1525 = vmax.f32 %v1057, %v1179
  %v1526 = vmax.f32 %v1059, %v1182
  %v1527 = vmax.f32 %v1062, %v1184
  %v1528 = vmax.f32 %v1064, %v1187
  %v1529 = vmax.f32 %v1067, %v1189
  %v1530 = vmax.f32 %v1069, %v1192
  %v1531 = vmax.f32 %v1072, %v1194
  %v1532 = vmax.f32 %v1074, %v1197
  %v1533 = vmax.f32 %v1077, %v1199
  %v1534 = vmax.f32 %v1079, %v1202
  %v1535 = vmax.f32 %v1082, %v1204
  %v1536 = vmax.f32 %v1084, %v1207
  %v1537 = vmax.f32 %v1087, %v1209
  %v1538 = vmax.f32 %v1089, %v1212
  %v1539 = vmax.f32 %v1092, %v1214
  %v1540 = vmax.f32 %v1094, %v1217
  %v1541 = vmax.f32 %v1097, %v1219
  %v1542 = vmax.f32 %v1099, %v1222
  %v1543 = vmax.f32 %v1102, %v1224
  %v1544 = vmax.f32 %v1104, %v1227
  %v1545 = vmax.f32 %v1107, %v1229
  %v1546 = vmax.f32 %v1109, %v1232
  %v1547 = vmax.f32 %v1112, %v1234
  %v1548 = vmax.f32 %v1114, %v1237
  %v1549 = vmax.f32 %v1117, %v1239
  %v1550 = vmax.f32 %v1119, %v1242
  %v1551 = vmax.f32 %v1122, %v1244
  %v1552 = vmax.f32 %v1124, %v1247
  %v1553 = vmax.f32 %v1127, %v1249
  %v1554 = vmax.f32 %v1129, %v1252
  %v1555 = vmax.f32 %v1132, %v1254
  %v1556 = vmax.f32 %v1134, %v1257
  %v1557 = vmax.f32 %v1137, %v1259
  %v1558 = vmax.f32 %v1139, %v1262
  %v1559 = vmax.f32 %v1142, %v1264
  %v1560 = vmax.f32 %v1267, %v1389
  %v1561 = vmax.f32 %v1269, %v1392
  %v1562 = vmax.f32 %v1272, %v1394
  %v1563 = vmax.f32 %v1274, %v1397
  %v1564 = vmax.f32 %v1277, %v1399
  %v1565 = vmax.f32 %v1279, %v1402
  %v1566 = vmax.f32 %v1282, %v1404
  %v1567 = vmax.f32 %v1284, %v1407
  %v1568 = vmax.f32 %v1287, %v1409
  %v1569 = vmax.f32 %v1289, %v1412
  %v1570 = vmax.f32 %v1292, %v1414
  %v1571 = vmax.f32 %v1294, %v1417
  %v1572 = vmax.f32 %v1297, %v1419
  %v1573 = vmax.f32 %v1299, %v1422
  %v1574 = vmax.f32 %v1302, %v1424
  %v1575 = vmax.f32 %v1304, %v1427
  %v1576 = vmax.f32 %v1307, %v1429
  %v1577 = vmax.f32 %v1309, %v1432
  %v1578 = vmax.f32 %v1312, %v1434
  %v1579 = vmax.f32 %v1314, %v1437
  %v1580 = vmax.f32 %v1317, %v1439
  %v1581 = vmax.f32 %v1319, %v1442
  %v1582 = vmax.f32 %v1322, %v1444
  %v1583 = vmax.f32 %v1324, %v1447
  %v1584 = vmax.f32 %v1327, %v1449
  %v1585 = vmax.f32 %v1329, %v1452
  %v1586 = vmax.f32 %v1332, %v1454
  %v1587 = vmax.f32 %v1334, %v1457
  %v1588 = vmax.f32 %v1337, %v1459
  %v1589 = vmax.f32 %v1339, %v1462
  %v1590 = vmax.f32 %v1342, %v1464
  %v1591 = vmax.f32 %v1344, %v1467
  %v1592 = vmax.f32 %v1347, %v1469
  %v1593 = vmax.f32 %v1349, %v1472
  %v1594 = vmax.f32 %v1352, %v1474
  %v1595 = vmax.f32 %v1354, %v1477
  %v1596 = vmax.f32 %v1357, %v1479
  %v1597 = vmax.f32 %v1359, %v1482
  %v1598 = vmax.f32 %v1362, %v1484
  %v1599 = vmax.f32 %v1364, %v1487
  %v1600 = vmax.f32 %v1367, %v1489
  %v1601 = vmax.f32 %v1369, %v1492
  %v1602 = vmax.f32 %v1372, %v1494
  %v1603 = vmax.f32 %v1374, %v1497
  %v1604 = vmax.f32 %v1377, %v1499
  %v1605 = vmax.f32 %v1379, %v1502
  %v1606 = vmax.f32 %v1382, %v1504
  %v1607 = vmax.f32 %v1384, %v1507
  %v1608 = vmax.f32 %v1387, %v1509
  %v1609 = vmax.f32 %v1511, %v1560
  %v1610 = vmax.f32 %v1512, %v1561
  %v1611 = vmax.f32 %v1513, %v1562
  %v1612 = vmax.f32 %v1514, %v1563
  %v1613 = vmax.f32 %v1515, %v1564
  %v1614 = vmax.f32 %v1516, %v1565
  %v1615 = vmax.f32 %v1517, %v1566
  %v1616 = vmax.f32 %v1518, %v1567
  %v1617 = vmax.f32 %v1519, %v1568
  %v1618 = vmax.f32 %v1520, %v1569
  %v1619 = vmax.f32 %v1521, %v1570
  %v1620 = vmax.f32 %v1522, %v1571
  %v1621 = vmax.f32 %v1523, %v1572
  %v1622 = vmax.f32 %v1524, %v1573
  %v1623 = vmax.f32 %v1525, %v1574
  %v1624 = vmax.f32 %v1526, %v1575
  %v1625 = vmax.f32 %v1527, %v1576
  %v1626 = vmax.f32 %v1528, %v1577
  %v1627 = vmax.f32 %v1529, %v1578
  %v1628 = vmax.f32 %v1530, %v1579
  %v1629 = vmax.f32 %v1531, %v1580
  %v1630 = vmax.f32 %v1532, %v1581
  %v1631 = vmax.f32 %v1533, %v1582
  %v1632 = vmax.f32 %v1534, %v1583
  %v1633 = vmax.f32 %v1535, %v1584
  %v1634 = vmax.f32 %v1536, %v1585
  %v1635 = vmax.f32 %v1537, %v1586
  %v1636 = vmax.f32 %v1538, %v1587
  %v1637 = vmax.f32 %v1539, %v1588
  %v1638 = vmax.f32 %v1540, %v1589
  %v1639 = vmax.f32 %v1541, %v1590
  %v1640 = vmax.f32 %v1542, %v1591
  %v1641 = vmax.f32 %v1543, %v1592
  %v1642 = vmax.f32 %v1544, %v1593
  %v1643 = vmax.f32 %v1545, %v1594
  %v1644 = vmax.f32 %v1546, %v1595
  %v1645 = vmax.f32 %v1547, %v1596
  %v1646 = vmax.f32 %v1548, %v1597
  %v1647 = vmax.f32 %v1549, %v1598
  %v1648 = vmax.f32 %v1550, %v1599
  %v1649 = vmax.f32 %v1551, %v1600
  %v1650 = vmax.f32 %v1552, %v1601
  %v1651 = vmax.f32 %v1553, %v1602
  %v1652 = vmax.f32 %v1554, %v1603
  %v1653 = vmax.f32 %v1555, %v1604
  %v1654 = vmax.f32 %v1556, %v1605
  %v1655 = vmax.f32 %v1557, %v1606
  %v1656 = vmax.f32 %v1558, %v1607
  %v1657 = vmax.f32 %v1559, %v1608
  %v1658 = vld [vmem:[%s2] sm:$0x1]
  %v1660 = vperm.slane %v1658, 0
  %v1662 = vadd.f32 %v1609, %v1660
  %v1663 = vadd.f32 %v1610, %v1660
  %v1664 = vadd.f32 %v1611, %v1660
  %v1665 = vadd.f32 %v1612, %v1660
  %v1666 = vadd.f32 %v1613, %v1660
  %v1667 = vadd.f32 %v1614, %v1660
  %v1668 = vadd.f32 %v1615, %v1660
  %v1669 = vadd.f32 %v1616, %v1660
  %v1670 = vadd.f32 %v1617, %v1660
  %v1671 = vadd.f32 %v1618, %v1660
  %v1672 = vadd.f32 %v1619, %v1660
  %v1673 = vadd.f32 %v1620, %v1660
  %v1674 = vadd.f32 %v1621, %v1660
  %v1675 = vadd.f32 %v1622, %v1660
  %v1676 = vadd.f32 %v1623, %v1660
  %v1677 = vadd.f32 %v1624, %v1660
  %v1678 = vadd.f32 %v1625, %v1660
  %v1679 = vadd.f32 %v1626, %v1660
  %v1680 = vadd.f32 %v1627, %v1660
  %v1681 = vadd.f32 %v1628, %v1660
  %v1682 = vadd.f32 %v1629, %v1660
  %v1683 = vadd.f32 %v1630, %v1660
  %v1684 = vadd.f32 %v1631, %v1660
  %v1685 = vadd.f32 %v1632, %v1660
  %v1686 = vadd.f32 %v1633, %v1660
  %v1687 = vadd.f32 %v1634, %v1660
  %v1688 = vadd.f32 %v1635, %v1660
  %v1689 = vadd.f32 %v1636, %v1660
  %v1690 = vadd.f32 %v1637, %v1660
  %v1691 = vadd.f32 %v1638, %v1660
  %v1692 = vadd.f32 %v1639, %v1660
  %v1693 = vadd.f32 %v1640, %v1660
  %v1694 = vadd.f32 %v1641, %v1660
  %v1695 = vadd.f32 %v1642, %v1660
  %v1696 = vadd.f32 %v1643, %v1660
  %v1697 = vadd.f32 %v1644, %v1660
  %v1698 = vadd.f32 %v1645, %v1660
  %v1699 = vadd.f32 %v1646, %v1660
  %v1700 = vadd.f32 %v1647, %v1660
  %v1701 = vadd.f32 %v1648, %v1660
  %v1702 = vadd.f32 %v1649, %v1660
  %v1703 = vadd.f32 %v1650, %v1660
  %v1704 = vadd.f32 %v1651, %v1660
  %v1705 = vadd.f32 %v1652, %v1660
  %v1706 = vadd.f32 %v1653, %v1660
  %v1707 = vadd.f32 %v1654, %v1660
  %v1708 = vadd.f32 %v1655, %v1660
  %v1709 = vadd.f32 %v1656, %v1660
  %v1710 = vadd.f32 %v1657, %v1660
  %v1711 = vmax.f32 %v1662, 0.0
  %v1712 = vmax.f32 %v1663, 0.0
  %v1713 = vmax.f32 %v1664, 0.0
  %v1714 = vmax.f32 %v1665, 0.0
  %v1715 = vmax.f32 %v1666, 0.0
  %v1716 = vmax.f32 %v1667, 0.0
  %v1717 = vmax.f32 %v1668, 0.0
  %v1718 = vmax.f32 %v1669, 0.0
  %v1719 = vmax.f32 %v1670, 0.0
  %v1720 = vmax.f32 %v1671, 0.0
  %v1721 = vmax.f32 %v1672, 0.0
  %v1722 = vmax.f32 %v1673, 0.0
  %v1723 = vmax.f32 %v1674, 0.0
  %v1724 = vmax.f32 %v1675, 0.0
  %v1725 = vmax.f32 %v1676, 0.0
  %v1726 = vmax.f32 %v1677, 0.0
  %v1727 = vmax.f32 %v1678, 0.0
  %v1728 = vmax.f32 %v1679, 0.0
  %v1729 = vmax.f32 %v1680, 0.0
  %v1730 = vmax.f32 %v1681, 0.0
  %v1731 = vmax.f32 %v1682, 0.0
  %v1732 = vmax.f32 %v1683, 0.0
  %v1733 = vmax.f32 %v1684, 0.0
  %v1734 = vmax.f32 %v1685, 0.0
  %v1735 = vmax.f32 %v1686, 0.0
  %v1736 = vmax.f32 %v1687, 0.0
  %v1737 = vmax.f32 %v1688, 0.0
  %v1738 = vmax.f32 %v1689, 0.0
  %v1739 = vmax.f32 %v1690, 0.0
  %v1740 = vmax.f32 %v1691, 0.0
  %v1741 = vmax.f32 %v1692, 0.0
  %v1742 = vmax.f32 %v1693, 0.0
  %v1743 = vmax.f32 %v1694, 0.0
  %v1744 = vmax.f32 %v1695, 0.0
  %v1745 = vmax.f32 %v1696, 0.0
  %v1746 = vmax.f32 %v1697, 0.0
  %v1747 = vmax.f32 %v1698, 0.0
  %v1748 = vmax.f32 %v1699, 0.0
  %v1749 = vmax.f32 %v1700, 0.0
  %v1750 = vmax.f32 %v1701, 0.0
  %v1751 = vmax.f32 %v1702, 0.0
  %v1752 = vmax.f32 %v1703, 0.0
  %v1753 = vmax.f32 %v1704, 0.0
  %v1754 = vmax.f32 %v1705, 0.0
  %v1755 = vmax.f32 %v1706, 0.0
  %v1756 = vmax.f32 %v1707, 0.0
  %v1757 = vmax.f32 %v1708, 0.0
  %v1758 = vmax.f32 %v1709, 0.0
  %v1759 = vmax.f32 %v1710, 0.0
  %v1760 = vpack.c.bf16 %v1711, %v1711
  %v1761 = vpack.c.bf16 %v1712, %v1712
  %v1762 = vpack.c.bf16 %v1713, %v1713
  %v1763 = vpack.c.bf16 %v1714, %v1714
  %v1764 = vpack.c.bf16 %v1715, %v1715
  %v1765 = vpack.c.bf16 %v1716, %v1716
  %v1766 = vpack.c.bf16 %v1717, %v1717
  %v1767 = vpack.c.bf16 %v1718, %v1718
  %v1768 = vpack.c.bf16 %v1719, %v1719
  %v1769 = vpack.c.bf16 %v1720, %v1720
  %v1770 = vpack.c.bf16 %v1721, %v1721
  %v1771 = vpack.c.bf16 %v1722, %v1722
  %v1772 = vpack.c.bf16 %v1723, %v1723
  %v1773 = vpack.c.bf16 %v1724, %v1724
  %v1774 = vpack.c.bf16 %v1725, %v1725
  %v1775 = vpack.c.bf16 %v1726, %v1726
  %v1776 = vpack.c.bf16 %v1727, %v1727
  %v1777 = vpack.c.bf16 %v1728, %v1728
  %v1778 = vpack.c.bf16 %v1729, %v1729
  %v1779 = vpack.c.bf16 %v1730, %v1730
  %v1780 = vpack.c.bf16 %v1731, %v1731
  %v1781 = vpack.c.bf16 %v1732, %v1732
  %v1782 = vpack.c.bf16 %v1733, %v1733
  %v1783 = vpack.c.bf16 %v1734, %v1734
  %v1784 = vpack.c.bf16 %v1735, %v1735
  %v1785 = vpack.c.bf16 %v1736, %v1736
  %v1786 = vpack.c.bf16 %v1737, %v1737
  %v1787 = vpack.c.bf16 %v1738, %v1738
  %v1788 = vpack.c.bf16 %v1739, %v1739
  %v1789 = vpack.c.bf16 %v1740, %v1740
  %v1790 = vpack.c.bf16 %v1741, %v1741
  %v1791 = vpack.c.bf16 %v1742, %v1742
  %v1792 = vpack.c.bf16 %v1743, %v1743
  %v1793 = vpack.c.bf16 %v1744, %v1744
  %v1794 = vpack.c.bf16 %v1745, %v1745
  %v1795 = vpack.c.bf16 %v1746, %v1746
  %v1796 = vpack.c.bf16 %v1747, %v1747
  %v1797 = vpack.c.bf16 %v1748, %v1748
  %v1798 = vpack.c.bf16 %v1749, %v1749
  %v1799 = vpack.c.bf16 %v1750, %v1750
  %v1800 = vpack.c.bf16 %v1751, %v1751
  %v1801 = vpack.c.bf16 %v1752, %v1752
  %v1802 = vpack.c.bf16 %v1753, %v1753
  %v1803 = vpack.c.bf16 %v1754, %v1754
  %v1804 = vpack.c.bf16 %v1755, %v1755
  %v1805 = vpack.c.bf16 %v1756, %v1756
  %v1806 = vpack.c.bf16 %v1757, %v1757
  %v1807 = vpack.c.bf16 %v1758, %v1758
  %v1808 = vpack.c.bf16 %v1759, %v1759
  %vm1809 = vcmask 125952
  %1810 = vst.msk [vmem:[%s3] sm:$0xf] %vm1809, %v1760
  %1811 = vst.msk [vmem:[%s3 + $0x4] sm:$0xf] %vm1809, %v1761
  %1812 = vst.msk [vmem:[%s3 + $0x8] sm:$0xf] %vm1809, %v1762
  %1813 = vst.msk [vmem:[%s3 + $0xc] sm:$0xf] %vm1809, %v1763
  %1814 = vst.msk [vmem:[%s3 + $0x10] sm:$0xf] %vm1809, %v1764
  %1815 = vst.msk [vmem:[%s3 + $0x14] sm:$0xf] %vm1809, %v1765
  %1816 = vst.msk [vmem:[%s3 + $0x18] sm:$0xf] %vm1809, %v1766
  %1817 = vst.msk [vmem:[%s3 + $0x1c] sm:$0xf] %vm1809, %v1767
  %1818 = vst.msk [vmem:[%s3 + $0x20] sm:$0xf] %vm1809, %v1768
  %1819 = vst.msk [vmem:[%s3 + $0x24] sm:$0xf] %vm1809, %v1769
  %1820 = vst.msk [vmem:[%s3 + $0x28] sm:$0xf] %vm1809, %v1770
  %1821 = vst.msk [vmem:[%s3 + $0x2c] sm:$0xf] %vm1809, %v1771
  %1822 = vst.msk [vmem:[%s3 + $0x30] sm:$0xf] %vm1809, %v1772
  %1823 = vst.msk [vmem:[%s3 + $0x34] sm:$0xf] %vm1809, %v1773
  %1824 = vst.msk [vmem:[%s3 + $0x38] sm:$0xf] %vm1809, %v1774
  %1825 = vst.msk [vmem:[%s3 + $0x3c] sm:$0xf] %vm1809, %v1775
  %1826 = vst.msk [vmem:[%s3 + $0x40] sm:$0xf] %vm1809, %v1776
  %1827 = vst.msk [vmem:[%s3 + $0x44] sm:$0xf] %vm1809, %v1777
  %1828 = vst.msk [vmem:[%s3 + $0x48] sm:$0xf] %vm1809, %v1778
  %1829 = vst.msk [vmem:[%s3 + $0x4c] sm:$0xf] %vm1809, %v1779
  %1830 = vst.msk [vmem:[%s3 + $0x50] sm:$0xf] %vm1809, %v1780
  %1831 = vst.msk [vmem:[%s3 + $0x54] sm:$0xf] %vm1809, %v1781
  %1832 = vst.msk [vmem:[%s3 + $0x58] sm:$0xf] %vm1809, %v1782
  %1833 = vst.msk [vmem:[%s3 + $0x5c] sm:$0xf] %vm1809, %v1783
  %1834 = vst.msk [vmem:[%s3 + $0x60] sm:$0xf] %vm1809, %v1784
  %1835 = vst.msk [vmem:[%s3 + $0x64] sm:$0xf] %vm1809, %v1785
  %1836 = vst.msk [vmem:[%s3 + $0x68] sm:$0xf] %vm1809, %v1786
  %1837 = vst.msk [vmem:[%s3 + $0x6c] sm:$0xf] %vm1809, %v1787
  %1838 = vst.msk [vmem:[%s3 + $0x70] sm:$0xf] %vm1809, %v1788
  %1839 = vst.msk [vmem:[%s3 + $0x74] sm:$0xf] %vm1809, %v1789
  %1840 = vst.msk [vmem:[%s3 + $0x78] sm:$0xf] %vm1809, %v1790
  %1841 = vst.msk [vmem:[%s3 + $0x7c] sm:$0xf] %vm1809, %v1791
  %1842 = vst.msk [vmem:[%s3 + $0x80] sm:$0xf] %vm1809, %v1792
  %1843 = vst.msk [vmem:[%s3 + $0x84] sm:$0xf] %vm1809, %v1793
  %1844 = vst.msk [vmem:[%s3 + $0x88] sm:$0xf] %vm1809, %v1794
  %1845 = vst.msk [vmem:[%s3 + $0x8c] sm:$0xf] %vm1809, %v1795
  %1846 = vst.msk [vmem:[%s3 + $0x90] sm:$0xf] %vm1809, %v1796
  %1847 = vst.msk [vmem:[%s3 + $0x94] sm:$0xf] %vm1809, %v1797
  %1848 = vst.msk [vmem:[%s3 + $0x98] sm:$0xf] %vm1809, %v1798
  %1849 = vst.msk [vmem:[%s3 + $0x9c] sm:$0xf] %vm1809, %v1799
  %1850 = vst.msk [vmem:[%s3 + $0xa0] sm:$0xf] %vm1809, %v1800
  %1851 = vst.msk [vmem:[%s3 + $0xa4] sm:$0xf] %vm1809, %v1801
  %1852 = vst.msk [vmem:[%s3 + $0xa8] sm:$0xf] %vm1809, %v1802
  %1853 = vst.msk [vmem:[%s3 + $0xac] sm:$0xf] %vm1809, %v1803
  %1854 = vst.msk [vmem:[%s3 + $0xb0] sm:$0xf] %vm1809, %v1804
  %1855 = vst.msk [vmem:[%s3 + $0xb4] sm:$0xf] %vm1809, %v1805
  %1856 = vst.msk [vmem:[%s3 + $0xb8] sm:$0xf] %vm1809, %v1806
  %1857 = vst.msk [vmem:[%s3 + $0xbc] sm:$0xf] %vm1809, %v1807
  %1858 = vst.msk [vmem:[%s3 + $0xc0] sm:$0xf] %vm1809, %v1808
  // Predicated region
  $region14: #{net_forward.3} parent=0 // pred_check
    _
  $region15: #{net_forward.3} parent=0 // pred_check_branch
    %1860 = sbr.rel (0) target = $region17
  $region16: #{net_forward.3} parent=0 // pred_region
    _
  $region17: #{net_forward.3} parent=0 // pred_fallthru
    _
  // Predicated region
  $region18: #{net_forward.3} parent=0 // pred_check
    _
  $region19: #{net_forward.3} parent=0 // pred_check_branch
    %1862 = sbr.rel (0) target = $region21
  $region20: #{net_forward.3} parent=0 // pred_region
    _
  $region21: #{net_forward.3} parent=0 // pred_fallthru
    _

// kernel: net_forward.4
$region0: #{net_forward.4}
  #allocation0 [shape = 'u32[]', space=smem, size = 0x4, offset = 0x4, fixed_abs, tag = 'smem constant byte address 0x4 - core index']
  #allocation1 [shape = 'u32[72,128]{1,0:T(1,128)}', space=vmem, size = 0x9000, scoped, tag = 'internal scratch']
  %s0 = inlined_call_operand.vmem [shape: bf16[4,72,144], index: 0, kind: input, shape index: {}]
  %s1 = inlined_call_operand.vmem [shape: bf16[144,64], index: 1, kind: input, shape index: {}]
  %s2 = inlined_call_operand.vmem [shape: f32[1,64], index: 2, kind: input, shape index: {}]
  %s3 = inlined_call_operand.vmem [shape: bf16[72,64], index: 3, kind: output, shape index: {}]
  %s4 = sld [smem:[#allocation0]]
  $region22: #{net_forward.4} parent=0
    _
  %s6 = ssub.s32 1, %s4
  %s7 = scalar_select 0, %s6, %s4
  // Predicated region
  $region2: #{net_forward.4} parent=0 // pred_check
    _
  $region3: #{net_forward.4} parent=0 // pred_check_branch
    %9 = sbr.rel (0) target = $region5
  $region4: #{net_forward.4} parent=0 // pred_region
    _
  $region5: #{net_forward.4} parent=0 // pred_fallthru
    _
  // Predicated region
  $region6: #{net_forward.4} parent=0 // pred_check
    _
  $region7: #{net_forward.4} parent=0 // pred_check_branch
    %11 = sbr.rel (0) target = $region9
  $region8: #{net_forward.4} parent=0 // pred_region
    _
  $region9: #{net_forward.4} parent=0 // pred_fallthru
    _
  // Predicated region
  $region10: #{net_forward.4} parent=0 // pred_check
    _
  $region11: #{net_forward.4} parent=0 // pred_check_branch
    %13 = sbr.rel (0) target = $region13
  $region12: #{net_forward.4} parent=0 // pred_region
    _
  $region13: #{net_forward.4} parent=0 // pred_fallthru
    _
  %v15 = vld [vmem:[%s0] sm:$0xff]
  %v16 = vld [vmem:[%s0 + $0x8] sm:$0xff]
  %v17 = vld [vmem:[%s0 + $0x10] sm:$0xff]
  %v18 = vld [vmem:[%s0 + $0x18] sm:$0xff]
  %v19 = vld [vmem:[%s0 + $0x20] sm:$0xff]
  %v20 = vld [vmem:[%s0 + $0x28] sm:$0xff]
  %v21 = vld [vmem:[%s0 + $0x30] sm:$0xff]
  %v22 = vld [vmem:[%s0 + $0x38] sm:$0xff]
  %v23 = vld [vmem:[%s0 + $0x40] sm:$0xff]
  %v24 = vld [vmem:[%s0 + $0x48] sm:$0xff]
  %v25 = vld [vmem:[%s0 + $0x50] sm:$0xff]
  %v26 = vld [vmem:[%s0 + $0x58] sm:$0xff]
  %v27 = vld [vmem:[%s0 + $0x60] sm:$0xff]
  %v28 = vld [vmem:[%s0 + $0x68] sm:$0xff]
  %v29 = vld [vmem:[%s0 + $0x70] sm:$0xff]
  %v30 = vld [vmem:[%s0 + $0x78] sm:$0xff]
  %v31 = vld [vmem:[%s0 + $0x80] sm:$0xff]
  %v32 = vld [vmem:[%s0 + $0x88] sm:$0xff]
  %v33 = vld [vmem:[%s0 + $0x90] sm:$0xff]
  %v34 = vld [vmem:[%s0 + $0x98] sm:$0xff]
  %v35 = vld [vmem:[%s0 + $0xa0] sm:$0xff]
  %v36 = vld [vmem:[%s0 + $0xa8] sm:$0xff]
  %v37 = vld [vmem:[%s0 + $0xb0] sm:$0xff]
  %v38 = vld [vmem:[%s0 + $0xb8] sm:$0xff]
  %v39 = vld [vmem:[%s0 + $0xc0] sm:$0xff]
  %v40 = vld [vmem:[%s0 + $0xc8] sm:$0xff]
  %v41 = vld [vmem:[%s0 + $0xd0] sm:$0xff]
  %v42 = vld [vmem:[%s0 + $0xd8] sm:$0xff]
  %v43 = vld [vmem:[%s0 + $0xe0] sm:$0xff]
  %v44 = vld [vmem:[%s0 + $0xe8] sm:$0xff]
  %v45 = vld [vmem:[%s0 + $0xf0] sm:$0xff]
  %v46 = vld [vmem:[%s0 + $0xf8] sm:$0xff]
  %v47 = vld [vmem:[%s0 + $0x100] sm:$0xff]
  %v48 = vld [vmem:[%s0 + $0x108] sm:$0xff]
  %v49 = vld [vmem:[%s0 + $0x110] sm:$0xff]
  %v50 = vld [vmem:[%s0 + $0x118] sm:$0xff]
  %v51 = vld [vmem:[%s1] sm:$0xf]
  %v52 = vld [vmem:[%s1 + $0x4] sm:$0xf]
  %v53 = vld [vmem:[%s1 + $0x8] sm:$0xf]
  %v54 = vld [vmem:[%s1 + $0xc] sm:$0xf]
  %v55 = vld [vmem:[%s1 + $0x10] sm:$0xf]
  %v56 = vld [vmem:[%s1 + $0x14] sm:$0xf]
  %v57 = vld [vmem:[%s1 + $0x18] sm:$0xf]
  %v58 = vld [vmem:[%s1 + $0x1c] sm:$0xf]
  %v59 = vld [vmem:[%s1 + $0x20] sm:$0xf]
  %v60 = vld [vmem:[%s1 + $0x24] sm:$0xf]
  %v61 = vld [vmem:[%s1 + $0x28] sm:$0xf]
  %v62 = vld [vmem:[%s1 + $0x2c] sm:$0xf]
  %v63 = vld [vmem:[%s1 + $0x30] sm:$0xf]
  %v64 = vld [vmem:[%s1 + $0x34] sm:$0xf]
  %v65 = vld [vmem:[%s1 + $0x38] sm:$0xf]
  %v66 = vld [vmem:[%s1 + $0x3c] sm:$0xf]
  %v67 = vld [vmem:[%s1 + $0x40] sm:$0xf]
  %v68 = vld [vmem:[%s1 + $0x44] sm:$0xf]
  %v105 = vunpack.c.l.b16 %v15
  %v106 = vunpack.c.h.b16 %v15
  %v107 = vunpack.c.l.b16 %v16
  %v108 = vunpack.c.h.b16 %v16
  %v109 = vunpack.c.l.b16 %v17
  %v110 = vunpack.c.h.b16 %v17
  %v111 = vunpack.c.l.b16 %v18
  %v112 = vunpack.c.h.b16 %v18
  %v113 = vunpack.c.l.b16 %v19
  %v114 = vunpack.c.h.b16 %v19
  %v115 = vunpack.c.l.b16 %v20
  %v116 = vunpack.c.h.b16 %v20
  %v117 = vunpack.c.l.b16 %v21
  %v118 = vunpack.c.h.b16 %v21
  %v119 = vunpack.c.l.b16 %v22
  %v120 = vunpack.c.h.b16 %v22
  %v121 = vunpack.c.l.b16 %v23
  %v122 = vunpack.c.h.b16 %v23
  %v123 = vunpack.c.l.b16 %v24
  %v124 = vunpack.c.h.b16 %v24
  %v125 = vunpack.c.l.b16 %v25
  %v126 = vunpack.c.h.b16 %v25
  %v127 = vunpack.c.l.b16 %v26
  %v128 = vunpack.c.h.b16 %v26
  %v129 = vunpack.c.l.b16 %v27
  %v130 = vunpack.c.h.b16 %v27
  %v131 = vunpack.c.l.b16 %v28
  %v132 = vunpack.c.h.b16 %v28
  %v133 = vunpack.c.l.b16 %v29
  %v134 = vunpack.c.h.b16 %v29
  %v135 = vunpack.c.l.b16 %v30
  %v136 = vunpack.c.h.b16 %v30
  %v137 = vunpack.c.l.b16 %v31
  %v138 = vunpack.c.h.b16 %v31
  %v139 = vunpack.c.l.b16 %v32
  %v140 = vunpack.c.h.b16 %v32
  %v141 = vunpack.c.l.b16 %v33
  %v142 = vunpack.c.h.b16 %v33
  %v143 = vunpack.c.l.b16 %v34
  %v144 = vunpack.c.h.b16 %v34
  %v145 = vunpack.c.l.b16 %v35
  %v146 = vunpack.c.h.b16 %v35
  %v147 = vunpack.c.l.b16 %v36
  %v148 = vunpack.c.h.b16 %v36
  %v149 = vunpack.c.l.b16 %v37
  %v150 = vunpack.c.h.b16 %v37
  %v151 = vunpack.c.l.b16 %v38
  %v152 = vunpack.c.h.b16 %v38
  %v153 = vunpack.c.l.b16 %v39
  %v154 = vunpack.c.h.b16 %v39
  %v155 = vunpack.c.l.b16 %v40
  %v156 = vunpack.c.h.b16 %v40
  %v157 = vunpack.c.l.b16 %v41
  %v158 = vunpack.c.h.b16 %v41
  %v159 = vunpack.c.l.b16 %v42
  %v160 = vunpack.c.h.b16 %v42
  %v161 = vunpack.c.l.b16 %v43
  %v162 = vunpack.c.h.b16 %v43
  %v163 = vunpack.c.l.b16 %v44
  %v164 = vunpack.c.h.b16 %v44
  %v165 = vunpack.c.l.b16 %v45
  %v166 = vunpack.c.h.b16 %v45
  %v167 = vunpack.c.l.b16 %v46
  %v168 = vunpack.c.h.b16 %v46
  %v169 = vunpack.c.l.b16 %v47
  %v170 = vunpack.c.h.b16 %v47
  %v171 = vunpack.c.l.b16 %v48
  %v172 = vunpack.c.h.b16 %v48
  %v173 = vunpack.c.l.b16 %v49
  %v174 = vunpack.c.h.b16 %v49
  %v175 = vunpack.c.l.b16 %v50
  %v176 = vunpack.c.h.b16 %v50
  %v177 = vpack.c.b16 %v107, %v105
  %v178 = vpack.c.b16 %v108, %v106
  %v179 = vpack.c.b16 %v111, %v109
  %v180 = vpack.c.b16 %v112, %v110
  %v181 = vpack.c.b16 %v115, %v113
  %v182 = vpack.c.b16 %v116, %v114
  %v183 = vpack.c.b16 %v119, %v117
  %v184 = vpack.c.b16 %v120, %v118
  %v185 = vpack.c.b16 %v123, %v121
  %v186 = vpack.c.b16 %v124, %v122
  %v187 = vpack.c.b16 %v127, %v125
  %v188 = vpack.c.b16 %v128, %v126
  %v189 = vpack.c.b16 %v131, %v129
  %v190 = vpack.c.b16 %v132, %v130
  %v191 = vpack.c.b16 %v135, %v133
  %v192 = vpack.c.b16 %v136, %v134
  %v193 = vpack.c.b16 %v139, %v137
  %v194 = vpack.c.b16 %v140, %v138
  %v195 = vpack.c.b16 %v143, %v141
  %v196 = vpack.c.b16 %v144, %v142
  %v197 = vpack.c.b16 %v147, %v145
  %v198 = vpack.c.b16 %v148, %v146
  %v199 = vpack.c.b16 %v151, %v149
  %v200 = vpack.c.b16 %v152, %v150
  %v201 = vpack.c.b16 %v155, %v153
  %v202 = vpack.c.b16 %v156, %v154
  %v203 = vpack.c.b16 %v159, %v157
  %v204 = vpack.c.b16 %v160, %v158
  %v205 = vpack.c.b16 %v163, %v161
  %v206 = vpack.c.b16 %v164, %v162
  %v207 = vpack.c.b16 %v167, %v165
  %v208 = vpack.c.b16 %v168, %v166
  %v209 = vpack.c.b16 %v171, %v169
  %v210 = vpack.c.b16 %v172, %v170
  %v211 = vpack.c.b16 %v175, %v173
  %v212 = vpack.c.b16 %v176, %v174
  %v249 = vunpack.c.l.b16 %v51
  %v250 = vunpack.c.l.b16 %v52
  %v251 = vunpack.c.l.b16 %v53
  %v252 = vunpack.c.l.b16 %v54
  %v253 = vunpack.c.l.b16 %v55
  %v254 = vunpack.c.l.b16 %v56
  %v255 = vunpack.c.l.b16 %v57
  %v256 = vunpack.c.l.b16 %v58
  %v257 = vunpack.c.l.b16 %v59
  %v258 = vunpack.c.l.b16 %v60
  %v259 = vunpack.c.l.b16 %v61
  %v260 = vunpack.c.l.b16 %v62
  %v261 = vunpack.c.l.b16 %v63
  %v262 = vunpack.c.l.b16 %v64
  %v263 = vunpack.c.l.b16 %v65
  %v264 = vunpack.c.l.b16 %v66
  %v265 = vunpack.c.l.b16 %v67
  %v266 = vunpack.c.l.b16 %v68
  %v267 = vpack.c.b16 %v250, %v249
  %v268 = vpack.c.b16 %v252, %v251
  %v269 = vpack.c.b16 %v254, %v253
  %v270 = vpack.c.b16 %v256, %v255
  %v271 = vpack.c.b16 %v258, %v257
  %v272 = vpack.c.b16 %v260, %v259
  %v273 = vpack.c.b16 %v262, %v261
  %v274 = vpack.c.b16 %v264, %v263
  %v275 = vpack.c.b16 %v266, %v265
  %vm285 = vcmask 130048
  %v287 = vsel %vm285, %v178, 0
  %v290 = vsel %vm285, %v180, 0
  %v293 = vsel %vm285, %v182, 0
  %v296 = vsel %vm285, %v184, 0
  %v299 = vsel %vm285, %v186, 0
  %v302 = vsel %vm285, %v188, 0
  %v305 = vsel %vm285, %v190, 0
  %v308 = vsel %vm285, %v192, 0
  %v311 = vsel %vm285, %v194, 0
  %v314 = vsel %vm285, %v196, 0
  %v317 = vsel %vm285, %v198, 0
  %v320 = vsel %vm285, %v200, 0
  %v323 = vsel %vm285, %v202, 0
  %v326 = vsel %vm285, %v204, 0
  %v329 = vsel %vm285, %v206, 0
  %v332 = vsel %vm285, %v208, 0
  %v335 = vsel %vm285, %v210, 0
  %v338 = vsel %vm285, %v212, 0
  %340 = vmatpush.bf16.msra.mxu0 %v274
  %341 = vmatpush.bf16.msra.mxu0 %v273
  %342 = vmatpush.bf16.msra.mxu0 %v272
  %343 = vmatpush.bf16.msra.mxu0 %v271
  %344 = vmatpush.bf16.msra.mxu0 %v270
  %345 = vmatpush.bf16.msra.mxu0 %v269
  %346 = vmatpush.bf16.msra.mxu0 %v268
  %347 = vmatpush.bf16.msra.mxu0 %v267
  %348 = vmatmul.bf16.gmra.mxu0 %v177
  %v349 = vpop.f32.mrf.mxu0
  %v350 = vadd.f32 0.0, %v349
  %v351 = vpop.f32.mrf.mxu0
  %v352 = vadd.f32 0.0, %v351
  %353 = vmatmul.bf16.gmra.mxu0 %v179
  %v354 = vpop.f32.mrf.mxu0
  %v355 = vadd.f32 0.0, %v354
  %v356 = vpop.f32.mrf.mxu0
  %v357 = vadd.f32 0.0, %v356
  %358 = vmatmul.bf16.gmra.mxu0 %v181
  %v359 = vpop.f32.mrf.mxu0
  %v360 = vadd.f32 0.0, %v359
  %v361 = vpop.f32.mrf.mxu0
  %v362 = vadd.f32 0.0, %v361
  %363 = vmatmul.bf16.gmra.mxu0 %v183
  %v364 = vpop.f32.mrf.mxu0
  %v365 = vadd.f32 0.0, %v364
  %v366 = vpop.f32.mrf.mxu0
  %v367 = vadd.f32 0.0, %v366
  %368 = vmatmul.bf16.gmra.mxu0 %v185
  %v369 = vpop.f32.mrf.mxu0
  %v370 = vadd.f32 0.0, %v369
  %v371 = vpop.f32.mrf.mxu0
  %v372 = vadd.f32 0.0, %v371
  %373 = vmatmul.bf16.gmra.mxu0 %v187
  %v374 = vpop.f32.mrf.mxu0
  %v375 = vadd.f32 0.0, %v374
  %v376 = vpop.f32.mrf.mxu0
  %v377 = vadd.f32 0.0, %v376
  %378 = vmatmul.bf16.gmra.mxu0 %v189
  %v379 = vpop.f32.mrf.mxu0
  %v380 = vadd.f32 0.0, %v379
  %v381 = vpop.f32.mrf.mxu0
  %v382 = vadd.f32 0.0, %v381
  %383 = vmatmul.bf16.gmra.mxu0 %v191
  %v384 = vpop.f32.mrf.mxu0
  %v385 = vadd.f32 0.0, %v384
  %v386 = vpop.f32.mrf.mxu0
  %v387 = vadd.f32 0.0, %v386
  %388 = vmatmul.bf16.gmra.mxu0 %v193
  %v389 = vpop.f32.mrf.mxu0
  %v390 = vadd.f32 0.0, %v389
  %v391 = vpop.f32.mrf.mxu0
  %v392 = vadd.f32 0.0, %v391
  %393 = vmatmul.bf16.gmra.mxu0 %v195
  %v394 = vpop.f32.mrf.mxu0
  %v395 = vadd.f32 0.0, %v394
  %v396 = vpop.f32.mrf.mxu0
  %v397 = vadd.f32 0.0, %v396
  %398 = vmatmul.bf16.gmra.mxu0 %v197
  %v399 = vpop.f32.mrf.mxu0
  %v400 = vadd.f32 0.0, %v399
  %v401 = vpop.f32.mrf.mxu0
  %v402 = vadd.f32 0.0, %v401
  %403 = vmatmul.bf16.gmra.mxu0 %v199
  %v404 = vpop.f32.mrf.mxu0
  %v405 = vadd.f32 0.0, %v404
  %v406 = vpop.f32.mrf.mxu0
  %v407 = vadd.f32 0.0, %v406
  %408 = vmatmul.bf16.gmra.mxu0 %v201
  %v409 = vpop.f32.mrf.mxu0
  %v410 = vadd.f32 0.0, %v409
  %v411 = vpop.f32.mrf.mxu0
  %v412 = vadd.f32 0.0, %v411
  %413 = vmatmul.bf16.gmra.mxu0 %v203
  %v414 = vpop.f32.mrf.mxu0
  %v415 = vadd.f32 0.0, %v414
  %v416 = vpop.f32.mrf.mxu0
  %v417 = vadd.f32 0.0, %v416
  %418 = vmatmul.bf16.gmra.mxu0 %v205
  %v419 = vpop.f32.mrf.mxu0
  %v420 = vadd.f32 0.0, %v419
  %v421 = vpop.f32.mrf.mxu0
  %v422 = vadd.f32 0.0, %v421
  %423 = vmatmul.bf16.gmra.mxu0 %v207
  %v424 = vpop.f32.mrf.mxu0
  %v425 = vadd.f32 0.0, %v424
  %v426 = vpop.f32.mrf.mxu0
  %v427 = vadd.f32 0.0, %v426
  %428 = vmatmul.bf16.gmra.mxu0 %v209
  %v429 = vpop.f32.mrf.mxu0
  %v430 = vadd.f32 0.0, %v429
  %v431 = vpop.f32.mrf.mxu0
  %v432 = vadd.f32 0.0, %v431
  %433 = vmatmul.bf16.gmra.mxu0 %v211
  %v434 = vpop.f32.mrf.mxu0
  %v435 = vadd.f32 0.0, %v434
  %v436 = vpop.f32.mrf.mxu0
  %v437 = vadd.f32 0.0, %v436
  %438 = vdwg.mxu0
  %439 = vmatpush.bf16.msra.mxu0 0
  %440 = vmatpush.bf16.msra.mxu0 0
  %441 = vmatpush.bf16.msra.mxu0 0
  %442 = vmatpush.bf16.msra.mxu0 0
  %443 = vmatpush.bf16.msra.mxu0 0
  %444 = vmatpush.bf16.msra.mxu0 0
  %445 = vmatpush.bf16.msra.mxu0 0
  %446 = vmatpush.bf16.msra.mxu0 %v275
  %447 = vmatmul.bf16.gmra.mxu0 %v287
  %v448 = vpop.f32.mrf.mxu0
  %v449 = vadd.f32 %v350, %v448
  %v450 = vpop.f32.mrf.mxu0
  %v451 = vadd.f32 %v352, %v450
  %452 = vmatmul.bf16.gmra.mxu0 %v290
  %v453 = vpop.f32.mrf.mxu0
  %v454 = vadd.f32 %v355, %v453
  %v455 = vpop.f32.mrf.mxu0
  %v456 = vadd.f32 %v357, %v455
  %457 = vmatmul.bf16.gmra.mxu0 %v293
  %v458 = vpop.f32.mrf.mxu0
  %v459 = vadd.f32 %v360, %v458
  %v460 = vpop.f32.mrf.mxu0
  %v461 = vadd.f32 %v362, %v460
  %462 = vmatmul.bf16.gmra.mxu0 %v296
  %v463 = vpop.f32.mrf.mxu0
  %v464 = vadd.f32 %v365, %v463
  %v465 = vpop.f32.mrf.mxu0
  %v466 = vadd.f32 %v367, %v465
  %467 = vmatmul.bf16.gmra.mxu0 %v299
  %v468 = vpop.f32.mrf.mxu0
  %v469 = vadd.f32 %v370, %v468
  %v470 = vpop.f32.mrf.mxu0
  %v471 = vadd.f32 %v372, %v470
  %472 = vmatmul.bf16.gmra.mxu0 %v302
  %v473 = vpop.f32.mrf.mxu0
  %v474 = vadd.f32 %v375, %v473
  %v475 = vpop.f32.mrf.mxu0
  %v476 = vadd.f32 %v377, %v475
  %477 = vmatmul.bf16.gmra.mxu0 %v305
  %v478 = vpop.f32.mrf.mxu0
  %v479 = vadd.f32 %v380, %v478
  %v480 = vpop.f32.mrf.mxu0
  %v481 = vadd.f32 %v382, %v480
  %482 = vmatmul.bf16.gmra.mxu0 %v308
  %v483 = vpop.f32.mrf.mxu0
  %v484 = vadd.f32 %v385, %v483
  %v485 = vpop.f32.mrf.mxu0
  %v486 = vadd.f32 %v387, %v485
  %487 = vmatmul.bf16.gmra.mxu0 %v311
  %v488 = vpop.f32.mrf.mxu0
  %v489 = vadd.f32 %v390, %v488
  %v490 = vpop.f32.mrf.mxu0
  %v491 = vadd.f32 %v392, %v490
  %492 = vmatmul.bf16.gmra.mxu0 %v314
  %v493 = vpop.f32.mrf.mxu0
  %v494 = vadd.f32 %v395, %v493
  %v495 = vpop.f32.mrf.mxu0
  %v496 = vadd.f32 %v397, %v495
  %497 = vmatmul.bf16.gmra.mxu0 %v317
  %v498 = vpop.f32.mrf.mxu0
  %v499 = vadd.f32 %v400, %v498
  %v500 = vpop.f32.mrf.mxu0
  %v501 = vadd.f32 %v402, %v500
  %502 = vmatmul.bf16.gmra.mxu0 %v320
  %v503 = vpop.f32.mrf.mxu0
  %v504 = vadd.f32 %v405, %v503
  %v505 = vpop.f32.mrf.mxu0
  %v506 = vadd.f32 %v407, %v505
  %507 = vmatmul.bf16.gmra.mxu0 %v323
  %v508 = vpop.f32.mrf.mxu0
  %v509 = vadd.f32 %v410, %v508
  %v510 = vpop.f32.mrf.mxu0
  %v511 = vadd.f32 %v412, %v510
  %512 = vmatmul.bf16.gmra.mxu0 %v326
  %v513 = vpop.f32.mrf.mxu0
  %v514 = vadd.f32 %v415, %v513
  %v515 = vpop.f32.mrf.mxu0
  %v516 = vadd.f32 %v417, %v515
  %517 = vmatmul.bf16.gmra.mxu0 %v329
  %v518 = vpop.f32.mrf.mxu0
  %v519 = vadd.f32 %v420, %v518
  %v520 = vpop.f32.mrf.mxu0
  %v521 = vadd.f32 %v422, %v520
  %522 = vmatmul.bf16.gmra.mxu0 %v332
  %v523 = vpop.f32.mrf.mxu0
  %v524 = vadd.f32 %v425, %v523
  %v525 = vpop.f32.mrf.mxu0
  %v526 = vadd.f32 %v427, %v525
  %527 = vmatmul.bf16.gmra.mxu0 %v335
  %v528 = vpop.f32.mrf.mxu0
  %v529 = vadd.f32 %v430, %v528
  %v530 = vpop.f32.mrf.mxu0
  %v531 = vadd.f32 %v432, %v530
  %532 = vmatmul.bf16.gmra.mxu0 %v338
  %v533 = vpop.f32.mrf.mxu0
  %v534 = vadd.f32 %v435, %v533
  %v535 = vpop.f32.mrf.mxu0
  %v536 = vadd.f32 %v437, %v535
  %537 = vdwg.mxu0
  %v538 = vmax.f32 %v449, %v471
  %v539 = vmax.f32 %v451, %v474
  %v540 = vmax.f32 %v454, %v476
  %v541 = vmax.f32 %v456, %v479
  %v542 = vmax.f32 %v459, %v481
  %v543 = vmax.f32 %v461, %v484
  %v544 = vmax.f32 %v464, %v486
  %v545 = vmax.f32 %v466, %v489
  %v546 = vmax.f32 %v469, %v491
  %v547 = vmax.f32 %v494, %v516
  %v548 = vmax.f32 %v496, %v519
  %v549 = vmax.f32 %v499, %v521
  %v550 = vmax.f32 %v501, %v524
  %v551 = vmax.f32 %v504, %v526
  %v552 = vmax.f32 %v506, %v529
  %v553 = vmax.f32 %v509, %v531
  %v554 = vmax.f32 %v511, %v534
  %v555 = vmax.f32 %v514, %v536
  %v556 = vmax.f32 %v538, %v547
  %v557 = vmax.f32 %v539, %v548
  %v558 = vmax.f32 %v540, %v549
  %v559 = vmax.f32 %v541, %v550
  %v560 = vmax.f32 %v542, %v551
  %v561 = vmax.f32 %v543, %v552
  %v562 = vmax.f32 %v544, %v553
  %v563 = vmax.f32 %v545, %v554
  %v564 = vmax.f32 %v546, %v555
  %v565 = vld [vmem:[%s2] sm:$0x1]
  %v567 = vperm.slane %v565, 0
  %v569 = vadd.f32 %v556, %v567
  %v570 = vadd.f32 %v557, %v567
  %v571 = vadd.f32 %v558, %v567
  %v572 = vadd.f32 %v559, %v567
  %v573 = vadd.f32 %v560, %v567
  %v574 = vadd.f32 %v561, %v567
  %v575 = vadd.f32 %v562, %v567
  %v576 = vadd.f32 %v563, %v567
  %v577 = vadd.f32 %v564, %v567
  %v578 = vmax.f32 %v569, 0.0
  %v579 = vmax.f32 %v570, 0.0
  %v580 = vmax.f32 %v571, 0.0
  %v581 = vmax.f32 %v572, 0.0
  %v582 = vmax.f32 %v573, 0.0
  %v583 = vmax.f32 %v574, 0.0
  %v584 = vmax.f32 %v575, 0.0
  %v585 = vmax.f32 %v576, 0.0
  %v586 = vmax.f32 %v577, 0.0
  %v587 = vpack.c.bf16 %v578, %v578
  %v588 = vpack.c.bf16 %v579, %v579
  %v589 = vpack.c.bf16 %v580, %v580
  %v590 = vpack.c.bf16 %v581, %v581
  %v591 = vpack.c.bf16 %v582, %v582
  %v592 = vpack.c.bf16 %v583, %v583
  %v593 = vpack.c.bf16 %v584, %v584
  %v594 = vpack.c.bf16 %v585, %v585
  %v595 = vpack.c.bf16 %v586, %v586
  %vm596 = vcmask 519168
  %597 = vst.msk [vmem:[%s3] sm:$0xf] %vm596, %v587
  %598 = vst.msk [vmem:[%s3 + $0x4] sm:$0xf] %vm596, %v588
  %599 = vst.msk [vmem:[%s3 + $0x8] sm:$0xf] %vm596, %v589
  %600 = vst.msk [vmem:[%s3 + $0xc] sm:$0xf] %vm596, %v590
  %601 = vst.msk [vmem:[%s3 + $0x10] sm:$0xf] %vm596, %v591
  %602 = vst.msk [vmem:[%s3 + $0x14] sm:$0xf] %vm596, %v592
  %603 = vst.msk [vmem:[%s3 + $0x18] sm:$0xf] %vm596, %v593
  %604 = vst.msk [vmem:[%s3 + $0x1c] sm:$0xf] %vm596, %v594
  %605 = vst.msk [vmem:[%s3 + $0x20] sm:$0xf] %vm596, %v595
  // Predicated region
  $region14: #{net_forward.4} parent=0 // pred_check
    _
  $region15: #{net_forward.4} parent=0 // pred_check_branch
    %607 = sbr.rel (0) target = $region17
  $region16: #{net_forward.4} parent=0 // pred_region
    _
  $region17: #{net_forward.4} parent=0 // pred_fallthru
    _
  // Predicated region
  $region18: #{net_forward.4} parent=0 // pred_check
    _
  $region19: #{net_forward.4} parent=0 // pred_check_branch
    %609 = sbr.rel (0) target = $region21
  $region20: #{net_forward.4} parent=0 // pred_region
    _
  $region21: #{net_forward.4} parent=0 // pred_fallthru
    _

// kernel: net_forward.5
$region0: #{net_forward.5}
  #allocation0 [shape = 'u32[]', space=smem, size = 0x4, offset = 0x4, fixed_abs, tag = 'smem constant byte address 0x4 - core index']
  #allocation1 [shape = 'u32[72,128]{1,0:T(1,128)}', space=vmem, size = 0x9000, scoped, tag = 'internal scratch']
  %s0 = inlined_call_operand.vmem [shape: bf16[16,16,576], index: 0, kind: input, shape index: {}]
  %s1 = inlined_call_operand.vmem [shape: bf16[576,64], index: 1, kind: input, shape index: {}]
  %s2 = inlined_call_operand.vmem [shape: f32[1,64], index: 2, kind: input, shape index: {}]
  %s3 = inlined_call_operand.vmem [shape: bf16[4,64,10], index: 3, kind: input, shape index: {}]
  %s4 = inlined_call_operand.vmem [shape: f32[1,10], index: 4, kind: input, shape index: {}]
  %s5 = inlined_call_operand.vmem [shape: f32[16,10], index: 5, kind: output, shape index: {}]
  %s6 = sld [smem:[#allocation0]]
  $region30: #{net_forward.5} parent=0
    _
  %s8 = ssub.s32 1, %s6
  %s9 = scalar_select 0, %s8, %s6
  // Predicated region
  $region2: #{net_forward.5} parent=0 // pred_check
    _
  $region3: #{net_forward.5} parent=0 // pred_check_branch
    %11 = sbr.rel (0) target = $region5
  $region4: #{net_forward.5} parent=0 // pred_region
    _
  $region5: #{net_forward.5} parent=0 // pred_fallthru
    _
  // Predicated region
  $region6: #{net_forward.5} parent=0 // pred_check
    _
  $region7: #{net_forward.5} parent=0 // pred_check_branch
    %13 = sbr.rel (0) target = $region9
  $region8: #{net_forward.5} parent=0 // pred_region
    _
  $region9: #{net_forward.5} parent=0 // pred_fallthru
    _
  // Predicated region
  $region10: #{net_forward.5} parent=0 // pred_check
    _
  $region11: #{net_forward.5} parent=0 // pred_check_branch
    %15 = sbr.rel (0) target = $region13
  $region12: #{net_forward.5} parent=0 // pred_region
    _
  $region13: #{net_forward.5} parent=0 // pred_fallthru
    _
  // Predicated region
  $region14: #{net_forward.5} parent=0 // pred_check
    _
  $region15: #{net_forward.5} parent=0 // pred_check_branch
    %17 = sbr.rel (0) target = $region17
  $region16: #{net_forward.5} parent=0 // pred_region
    _
  $region17: #{net_forward.5} parent=0 // pred_fallthru
    _
  // Predicated region
  $region18: #{net_forward.5} parent=0 // pred_check
    _
  $region19: #{net_forward.5} parent=0 // pred_check_branch
    %19 = sbr.rel (0) target = $region21
  $region20: #{net_forward.5} parent=0 // pred_region
    _
  $region21: #{net_forward.5} parent=0 // pred_fallthru
    _
  %v21 = vld [vmem:[%s0] sm:$0xff]
  %v22 = vld [vmem:[%s0 + $0x8] sm:$0xff]
  %v23 = vld [vmem:[%s0 + $0x10] sm:$0xf]
  %v24 = vld [vmem:[%s0 + $0x14] sm:$0xff]
  %v25 = vld [vmem:[%s0 + $0x1c] sm:$0xff]
  %v26 = vld [vmem:[%s0 + $0x24] sm:$0xf]
  %v27 = vld [vmem:[%s0 + $0x28] sm:$0xff]
  %v28 = vld [vmem:[%s0 + $0x30] sm:$0xff]
  %v29 = vld [vmem:[%s0 + $0x38] sm:$0xf]
  %v30 = vld [vmem:[%s0 + $0x3c] sm:$0xff]
  %v31 = vld [vmem:[%s0 + $0x44] sm:$0xff]
  %v32 = vld [vmem:[%s0 + $0x4c] sm:$0xf]
  %v33 = vld [vmem:[%s0 + $0x50] sm:$0xff]
  %v34 = vld [vmem:[%s0 + $0x58] sm:$0xff]
  %v35 = vld [vmem:[%s0 + $0x60] sm:$0xf]
  %v36 = vld [vmem:[%s0 + $0x64] sm:$0xff]
  %v37 = vld [vmem:[%s0 + $0x6c] sm:$0xff]
  %v38 = vld [vmem:[%s0 + $0x74] sm:$0xf]
  %v39 = vld [vmem:[%s0 + $0x78] sm:$0xff]
  %v40 = vld [vmem:[%s0 + $0x80] sm:$0xff]
  %v41 = vld [vmem:[%s0 + $0x88] sm:$0xf]
  %v42 = vld [vmem:[%s0 + $0x8c] sm:$0xff]
  %v43 = vld [vmem:[%s0 + $0x94] sm:$0xff]
  %v44 = vld [vmem:[%s0 + $0x9c] sm:$0xf]
  %v45 = vld [vmem:[%s0 + $0xa0] sm:$0xff]
  %v46 = vld [vmem:[%s0 + $0xa8] sm:$0xff]
  %v47 = vld [vmem:[%s0 + $0xb0] sm:$0xf]
  %v48 = vld [vmem:[%s0 + $0xb4] sm:$0xff]
  %v49 = vld [vmem:[%s0 + $0xbc] sm:$0xff]
  %v50 = vld [vmem:[%s0 + $0xc4] sm:$0xf]
  %v51 = vld [vmem:[%s0 + $0xc8] sm:$0xff]
  %v52 = vld [vmem:[%s0 + $0xd0] sm:$0xff]
  %v53 = vld [vmem:[%s0 + $0xd8] sm:$0xf]
  %v54 = vld [vmem:[%s0 + $0xdc] sm:$0xff]
  %v55 = vld [vmem:[%s0 + $0xe4] sm:$0xff]
  %v56 = vld [vmem:[%s0 + $0xec] sm:$0xf]
  %v57 = vld [vmem:[%s0 + $0xf0] sm:$0xff]
  %v58 = vld [vmem:[%s0 + $0xf8] sm:$0xff]
  %v59 = vld [vmem:[%s0 + $0x100] sm:$0xf]
  %v60 = vld [vmem:[%s0 + $0x104] sm:$0xff]
  %v61 = vld [vmem:[%s0 + $0x10c] sm:$0xff]
  %v62 = vld [vmem:[%s0 + $0x114] sm:$0xf]
  %v63 = vld [vmem:[%s0 + $0x118] sm:$0xff]
  %v64 = vld [vmem:[%s0 + $0x120] sm:$0xff]
  %v65 = vld [vmem:[%s0 + $0x128] sm:$0xf]
  %v66 = vld [vmem:[%s0 + $0x12c] sm:$0xff]
  %v67 = vld [vmem:[%s0 + $0x134] sm:$0xff]
  %v68 = vld [vmem:[%s0 + $0x13c] sm:$0xf]
  %v69 = vld [vmem:[%s0 + $0x140] sm:$0xff]
  %v70 = vld [vmem:[%s0 + $0x148] sm:$0xff]
  %v71 = vld [vmem:[%s0 + $0x150] sm:$0xf]
  %v72 = vld [vmem:[%s0 + $0x154] sm:$0xff]
  %v73 = vld [vmem:[%s0 + $0x15c] sm:$0xff]
  %v74 = vld [vmem:[%s0 + $0x164] sm:$0xf]
  %v75 = vld [vmem:[%s0 + $0x168] sm:$0xff]
  %v76 = vld [vmem:[%s0 + $0x170] sm:$0xff]
  %v77 = vld [vmem:[%s0 + $0x178] sm:$0xf]
  %v78 = vld [vmem:[%s0 + $0x17c] sm:$0xff]
  %v79 = vld [vmem:[%s0 + $0x184] sm:$0xff]
  %v80 = vld [vmem:[%s0 + $0x18c] sm:$0xf]
  %v81 = vld [vmem:[%s0 + $0x190] sm:$0xff]
  %v82 = vld [vmem:[%s0 + $0x198] sm:$0xff]
  %v83 = vld [vmem:[%s0 + $0x1a0] sm:$0xf]
  %v84 = vld [vmem:[%s0 + $0x1a4] sm:$0xff]
  %v85 = vld [vmem:[%s0 + $0x1ac] sm:$0xff]
  %v86 = vld [vmem:[%s0 + $0x1b4] sm:$0xf]
  %v87 = vld [vmem:[%s0 + $0x1b8] sm:$0xff]
  %v88 = vld [vmem:[%s0 + $0x1c0] sm:$0xff]
  %v89 = vld [vmem:[%s0 + $0x1c8] sm:$0xf]
  %v90 = vld [vmem:[%s0 + $0x1cc] sm:$0xff]
  %v91 = vld [vmem:[%s0 + $0x1d4] sm:$0xff]
  %v92 = vld [vmem:[%s0 + $0x1dc] sm:$0xf]
  %v93 = vld [vmem:[%s0 + $0x1e0] sm:$0xff]
  %v94 = vld [vmem:[%s0 + $0x1e8] sm:$0xff]
  %v95 = vld [vmem:[%s0 + $0x1f0] sm:$0xf]
  %v96 = vld [vmem:[%s0 + $0x1f4] sm:$0xff]
  %v97 = vld [vmem:[%s0 + $0x1fc] sm:$0xff]
  %v98 = vld [vmem:[%s0 + $0x204] sm:$0xf]
  %v99 = vld [vmem:[%s0 + $0x208] sm:$0xff]
  %v100 = vld [vmem:[%s0 + $0x210] sm:$0xff]
  %v101 = vld [vmem:[%s0 + $0x218] sm:$0xf]
  %v102 = vld [vmem:[%s0 + $0x21c] sm:$0xff]
  %v103 = vld [vmem:[%s0 + $0x224] sm:$0xff]
  %v104 = vld [vmem:[%s0 + $0x22c] sm:$0xf]
  %v105 = vld [vmem:[%s0 + $0x230] sm:$0xff]
  %v106 = vld [vmem:[%s0 + $0x238] sm:$0xff]
  %v107 = vld [vmem:[%s0 + $0x240] sm:$0xf]
  %v108 = vld [vmem:[%s0 + $0x244] sm:$0xff]
  %v109 = vld [vmem:[%s0 + $0x24c] sm:$0xff]
  %v110 = vld [vmem:[%s0 + $0x254] sm:$0xf]
  %v111 = vld [vmem:[%s0 + $0x258] sm:$0xff]
  %v112 = vld [vmem:[%s0 + $0x260] sm:$0xff]
  %v113 = vld [vmem:[%s0 + $0x268] sm:$0xf]
  %v114 = vld [vmem:[%s0 + $0x26c] sm:$0xff]
  %v115 = vld [vmem:[%s0 + $0x274] sm:$0xff]
  %v116 = vld [vmem:[%s0 + $0x27c] sm:$0xf]
  %v117 = vld [vmem:[%s1] sm:$0xf]
  %v118 = vld [vmem:[%s1 + $0x4] sm:$0xf]
  %v119 = vld [vmem:[%s1 + $0x8] sm:$0xf]
  %v120 = vld [vmem:[%s1 + $0xc] sm:$0xf]
  %v121 = vld [vmem:[%s1 + $0x10] sm:$0xf]
  %v122 = vld [vmem:[%s1 + $0x14] sm:$0xf]
  %v123 = vld [vmem:[%s1 + $0x18] sm:$0xf]
  %v124 = vld [vmem:[%s1 + $0x1c] sm:$0xf]
  %v125 = vld [vmem:[%s1 + $0x20] sm:$0xf]
  %v126 = vld [vmem:[%s1 + $0x24] sm:$0xf]
  %v127 = vld [vmem:[%s1 + $0x28] sm:$0xf]
  %v128 = vld [vmem:[%s1 + $0x2c] sm:$0xf]
  %v129 = vld [vmem:[%s1 + $0x30] sm:$0xf]
  %v130 = vld [vmem:[%s1 + $0x34] sm:$0xf]
  %v131 = vld [vmem:[%s1 + $0x38] sm:$0xf]
  %v132 = vld [vmem:[%s1 + $0x3c] sm:$0xf]
  %v133 = vld [vmem:[%s1 + $0x40] sm:$0xf]
  %v134 = vld [vmem:[%s1 + $0x44] sm:$0xf]
  %v135 = vld [vmem:[%s1 + $0x48] sm:$0xf]
  %v136 = vld [vmem:[%s1 + $0x4c] sm:$0xf]
  %v137 = vld [vmem:[%s1 + $0x50] sm:$0xf]
  %v138 = vld [vmem:[%s1 + $0x54] sm:$0xf]
  %v139 = vld [vmem:[%s1 + $0x58] sm:$0xf]
  %v140 = vld [vmem:[%s1 + $0x5c] sm:$0xf]
  %v141 = vld [vmem:[%s1 + $0x60] sm:$0xf]
  %v142 = vld [vmem:[%s1 + $0x64] sm:$0xf]
  %v143 = vld [vmem:[%s1 + $0x68] sm:$0xf]
  %v144 = vld [vmem:[%s1 + $0x6c] sm:$0xf]
  %v145 = vld [vmem:[%s1 + $0x70] sm:$0xf]
  %v146 = vld [vmem:[%s1 + $0x74] sm:$0xf]
  %v147 = vld [vmem:[%s1 + $0x78] sm:$0xf]
  %v148 = vld [vmem:[%s1 + $0x7c] sm:$0xf]
  %v149 = vld [vmem:[%s1 + $0x80] sm:$0xf]
  %v150 = vld [vmem:[%s1 + $0x84] sm:$0xf]
  %v151 = vld [vmem:[%s1 + $0x88] sm:$0xf]
  %v152 = vld [vmem:[%s1 + $0x8c] sm:$0xf]
  %v153 = vld [vmem:[%s1 + $0x90] sm:$0xf]
  %v154 = vld [vmem:[%s1 + $0x94] sm:$0xf]
  %v155 = vld [vmem:[%s1 + $0x98] sm:$0xf]
  %v156 = vld [vmem:[%s1 + $0x9c] sm:$0xf]
  %v157 = vld [vmem:[%s1 + $0xa0] sm:$0xf]
  %v158 = vld [vmem:[%s1 + $0xa4] sm:$0xf]
  %v159 = vld [vmem:[%s1 + $0xa8] sm:$0xf]
  %v160 = vld [vmem:[%s1 + $0xac] sm:$0xf]
  %v161 = vld [vmem:[%s1 + $0xb0] sm:$0xf]
  %v162 = vld [vmem:[%s1 + $0xb4] sm:$0xf]
  %v163 = vld [vmem:[%s1 + $0xb8] sm:$0xf]
  %v164 = vld [vmem:[%s1 + $0xbc] sm:$0xf]
  %v165 = vld [vmem:[%s1 + $0xc0] sm:$0xf]
  %v166 = vld [vmem:[%s1 + $0xc4] sm:$0xf]
  %v167 = vld [vmem:[%s1 + $0xc8] sm:$0xf]
  %v168 = vld [vmem:[%s1 + $0xcc] sm:$0xf]
  %v169 = vld [vmem:[%s1 + $0xd0] sm:$0xf]
  %v170 = vld [vmem:[%s1 + $0xd4] sm:$0xf]
  %v171 = vld [vmem:[%s1 + $0xd8] sm:$0xf]
  %v172 = vld [vmem:[%s1 + $0xdc] sm:$0xf]
  %v173 = vld [vmem:[%s1 + $0xe0] sm:$0xf]
  %v174 = vld [vmem:[%s1 + $0xe4] sm:$0xf]
  %v175 = vld [vmem:[%s1 + $0xe8] sm:$0xf]
  %v176 = vld [vmem:[%s1 + $0xec] sm:$0xf]
  %v177 = vld [vmem:[%s1 + $0xf0] sm:$0xf]
  %v178 = vld [vmem:[%s1 + $0xf4] sm:$0xf]
  %v179 = vld [vmem:[%s1 + $0xf8] sm:$0xf]
  %v180 = vld [vmem:[%s1 + $0xfc] sm:$0xf]
  %v181 = vld [vmem:[%s1 + $0x100] sm:$0xf]
  %v182 = vld [vmem:[%s1 + $0x104] sm:$0xf]
  %v183 = vld [vmem:[%s1 + $0x108] sm:$0xf]
  %v184 = vld [vmem:[%s1 + $0x10c] sm:$0xf]
  %v185 = vld [vmem:[%s1 + $0x110] sm:$0xf]
  %v186 = vld [vmem:[%s1 + $0x114] sm:$0xf]
  %v187 = vld [vmem:[%s1 + $0x118] sm:$0xf]
  %v188 = vld [vmem:[%s1 + $0x11c] sm:$0xf]
  %v285 = vunpack.c.l.b16 %v21
  %v286 = vunpack.c.h.b16 %v21
  %v287 = vunpack.c.l.b16 %v22
  %v288 = vunpack.c.h.b16 %v22
  %v289 = vunpack.c.l.b16 %v23
  %v290 = vunpack.c.l.b16 %v24
  %v291 = vunpack.c.h.b16 %v24
  %v292 = vunpack.c.l.b16 %v25
  %v293 = vunpack.c.h.b16 %v25
  %v294 = vunpack.c.l.b16 %v26
  %v295 = vunpack.c.l.b16 %v27
  %v296 = vunpack.c.h.b16 %v27
  %v297 = vunpack.c.l.b16 %v28
  %v298 = vunpack.c.h.b16 %v28
  %v299 = vunpack.c.l.b16 %v29
  %v300 = vunpack.c.l.b16 %v30
  %v301 = vunpack.c.h.b16 %v30
  %v302 = vunpack.c.l.b16 %v31
  %v303 = vunpack.c.h.b16 %v31
  %v304 = vunpack.c.l.b16 %v32
  %v305 = vunpack.c.l.b16 %v33
  %v306 = vunpack.c.h.b16 %v33
  %v307 = vunpack.c.l.b16 %v34
  %v308 = vunpack.c.h.b16 %v34
  %v309 = vunpack.c.l.b16 %v35
  %v310 = vunpack.c.l.b16 %v36
  %v311 = vunpack.c.h.b16 %v36
  %v312 = vunpack.c.l.b16 %v37
  %v313 = vunpack.c.h.b16 %v37
  %v314 = vunpack.c.l.b16 %v38
  %v315 = vunpack.c.l.b16 %v39
  %v316 = vunpack.c.h.b16 %v39
  %v317 = vunpack.c.l.b16 %v40
  %v318 = vunpack.c.h.b16 %v40
  %v319 = vunpack.c.l.b16 %v41
  %v320 = vunpack.c.l.b16 %v42
  %v321 = vunpack.c.h.b16 %v42
  %v322 = vunpack.c.l.b16 %v43
  %v323 = vunpack.c.h.b16 %v43
  %v324 = vunpack.c.l.b16 %v44
  %v325 = vunpack.c.l.b16 %v45
  %v326 = vunpack.c.h.b16 %v45
  %v327 = vunpack.c.l.b16 %v46
  %v328 = vunpack.c.h.b16 %v46
  %v329 = vunpack.c.l.b16 %v47
  %v330 = vunpack.c.l.b16 %v48
  %v331 = vunpack.c.h.b16 %v48
  %v332 = vunpack.c.l.b16 %v49
  %v333 = vunpack.c.h.b16 %v49
  %v334 = vunpack.c.l.b16 %v50
  %v335 = vunpack.c.l.b16 %v51
  %v336 = vunpack.c.h.b16 %v51
  %v337 = vunpack.c.l.b16 %v52
  %v338 = vunpack.c.h.b16 %v52
  %v339 = vunpack.c.l.b16 %v53
  %v340 = vunpack.c.l.b16 %v54
  %v341 = vunpack.c.h.b16 %v54
  %v342 = vunpack.c.l.b16 %v55
  %v343 = vunpack.c.h.b16 %v55
  %v344 = vunpack.c.l.b16 %v56
  %v345 = vunpack.c.l.b16 %v57
  %v346 = vunpack.c.h.b16 %v57
  %v347 = vunpack.c.l.b16 %v58
  %v348 = vunpack.c.h.b16 %v58
  %v349 = vunpack.c.l.b16 %v59
  %v350 = vunpack.c.l.b16 %v60
  %v351 = vunpack.c.h.b16 %v60
  %v352 = vunpack.c.l.b16 %v61
  %v353 = vunpack.c.h.b16 %v61
  %v354 = vunpack.c.l.b16 %v62
  %v355 = vunpack.c.l.b16 %v63
  %v356 = vunpack.c.h.b16 %v63
  %v357 = vunpack.c.l.b16 %v64
  %v358 = vunpack.c.h.b16 %v64
  %v359 = vunpack.c.l.b16 %v65
  %v360 = vunpack.c.l.b16 %v66
  %v361 = vunpack.c.h.b16 %v66
  %v362 = vunpack.c.l.b16 %v67
  %v363 = vunpack.c.h.b16 %v67
  %v364 = vunpack.c.l.b16 %v68
  %v365 = vunpack.c.l.b16 %v69
  %v366 = vunpack.c.h.b16 %v69
  %v367 = vunpack.c.l.b16 %v70
  %v368 = vunpack.c.h.b16 %v70
  %v369 = vunpack.c.l.b16 %v71
  %v370 = vunpack.c.l.b16 %v72
  %v371 = vunpack.c.h.b16 %v72
  %v372 = vunpack.c.l.b16 %v73
  %v373 = vunpack.c.h.b16 %v73
  %v374 = vunpack.c.l.b16 %v74
  %v375 = vunpack.c.l.b16 %v75
  %v376 = vunpack.c.h.b16 %v75
  %v377 = vunpack.c.l.b16 %v76
  %v378 = vunpack.c.h.b16 %v76
  %v379 = vunpack.c.l.b16 %v77
  %v380 = vunpack.c.l.b16 %v78
  %v381 = vunpack.c.h.b16 %v78
  %v382 = vunpack.c.l.b16 %v79
  %v383 = vunpack.c.h.b16 %v79
  %v384 = vunpack.c.l.b16 %v80
  %v385 = vunpack.c.l.b16 %v81
  %v386 = vunpack.c.h.b16 %v81
  %v387 = vunpack.c.l.b16 %v82
  %v388 = vunpack.c.h.b16 %v82
  %v389 = vunpack.c.l.b16 %v83
  %v390 = vunpack.c.l.b16 %v84
  %v391 = vunpack.c.h.b16 %v84
  %v392 = vunpack.c.l.b16 %v85
  %v393 = vunpack.c.h.b16 %v85
  %v394 = vunpack.c.l.b16 %v86
  %v395 = vunpack.c.l.b16 %v87
  %v396 = vunpack.c.h.b16 %v87
  %v397 = vunpack.c.l.b16 %v88
  %v398 = vunpack.c.h.b16 %v88
  %v399 = vunpack.c.l.b16 %v89
  %v400 = vunpack.c.l.b16 %v90
  %v401 = vunpack.c.h.b16 %v90
  %v402 = vunpack.c.l.b16 %v91
  %v403 = vunpack.c.h.b16 %v91
  %v404 = vunpack.c.l.b16 %v92
  %v405 = vunpack.c.l.b16 %v93
  %v406 = vunpack.c.h.b16 %v93
  %v407 = vunpack.c.l.b16 %v94
  %v408 = vunpack.c.h.b16 %v94
  %v409 = vunpack.c.l.b16 %v95
  %v410 = vunpack.c.l.b16 %v96
  %v411 = vunpack.c.h.b16 %v96
  %v412 = vunpack.c.l.b16 %v97
  %v413 = vunpack.c.h.b16 %v97
  %v414 = vunpack.c.l.b16 %v98
  %v415 = vunpack.c.l.b16 %v99
  %v416 = vunpack.c.h.b16 %v99
  %v417 = vunpack.c.l.b16 %v100
  %v418 = vunpack.c.h.b16 %v100
  %v419 = vunpack.c.l.b16 %v101
  %v420 = vunpack.c.l.b16 %v102
  %v421 = vunpack.c.h.b16 %v102
  %v422 = vunpack.c.l.b16 %v103
  %v423 = vunpack.c.h.b16 %v103
  %v424 = vunpack.c.l.b16 %v104
  %v425 = vunpack.c.l.b16 %v105
  %v426 = vunpack.c.h.b16 %v105
  %v427 = vunpack.c.l.b16 %v106
  %v428 = vunpack.c.h.b16 %v106
  %v429 = vunpack.c.l.b16 %v107
  %v430 = vunpack.c.l.b16 %v108
  %v431 = vunpack.c.h.b16 %v108
  %v432 = vunpack.c.l.b16 %v109
  %v433 = vunpack.c.h.b16 %v109
  %v434 = vunpack.c.l.b16 %v110
  %v435 = vunpack.c.l.b16 %v111
  %v436 = vunpack.c.h.b16 %v111
  %v437 = vunpack.c.l.b16 %v112
  %v438 = vunpack.c.h.b16 %v112
  %v439 = vunpack.c.l.b16 %v113
  %v440 = vunpack.c.l.b16 %v114
  %v441 = vunpack.c.h.b16 %v114
  %v442 = vunpack.c.l.b16 %v115
  %v443 = vunpack.c.h.b16 %v115
  %v444 = vunpack.c.l.b16 %v116
  %v445 = vpack.c.b16 %v290, %v285
  %v446 = vpack.c.b16 %v291, %v286
  %v447 = vpack.c.b16 %v292, %v287
  %v448 = vpack.c.b16 %v293, %v288
  %v449 = vpack.c.b16 %v294, %v289
  %v450 = vpack.c.b16 %v300, %v295
  %v451 = vpack.c.b16 %v301, %v296
  %v452 = vpack.c.b16 %v302, %v297
  %v453 = vpack.c.b16 %v303, %v298
  %v454 = vpack.c.b16 %v304, %v299
  %v455 = vpack.c.b16 %v310, %v305
  %v456 = vpack.c.b16 %v311, %v306
  %v457 = vpack.c.b16 %v312, %v307
  %v458 = vpack.c.b16 %v313, %v308
  %v459 = vpack.c.b16 %v314, %v309
  %v460 = vpack.c.b16 %v320, %v315
  %v461 = vpack.c.b16 %v321, %v316
  %v462 = vpack.c.b16 %v322, %v317
  %v463 = vpack.c.b16 %v323, %v318
  %v464 = vpack.c.b16 %v324, %v319
  %v465 = vpack.c.b16 %v330, %v325
  %v466 = vpack.c.b16 %v331, %v326
  %v467 = vpack.c.b16 %v332, %v327
  %v468 = vpack.c.b16 %v333, %v328
  %v469 = vpack.c.b16 %v334, %v329
  %v470 = vpack.c.b16 %v340, %v335
  %v471 = vpack.c.b16 %v341, %v336
  %v472 = vpack.c.b16 %v342, %v337
  %v473 = vpack.c.b16 %v343, %v338
  %v474 = vpack.c.b16 %v344, %v339
  %v475 = vpack.c.b16 %v350, %v345
  %v476 = vpack.c.b16 %v351, %v346
  %v477 = vpack.c.b16 %v352, %v347
  %v478 = vpack.c.b16 %v353, %v348
  %v479 = vpack.c.b16 %v354, %v349
  %v480 = vpack.c.b16 %v360, %v355
  %v481 = vpack.c.b16 %v361, %v356
  %v482 = vpack.c.b16 %v362, %v357
  %v483 = vpack.c.b16 %v363, %v358
  %v484 = vpack.c.b16 %v364, %v359
  %v485 = vpack.c.b16 %v370, %v365
  %v486 = vpack.c.b16 %v371, %v366
  %v487 = vpack.c.b16 %v372, %v367
  %v488 = vpack.c.b16 %v373, %v368
  %v489 = vpack.c.b16 %v374, %v369
  %v490 = vpack.c.b16 %v380, %v375
  %v491 = vpack.c.b16 %v381, %v376
  %v492 = vpack.c.b16 %v382, %v377
  %v493 = vpack.c.b16 %v383, %v378
  %v494 = vpack.c.b16 %v384, %v379
  %v495 = vpack.c.b16 %v390, %v385
  %v496 = vpack.c.b16 %v391, %v386
  %v497 = vpack.c.b16 %v392, %v387
  %v498 = vpack.c.b16 %v393, %v388
  %v499 = vpack.c.b16 %v394, %v389
  %v500 = vpack.c.b16 %v400, %v395
  %v501 = vpack.c.b16 %v401, %v396
  %v502 = vpack.c.b16 %v402, %v397
  %v503 = vpack.c.b16 %v403, %v398
  %v504 = vpack.c.b16 %v404, %v399
  %v505 = vpack.c.b16 %v410, %v405
  %v506 = vpack.c.b16 %v411, %v406
  %v507 = vpack.c.b16 %v412, %v407
  %v508 = vpack.c.b16 %v413, %v408
  %v509 = vpack.c.b16 %v414, %v409
  %v510 = vpack.c.b16 %v420, %v415
  %v511 = vpack.c.b16 %v421, %v416
  %v512 = vpack.c.b16 %v422, %v417
  %v513 = vpack.c.b16 %v423, %v418
  %v514 = vpack.c.b16 %v424, %v419
  %v515 = vpack.c.b16 %v430, %v425
  %v516 = vpack.c.b16 %v431, %v426
  %v517 = vpack.c.b16 %v432, %v427
  %v518 = vpack.c.b16 %v433, %v428
  %v519 = vpack.c.b16 %v434, %v429
  %v520 = vpack.c.b16 %v440, %v435
  %v521 = vpack.c.b16 %v441, %v436
  %v522 = vpack.c.b16 %v442, %v437
  %v523 = vpack.c.b16 %v443, %v438
  %v524 = vpack.c.b16 %v444, %v439
  %v661 = vunpack.c.l.b16 %v117
  %v662 = vunpack.c.l.b16 %v118
  %v663 = vunpack.c.l.b16 %v119
  %v664 = vunpack.c.l.b16 %v120
  %v665 = vunpack.c.l.b16 %v121
  %v666 = vunpack.c.l.b16 %v122
  %v667 = vunpack.c.l.b16 %v123
  %v668 = vunpack.c.l.b16 %v124
  %v669 = vunpack.c.l.b16 %v125
  %v670 = vunpack.c.l.b16 %v126
  %v671 = vunpack.c.l.b16 %v127
  %v672 = vunpack.c.l.b16 %v128
  %v673 = vunpack.c.l.b16 %v129
  %v674 = vunpack.c.l.b16 %v130
  %v675 = vunpack.c.l.b16 %v131
  %v676 = vunpack.c.l.b16 %v132
  %v677 = vunpack.c.l.b16 %v133
  %v678 = vunpack.c.l.b16 %v134
  %v679 = vunpack.c.l.b16 %v135
  %v680 = vunpack.c.l.b16 %v136
  %v681 = vunpack.c.l.b16 %v137
  %v682 = vunpack.c.l.b16 %v138
  %v683 = vunpack.c.l.b16 %v139
  %v684 = vunpack.c.l.b16 %v140
  %v685 = vunpack.c.l.b16 %v141
  %v686 = vunpack.c.l.b16 %v142
  %v687 = vunpack.c.l.b16 %v143
  %v688 = vunpack.c.l.b16 %v144
  %v689 = vunpack.c.l.b16 %v145
  %v690 = vunpack.c.l.b16 %v146
  %v691 = vunpack.c.l.b16 %v147
  %v692 = vunpack.c.l.b16 %v148
  %v693 = vunpack.c.l.b16 %v149
  %v694 = vunpack.c.l.b16 %v150
  %v695 = vunpack.c.l.b16 %v151
  %v696 = vunpack.c.l.b16 %v152
  %v697 = vunpack.c.l.b16 %v153
  %v698 = vunpack.c.l.b16 %v154
  %v699 = vunpack.c.l.b16 %v155
  %v700 = vunpack.c.l.b16 %v156
  %v701 = vunpack.c.l.b16 %v157
  %v702 = vunpack.c.l.b16 %v158
  %v703 = vunpack.c.l.b16 %v159
  %v704 = vunpack.c.l.b16 %v160
  %v705 = vunpack.c.l.b16 %v161
  %v706 = vunpack.c.l.b16 %v162
  %v707 = vunpack.c.l.b16 %v163
  %v708 = vunpack.c.l.b16 %v164
  %v709 = vunpack.c.l.b16 %v165
  %v710 = vunpack.c.l.b16 %v166
  %v711 = vunpack.c.l.b16 %v167
  %v712 = vunpack.c.l.b16 %v168
  %v713 = vunpack.c.l.b16 %v169
  %v714 = vunpack.c.l.b16 %v170
  %v715 = vunpack.c.l.b16 %v171
  %v716 = vunpack.c.l.b16 %v172
  %v717 = vunpack.c.l.b16 %v173
  %v718 = vunpack.c.l.b16 %v174
  %v719 = vunpack.c.l.b16 %v175
  %v720 = vunpack.c.l.b16 %v176
  %v721 = vunpack.c.l.b16 %v177
  %v722 = vunpack.c.l.b16 %v178
  %v723 = vunpack.c.l.b16 %v179
  %v724 = vunpack.c.l.b16 %v180
  %v725 = vunpack.c.l.b16 %v181
  %v726 = vunpack.c.l.b16 %v182
  %v727 = vunpack.c.l.b16 %v183
  %v728 = vunpack.c.l.b16 %v184
  %v729 = vunpack.c.l.b16 %v185
  %v730 = vunpack.c.l.b16 %v186
  %v731 = vunpack.c.l.b16 %v187
  %v732 = vunpack.c.l.b16 %v188
  %v733 = vpack.c.b16 %v662, %v661
  %v734 = vpack.c.b16 %v664, %v663
  %v735 = vpack.c.b16 %v666, %v665
  %v736 = vpack.c.b16 %v668, %v667
  %v737 = vpack.c.b16 %v670, %v669
  %v738 = vpack.c.b16 %v672, %v671
  %v739 = vpack.c.b16 %v674, %v673
  %v740 = vpack.c.b16 %v676, %v675
  %v741 = vpack.c.b16 %v678, %v677
  %v742 = vpack.c.b16 %v680, %v679
  %v743 = vpack.c.b16 %v682, %v681
  %v744 = vpack.c.b16 %v684, %v683
  %v745 = vpack.c.b16 %v686, %v685
  %v746 = vpack.c.b16 %v688, %v687
  %v747 = vpack.c.b16 %v690, %v689
  %v748 = vpack.c.b16 %v692, %v691
  %v749 = vpack.c.b16 %v694, %v693
  %v750 = vpack.c.b16 %v696, %v695
  %v751 = vpack.c.b16 %v698, %v697
  %v752 = vpack.c.b16 %v700, %v699
  %v753 = vpack.c.b16 %v702, %v701
  %v754 = vpack.c.b16 %v704, %v703
  %v755 = vpack.c.b16 %v706, %v705
  %v756 = vpack.c.b16 %v708, %v707
  %v757 = vpack.c.b16 %v710, %v709
  %v758 = vpack.c.b16 %v712, %v711
  %v759 = vpack.c.b16 %v714, %v713
  %v760 = vpack.c.b16 %v716, %v715
  %v761 = vpack.c.b16 %v718, %v717
  %v762 = vpack.c.b16 %v720, %v719
  %v763 = vpack.c.b16 %v722, %v721
  %v764 = vpack.c.b16 %v724, %v723
  %v765 = vpack.c.b16 %v726, %v725
  %v766 = vpack.c.b16 %v728, %v727
  %v767 = vpack.c.b16 %v730, %v729
  %v768 = vpack.c.b16 %v732, %v731
  %vm805 = vcmask 523264
  %v807 = vsel %vm805, %v449, 0
  %v810 = vsel %vm805, %v454, 0
  %v813 = vsel %vm805, %v459, 0
  %v816 = vsel %vm805, %v464, 0
  %v819 = vsel %vm805, %v469, 0
  %v822 = vsel %vm805, %v474, 0
  %v825 = vsel %vm805, %v479, 0
  %v828 = vsel %vm805, %v484, 0
  %v831 = vsel %vm805, %v489, 0
  %v834 = vsel %vm805, %v494, 0
  %v837 = vsel %vm805, %v499, 0
  %v840 = vsel %vm805, %v504, 0
  %v843 = vsel %vm805, %v509, 0
  %v846 = vsel %vm805, %v514, 0
  %v849 = vsel %vm805, %v519, 0
  %v852 = vsel %vm805, %v524, 0
  %854 = vmatpush.bf16.msra.mxu0 %v740
  %855 = vmatpush.bf16.msra.mxu0 %v739
  %856 = vmatpush.bf16.msra.mxu0 %v738
  %857 = vmatpush.bf16.msra.mxu0 %v737
  %858 = vmatpush.bf16.msra.mxu0 %v736
  %859 = vmatpush.bf16.msra.mxu0 %v735
  %860 = vmatpush.bf16.msra.mxu0 %v734
  %861 = vmatpush.bf16.msra.mxu0 %v733
  %862 = vmatmul.bf16.gmra.mxu0 %v445
  %v863 = vpop.f32.mrf.mxu0
  %v864 = vadd.f32 0.0, %v863
  %v865 = vpop.f32.mrf.mxu0
  %v866 = vadd.f32 0.0, %v865
  %867 = vmatmul.bf16.gmra.mxu0 %v450
  %v868 = vpop.f32.mrf.mxu0
  %v869 = vadd.f32 0.0, %v868
  %v870 = vpop.f32.mrf.mxu0
  %v871 = vadd.f32 0.0, %v870
  %872 = vmatmul.bf16.gmra.mxu0 %v455
  %v873 = vpop.f32.mrf.mxu0
  %v874 = vadd.f32 0.0, %v873
  %v875 = vpop.f32.mrf.mxu0
  %v876 = vadd.f32 0.0, %v875
  %877 = vmatmul.bf16.gmra.mxu0 %v460
  %v878 = vpop.f32.mrf.mxu0
  %v879 = vadd.f32 0.0, %v878
  %v880 = vpop.f32.mrf.mxu0
  %v881 = vadd.f32 0.0, %v880
  %882 = vmatmul.bf16.gmra.mxu0 %v465
  %v883 = vpop.f32.mrf.mxu0
  %v884 = vadd.f32 0.0, %v883
  %v885 = vpop.f32.mrf.mxu0
  %v886 = vadd.f32 0.0, %v885
  %887 = vmatmul.bf16.gmra.mxu0 %v470
  %v888 = vpop.f32.mrf.mxu0
  %v889 = vadd.f32 0.0, %v888
  %v890 = vpop.f32.mrf.mxu0
  %v891 = vadd.f32 0.0, %v890
  %892 = vmatmul.bf16.gmra.mxu0 %v475
  %v893 = vpop.f32.mrf.mxu0
  %v894 = vadd.f32 0.0, %v893
  %v895 = vpop.f32.mrf.mxu0
  %v896 = vadd.f32 0.0, %v895
  %897 = vmatmul.bf16.gmra.mxu0 %v480
  %v898 = vpop.f32.mrf.mxu0
  %v899 = vadd.f32 0.0, %v898
  %v900 = vpop.f32.mrf.mxu0
  %v901 = vadd.f32 0.0, %v900
  %902 = vmatmul.bf16.gmra.mxu0 %v485
  %v903 = vpop.f32.mrf.mxu0
  %v904 = vadd.f32 0.0, %v903
  %v905 = vpop.f32.mrf.mxu0
  %v906 = vadd.f32 0.0, %v905
  %907 = vmatmul.bf16.gmra.mxu0 %v490
  %v908 = vpop.f32.mrf.mxu0
  %v909 = vadd.f32 0.0, %v908
  %v910 = vpop.f32.mrf.mxu0
  %v911 = vadd.f32 0.0, %v910
  %912 = vmatmul.bf16.gmra.mxu0 %v495
  %v913 = vpop.f32.mrf.mxu0
  %v914 = vadd.f32 0.0, %v913
  %v915 = vpop.f32.mrf.mxu0
  %v916 = vadd.f32 0.0, %v915
  %917 = vmatmul.bf16.gmra.mxu0 %v500
  %v918 = vpop.f32.mrf.mxu0
  %v919 = vadd.f32 0.0, %v918
  %v920 = vpop.f32.mrf.mxu0
  %v921 = vadd.f32 0.0, %v920
  %922 = vmatmul.bf16.gmra.mxu0 %v505
  %v923 = vpop.f32.mrf.mxu0
  %v924 = vadd.f32 0.0, %v923
  %v925 = vpop.f32.mrf.mxu0
  %v926 = vadd.f32 0.0, %v925
  %927 = vmatmul.bf16.gmra.mxu0 %v510
  %v928 = vpop.f32.mrf.mxu0
  %v929 = vadd.f32 0.0, %v928
  %v930 = vpop.f32.mrf.mxu0
  %v931 = vadd.f32 0.0, %v930
  %932 = vmatmul.bf16.gmra.mxu0 %v515
  %v933 = vpop.f32.mrf.mxu0
  %v934 = vadd.f32 0.0, %v933
  %v935 = vpop.f32.mrf.mxu0
  %v936 = vadd.f32 0.0, %v935
  %937 = vmatmul.bf16.gmra.mxu0 %v520
  %v938 = vpop.f32.mrf.mxu0
  %v939 = vadd.f32 0.0, %v938
  %v940 = vpop.f32.mrf.mxu0
  %v941 = vadd.f32 0.0, %v940
  %942 = vdwg.mxu0
  %943 = vmatpush.bf16.msra.mxu0 %v748
  %944 = vmatpush.bf16.msra.mxu0 %v747
  %945 = vmatpush.bf16.msra.mxu0 %v746
  %946 = vmatpush.bf16.msra.mxu0 %v745
  %947 = vmatpush.bf16.msra.mxu0 %v744
  %948 = vmatpush.bf16.msra.mxu0 %v743
  %949 = vmatpush.bf16.msra.mxu0 %v742
  %950 = vmatpush.bf16.msra.mxu0 %v741
  %951 = vmatmul.bf16.gmra.mxu0 %v446
  %v952 = vpop.f32.mrf.mxu0
  %v953 = vadd.f32 %v864, %v952
  %v954 = vpop.f32.mrf.mxu0
  %v955 = vadd.f32 %v866, %v954
  %956 = vmatmul.bf16.gmra.mxu0 %v451
  %v957 = vpop.f32.mrf.mxu0
  %v958 = vadd.f32 %v869, %v957
  %v959 = vpop.f32.mrf.mxu0
  %v960 = vadd.f32 %v871, %v959
  %961 = vmatmul.bf16.gmra.mxu0 %v456
  %v962 = vpop.f32.mrf.mxu0
  %v963 = vadd.f32 %v874, %v962
  %v964 = vpop.f32.mrf.mxu0
  %v965 = vadd.f32 %v876, %v964
  %966 = vmatmul.bf16.gmra.mxu0 %v461
  %v967 = vpop.f32.mrf.mxu0
  %v968 = vadd.f32 %v879, %v967
  %v969 = vpop.f32.mrf.mxu0
  %v970 = vadd.f32 %v881, %v969
  %971 = vmatmul.bf16.gmra.mxu0 %v466
  %v972 = vpop.f32.mrf.mxu0
  %v973 = vadd.f32 %v884, %v972
  %v974 = vpop.f32.mrf.mxu0
  %v975 = vadd.f32 %v886, %v974
  %976 = vmatmul.bf16.gmra.mxu0 %v471
  %v977 = vpop.f32.mrf.mxu0
  %v978 = vadd.f32 %v889, %v977
  %v979 = vpop.f32.mrf.mxu0
  %v980 = vadd.f32 %v891, %v979
  %981 = vmatmul.bf16.gmra.mxu0 %v476
  %v982 = vpop.f32.mrf.mxu0
  %v983 = vadd.f32 %v894, %v982
  %v984 = vpop.f32.mrf.mxu0
  %v985 = vadd.f32 %v896, %v984
  %986 = vmatmul.bf16.gmra.mxu0 %v481
  %v987 = vpop.f32.mrf.mxu0
  %v988 = vadd.f32 %v899, %v987
  %v989 = vpop.f32.mrf.mxu0
  %v990 = vadd.f32 %v901, %v989
  %991 = vmatmul.bf16.gmra.mxu0 %v486
  %v992 = vpop.f32.mrf.mxu0
  %v993 = vadd.f32 %v904, %v992
  %v994 = vpop.f32.mrf.mxu0
  %v995 = vadd.f32 %v906, %v994
  %996 = vmatmul.bf16.gmra.mxu0 %v491
  %v997 = vpop.f32.mrf.mxu0
  %v998 = vadd.f32 %v909, %v997
  %v999 = vpop.f32.mrf.mxu0
  %v1000 = vadd.f32 %v911, %v999
  %1001 = vmatmul.bf16.gmra.mxu0 %v496
  %v1002 = vpop.f32.mrf.mxu0
  %v1003 = vadd.f32 %v914, %v1002
  %v1004 = vpop.f32.mrf.mxu0
  %v1005 = vadd.f32 %v916, %v1004
  %1006 = vmatmul.bf16.gmra.mxu0 %v501
  %v1007 = vpop.f32.mrf.mxu0
  %v1008 = vadd.f32 %v919, %v1007
  %v1009 = vpop.f32.mrf.mxu0
  %v1010 = vadd.f32 %v921, %v1009
  %1011 = vmatmul.bf16.gmra.mxu0 %v506
  %v1012 = vpop.f32.mrf.mxu0
  %v1013 = vadd.f32 %v924, %v1012
  %v1014 = vpop.f32.mrf.mxu0
  %v1015 = vadd.f32 %v926, %v1014
  %1016 = vmatmul.bf16.gmra.mxu0 %v511
  %v1017 = vpop.f32.mrf.mxu0
  %v1018 = vadd.f32 %v929, %v1017
  %v1019 = vpop.f32.mrf.mxu0
  %v1020 = vadd.f32 %v931, %v1019
  %1021 = vmatmul.bf16.gmra.mxu0 %v516
  %v1022 = vpop.f32.mrf.mxu0
  %v1023 = vadd.f32 %v934, %v1022
  %v1024 = vpop.f32.mrf.mxu0
  %v1025 = vadd.f32 %v936, %v1024
  %1026 = vmatmul.bf16.gmra.mxu0 %v521
  %v1027 = vpop.f32.mrf.mxu0
  %v1028 = vadd.f32 %v939, %v1027
  %v1029 = vpop.f32.mrf.mxu0
  %v1030 = vadd.f32 %v941, %v1029
  %1031 = vdwg.mxu0
  %1032 = vmatpush.bf16.msra.mxu0 %v756
  %1033 = vmatpush.bf16.msra.mxu0 %v755
  %1034 = vmatpush.bf16.msra.mxu0 %v754
  %1035 = vmatpush.bf16.msra.mxu0 %v753
  %1036 = vmatpush.bf16.msra.mxu0 %v752
  %1037 = vmatpush.bf16.msra.mxu0 %v751
  %1038 = vmatpush.bf16.msra.mxu0 %v750
  %1039 = vmatpush.bf16.msra.mxu0 %v749
  %1040 = vmatmul.bf16.gmra.mxu0 %v447
  %v1041 = vpop.f32.mrf.mxu0
  %v1042 = vadd.f32 %v953, %v1041
  %v1043 = vpop.f32.mrf.mxu0
  %v1044 = vadd.f32 %v955, %v1043
  %1045 = vmatmul.bf16.gmra.mxu0 %v452
  %v1046 = vpop.f32.mrf.mxu0
  %v1047 = vadd.f32 %v958, %v1046
  %v1048 = vpop.f32.mrf.mxu0
  %v1049 = vadd.f32 %v960, %v1048
  %1050 = vmatmul.bf16.gmra.mxu0 %v457
  %v1051 = vpop.f32.mrf.mxu0
  %v1052 = vadd.f32 %v963, %v1051
  %v1053 = vpop.f32.mrf.mxu0
  %v1054 = vadd.f32 %v965, %v1053
  %1055 = vmatmul.bf16.gmra.mxu0 %v462
  %v1056 = vpop.f32.mrf.mxu0
  %v1057 = vadd.f32 %v968, %v1056
  %v1058 = vpop.f32.mrf.mxu0
  %v1059 = vadd.f32 %v970, %v1058
  %1060 = vmatmul.bf16.gmra.mxu0 %v467
  %v1061 = vpop.f32.mrf.mxu0
  %v1062 = vadd.f32 %v973, %v1061
  %v1063 = vpop.f32.mrf.mxu0
  %v1064 = vadd.f32 %v975, %v1063
  %1065 = vmatmul.bf16.gmra.mxu0 %v472
  %v1066 = vpop.f32.mrf.mxu0
  %v1067 = vadd.f32 %v978, %v1066
  %v1068 = vpop.f32.mrf.mxu0
  %v1069 = vadd.f32 %v980, %v1068
  %1070 = vmatmul.bf16.gmra.mxu0 %v477
  %v1071 = vpop.f32.mrf.mxu0
  %v1072 = vadd.f32 %v983, %v1071
  %v1073 = vpop.f32.mrf.mxu0
  %v1074 = vadd.f32 %v985, %v1073
  %1075 = vmatmul.bf16.gmra.mxu0 %v482
  %v1076 = vpop.f32.mrf.mxu0
  %v1077 = vadd.f32 %v988, %v1076
  %v1078 = vpop.f32.mrf.mxu0
  %v1079 = vadd.f32 %v990, %v1078
  %1080 = vmatmul.bf16.gmra.mxu0 %v487
  %v1081 = vpop.f32.mrf.mxu0
  %v1082 = vadd.f32 %v993, %v1081
  %v1083 = vpop.f32.mrf.mxu0
  %v1084 = vadd.f32 %v995, %v1083
  %1085 = vmatmul.bf16.gmra.mxu0 %v492
  %v1086 = vpop.f32.mrf.mxu0
  %v1087 = vadd.f32 %v998, %v1086
  %v1088 = vpop.f32.mrf.mxu0
  %v1089 = vadd.f32 %v1000, %v1088
  %1090 = vmatmul.bf16.gmra.mxu0 %v497
  %v1091 = vpop.f32.mrf.mxu0
  %v1092 = vadd.f32 %v1003, %v1091
  %v1093 = vpop.f32.mrf.mxu0
  %v1094 = vadd.f32 %v1005, %v1093
  %1095 = vmatmul.bf16.gmra.mxu0 %v502
  %v1096 = vpop.f32.mrf.mxu0
  %v1097 = vadd.f32 %v1008, %v1096
  %v1098 = vpop.f32.mrf.mxu0
  %v1099 = vadd.f32 %v1010, %v1098
  %1100 = vmatmul.bf16.gmra.mxu0 %v507
  %v1101 = vpop.f32.mrf.mxu0
  %v1102 = vadd.f32 %v1013, %v1101
  %v1103 = vpop.f32.mrf.mxu0
  %v1104 = vadd.f32 %v1015, %v1103
  %1105 = vmatmul.bf16.gmra.mxu0 %v512
  %v1106 = vpop.f32.mrf.mxu0
  %v1107 = vadd.f32 %v1018, %v1106
  %v1108 = vpop.f32.mrf.mxu0
  %v1109 = vadd.f32 %v1020, %v1108
  %1110 = vmatmul.bf16.gmra.mxu0 %v517
  %v1111 = vpop.f32.mrf.mxu0
  %v1112 = vadd.f32 %v1023, %v1111
  %v1113 = vpop.f32.mrf.mxu0
  %v1114 = vadd.f32 %v1025, %v1113
  %1115 = vmatmul.bf16.gmra.mxu0 %v522
  %v1116 = vpop.f32.mrf.mxu0
  %v1117 = vadd.f32 %v1028, %v1116
  %v1118 = vpop.f32.mrf.mxu0
  %v1119 = vadd.f32 %v1030, %v1118
  %1120 = vdwg.mxu0
  %1121 = vmatpush.bf16.msra.mxu0 %v764
  %1122 = vmatpush.bf16.msra.mxu0 %v763
  %1123 = vmatpush.bf16.msra.mxu0 %v762
  %1124 = vmatpush.bf16.msra.mxu0 %v761
  %1125 = vmatpush.bf16.msra.mxu0 %v760
  %1126 = vmatpush.bf16.msra.mxu0 %v759
  %1127 = vmatpush.bf16.msra.mxu0 %v758
  %1128 = vmatpush.bf16.msra.mxu0 %v757
  %1129 = vmatmul.bf16.gmra.mxu0 %v448
  %v1130 = vpop.f32.mrf.mxu0
  %v1131 = vadd.f32 %v1042, %v1130
  %v1132 = vpop.f32.mrf.mxu0
  %v1133 = vadd.f32 %v1044, %v1132
  %1134 = vmatmul.bf16.gmra.mxu0 %v453
  %v1135 = vpop.f32.mrf.mxu0
  %v1136 = vadd.f32 %v1047, %v1135
  %v1137 = vpop.f32.mrf.mxu0
  %v1138 = vadd.f32 %v1049, %v1137
  %1139 = vmatmul.bf16.gmra.mxu0 %v458
  %v1140 = vpop.f32.mrf.mxu0
  %v1141 = vadd.f32 %v1052, %v1140
  %v1142 = vpop.f32.mrf.mxu0
  %v1143 = vadd.f32 %v1054, %v1142
  %1144 = vmatmul.bf16.gmra.mxu0 %v463
  %v1145 = vpop.f32.mrf.mxu0
  %v1146 = vadd.f32 %v1057, %v1145
  %v1147 = vpop.f32.mrf.mxu0
  %v1148 = vadd.f32 %v1059, %v1147
  %1149 = vmatmul.bf16.gmra.mxu0 %v468
  %v1150 = vpop.f32.mrf.mxu0
  %v1151 = vadd.f32 %v1062, %v1150
  %v1152 = vpop.f32.mrf.mxu0
  %v1153 = vadd.f32 %v1064, %v1152
  %1154 = vmatmul.bf16.gmra.mxu0 %v473
  %v1155 = vpop.f32.mrf.mxu0
  %v1156 = vadd.f32 %v1067, %v1155
  %v1157 = vpop.f32.mrf.mxu0
  %v1158 = vadd.f32 %v1069, %v1157
  %1159 = vmatmul.bf16.gmra.mxu0 %v478
  %v1160 = vpop.f32.mrf.mxu0
  %v1161 = vadd.f32 %v1072, %v1160
  %v1162 = vpop.f32.mrf.mxu0
  %v1163 = vadd.f32 %v1074, %v1162
  %1164 = vmatmul.bf16.gmra.mxu0 %v483
  %v1165 = vpop.f32.mrf.mxu0
  %v1166 = vadd.f32 %v1077, %v1165
  %v1167 = vpop.f32.mrf.mxu0
  %v1168 = vadd.f32 %v1079, %v1167
  %1169 = vmatmul.bf16.gmra.mxu0 %v488
  %v1170 = vpop.f32.mrf.mxu0
  %v1171 = vadd.f32 %v1082, %v1170
  %v1172 = vpop.f32.mrf.mxu0
  %v1173 = vadd.f32 %v1084, %v1172
  %1174 = vmatmul.bf16.gmra.mxu0 %v493
  %v1175 = vpop.f32.mrf.mxu0
  %v1176 = vadd.f32 %v1087, %v1175
  %v1177 = vpop.f32.mrf.mxu0
  %v1178 = vadd.f32 %v1089, %v1177
  %1179 = vmatmul.bf16.gmra.mxu0 %v498
  %v1180 = vpop.f32.mrf.mxu0
  %v1181 = vadd.f32 %v1092, %v1180
  %v1182 = vpop.f32.mrf.mxu0
  %v1183 = vadd.f32 %v1094, %v1182
  %1184 = vmatmul.bf16.gmra.mxu0 %v503
  %v1185 = vpop.f32.mrf.mxu0
  %v1186 = vadd.f32 %v1097, %v1185
  %v1187 = vpop.f32.mrf.mxu0
  %v1188 = vadd.f32 %v1099, %v1187
  %1189 = vmatmul.bf16.gmra.mxu0 %v508
  %v1190 = vpop.f32.mrf.mxu0
  %v1191 = vadd.f32 %v1102, %v1190
  %v1192 = vpop.f32.mrf.mxu0
  %v1193 = vadd.f32 %v1104, %v1192
  %1194 = vmatmul.bf16.gmra.mxu0 %v513
  %v1195 = vpop.f32.mrf.mxu0
  %v1196 = vadd.f32 %v1107, %v1195
  %v1197 = vpop.f32.mrf.mxu0
  %v1198 = vadd.f32 %v1109, %v1197
  %1199 = vmatmul.bf16.gmra.mxu0 %v518
  %v1200 = vpop.f32.mrf.mxu0
  %v1201 = vadd.f32 %v1112, %v1200
  %v1202 = vpop.f32.mrf.mxu0
  %v1203 = vadd.f32 %v1114, %v1202
  %1204 = vmatmul.bf16.gmra.mxu0 %v523
  %v1205 = vpop.f32.mrf.mxu0
  %v1206 = vadd.f32 %v1117, %v1205
  %v1207 = vpop.f32.mrf.mxu0
  %v1208 = vadd.f32 %v1119, %v1207
  %1209 = vdwg.mxu0
  %1210 = vmatpush.bf16.msra.mxu0 0
  %1211 = vmatpush.bf16.msra.mxu0 0
  %1212 = vmatpush.bf16.msra.mxu0 0
  %1213 = vmatpush.bf16.msra.mxu0 0
  %1214 = vmatpush.bf16.msra.mxu0 %v768
  %1215 = vmatpush.bf16.msra.mxu0 %v767
  %1216 = vmatpush.bf16.msra.mxu0 %v766
  %1217 = vmatpush.bf16.msra.mxu0 %v765
  %1218 = vmatmul.bf16.gmra.mxu0 %v807
  %v1219 = vpop.f32.mrf.mxu0
  %v1220 = vadd.f32 %v1131, %v1219
  %v1221 = vpop.f32.mrf.mxu0
  %v1222 = vadd.f32 %v1133, %v1221
  %1223 = vmatmul.bf16.gmra.mxu0 %v810
  %v1224 = vpop.f32.mrf.mxu0
  %v1225 = vadd.f32 %v1136, %v1224
  %v1226 = vpop.f32.mrf.mxu0
  %v1227 = vadd.f32 %v1138, %v1226
  %1228 = vmatmul.bf16.gmra.mxu0 %v813
  %v1229 = vpop.f32.mrf.mxu0
  %v1230 = vadd.f32 %v1141, %v1229
  %v1231 = vpop.f32.mrf.mxu0
  %v1232 = vadd.f32 %v1143, %v1231
  %1233 = vmatmul.bf16.gmra.mxu0 %v816
  %v1234 = vpop.f32.mrf.mxu0
  %v1235 = vadd.f32 %v1146, %v1234
  %v1236 = vpop.f32.mrf.mxu0
  %v1237 = vadd.f32 %v1148, %v1236
  %1238 = vmatmul.bf16.gmra.mxu0 %v819
  %v1239 = vpop.f32.mrf.mxu0
  %v1240 = vadd.f32 %v1151, %v1239
  %v1241 = vpop.f32.mrf.mxu0
  %v1242 = vadd.f32 %v1153, %v1241
  %1243 = vmatmul.bf16.gmra.mxu0 %v822
  %v1244 = vpop.f32.mrf.mxu0
  %v1245 = vadd.f32 %v1156, %v1244
  %v1246 = vpop.f32.mrf.mxu0
  %v1247 = vadd.f32 %v1158, %v1246
  %1248 = vmatmul.bf16.gmra.mxu0 %v825
  %v1249 = vpop.f32.mrf.mxu0
  %v1250 = vadd.f32 %v1161, %v1249
  %v1251 = vpop.f32.mrf.mxu0
  %v1252 = vadd.f32 %v1163, %v1251
  %1253 = vmatmul.bf16.gmra.mxu0 %v828
  %v1254 = vpop.f32.mrf.mxu0
  %v1255 = vadd.f32 %v1166, %v1254
  %v1256 = vpop.f32.mrf.mxu0
  %v1257 = vadd.f32 %v1168, %v1256
  %1258 = vmatmul.bf16.gmra.mxu0 %v831
  %v1259 = vpop.f32.mrf.mxu0
  %v1260 = vadd.f32 %v1171, %v1259
  %v1261 = vpop.f32.mrf.mxu0
  %v1262 = vadd.f32 %v1173, %v1261
  %1263 = vmatmul.bf16.gmra.mxu0 %v834
  %v1264 = vpop.f32.mrf.mxu0
  %v1265 = vadd.f32 %v1176, %v1264
  %v1266 = vpop.f32.mrf.mxu0
  %v1267 = vadd.f32 %v1178, %v1266
  %1268 = vmatmul.bf16.gmra.mxu0 %v837
  %v1269 = vpop.f32.mrf.mxu0
  %v1270 = vadd.f32 %v1181, %v1269
  %v1271 = vpop.f32.mrf.mxu0
  %v1272 = vadd.f32 %v1183, %v1271
  %1273 = vmatmul.bf16.gmra.mxu0 %v840
  %v1274 = vpop.f32.mrf.mxu0
  %v1275 = vadd.f32 %v1186, %v1274
  %v1276 = vpop.f32.mrf.mxu0
  %v1277 = vadd.f32 %v1188, %v1276
  %1278 = vmatmul.bf16.gmra.mxu0 %v843
  %v1279 = vpop.f32.mrf.mxu0
  %v1280 = vadd.f32 %v1191, %v1279
  %v1281 = vpop.f32.mrf.mxu0
  %v1282 = vadd.f32 %v1193, %v1281
  %1283 = vmatmul.bf16.gmra.mxu0 %v846
  %v1284 = vpop.f32.mrf.mxu0
  %v1285 = vadd.f32 %v1196, %v1284
  %v1286 = vpop.f32.mrf.mxu0
  %v1287 = vadd.f32 %v1198, %v1286
  %1288 = vmatmul.bf16.gmra.mxu0 %v849
  %v1289 = vpop.f32.mrf.mxu0
  %v1290 = vadd.f32 %v1201, %v1289
  %v1291 = vpop.f32.mrf.mxu0
  %v1292 = vadd.f32 %v1203, %v1291
  %1293 = vmatmul.bf16.gmra.mxu0 %v852
  %v1294 = vpop.f32.mrf.mxu0
  %v1295 = vadd.f32 %v1206, %v1294
  %v1296 = vpop.f32.mrf.mxu0
  %v1297 = vadd.f32 %v1208, %v1296
  %1298 = vdwg.mxu0
  %v1299 = vmax.f32 %v1220, %v1225
  %v1300 = vmax.f32 %v1222, %v1227
  %v1301 = vmax.f32 %v1230, %v1235
  %v1302 = vmax.f32 %v1232, %v1237
  %v1303 = vmax.f32 %v1299, %v1301
  %v1304 = vmax.f32 %v1300, %v1302
  %v1305 = vld [vmem:[%s2] sm:$0x1]
  %v1307 = vperm.slane %v1305, 0
  %v1309 = vadd.f32 %v1303, %v1307
  %v1310 = vadd.f32 %v1304, %v1307
  %v1311 = vmax.f32 %v1309, 0.0
  %v1312 = vmax.f32 %v1310, 0.0
  %v1313 = vpack.c.bf16 %v1312, %v1311
  %v1314 = vld [vmem:[%s3] sm:$0xf]
  %v1315 = vld [vmem:[%s3 + $0x4] sm:$0xf]
  %v1316 = vld [vmem:[%s3 + $0x8] sm:$0xf]
  %v1317 = vld [vmem:[%s3 + $0xc] sm:$0xf]
  %v1318 = vld [vmem:[%s3 + $0x10] sm:$0xf]
  %v1319 = vld [vmem:[%s3 + $0x14] sm:$0xf]
  %v1320 = vld [vmem:[%s3 + $0x18] sm:$0xf]
  %v1321 = vld [vmem:[%s3 + $0x1c] sm:$0xf]
  %v1322 = vmax.f32 %v1240, %v1245
  %v1323 = vmax.f32 %v1242, %v1247
  %v1324 = vmax.f32 %v1250, %v1255
  %v1325 = vmax.f32 %v1252, %v1257
  %v1326 = vmax.f32 %v1322, %v1324
  %v1327 = vmax.f32 %v1323, %v1325
  %v1328 = vadd.f32 %v1326, %v1307
  %v1329 = vadd.f32 %v1327, %v1307
  %v1330 = vmax.f32 %v1328, 0.0
  %v1331 = vmax.f32 %v1329, 0.0
  %v1332 = vpack.c.bf16 %v1331, %v1330
  %s1333 = scalar_lea.vmem %s3, 32
  %v1334 = vld [vmem:[%s1333] sm:$0xf]
  %v1335 = vld [vmem:[%s1333 + $0x4] sm:$0xf]
  %v1336 = vld [vmem:[%s1333 + $0x8] sm:$0xf]
  %v1337 = vld [vmem:[%s1333 + $0xc] sm:$0xf]
  %v1338 = vld [vmem:[%s1333 + $0x10] sm:$0xf]
  %v1339 = vld [vmem:[%s1333 + $0x14] sm:$0xf]
  %v1340 = vld [vmem:[%s1333 + $0x18] sm:$0xf]
  %v1341 = vld [vmem:[%s1333 + $0x1c] sm:$0xf]
  %v1350 = vunpack.c.l.b16 %v1334
  %v1351 = vunpack.c.l.b16 %v1335
  %v1352 = vunpack.c.l.b16 %v1336
  %v1353 = vunpack.c.l.b16 %v1337
  %v1354 = vunpack.c.l.b16 %v1338
  %v1355 = vunpack.c.l.b16 %v1339
  %v1356 = vunpack.c.l.b16 %v1340
  %v1357 = vunpack.c.l.b16 %v1341
  %v1358 = vpack.c.b16 %v1351, %v1350
  %v1359 = vpack.c.b16 %v1353, %v1352
  %v1360 = vpack.c.b16 %v1355, %v1354
  %v1361 = vpack.c.b16 %v1357, %v1356
  %v1367 = vsel %vm805, %v1332, 0
  %1369 = vmatpush.bf16.msra.mxu0 0
  %1370 = vmatpush.bf16.msra.mxu0 0
  %1371 = vmatpush.bf16.msra.mxu0 0
  %1372 = vmatpush.bf16.msra.mxu0 0
  %1373 = vmatpush.bf16.msra.mxu0 %v1361
  %1374 = vmatpush.bf16.msra.mxu0 %v1360
  %1375 = vmatpush.bf16.msra.mxu0 %v1359
  %1376 = vmatpush.bf16.msra.mxu0 %v1358
  %1377 = vmatmul.bf16.gmra.mxu0 %v1367
  %v1378 = vpop.f32.mrf.mxu0
  %v1379 = vadd.f32 0.0, %v1378
  %v1380 = vpop.f32.mrf.mxu0
  %v1381 = vadd.f32 0.0, %v1380
  %1382 = vdwg.mxu0
  %v1391 = vunpack.c.l.b16 %v1314
  %v1392 = vunpack.c.l.b16 %v1315
  %v1393 = vunpack.c.l.b16 %v1316
  %v1394 = vunpack.c.l.b16 %v1317
  %v1395 = vunpack.c.l.b16 %v1318
  %v1396 = vunpack.c.l.b16 %v1319
  %v1397 = vunpack.c.l.b16 %v1320
  %v1398 = vunpack.c.l.b16 %v1321
  %v1399 = vpack.c.b16 %v1392, %v1391
  %v1400 = vpack.c.b16 %v1394, %v1393
  %v1401 = vpack.c.b16 %v1396, %v1395
  %v1402 = vpack.c.b16 %v1398, %v1397
  %v1408 = vsel %vm805, %v1313, 0
  %1410 = vmatpush.bf16.msra.mxu0 0
  %1411 = vmatpush.bf16.msra.mxu0 0
  %1412 = vmatpush.bf16.msra.mxu0 0
  %1413 = vmatpush.bf16.msra.mxu0 0
  %1414 = vmatpush.bf16.msra.mxu0 %v1402
  %1415 = vmatpush.bf16.msra.mxu0 %v1401
  %1416 = vmatpush.bf16.msra.mxu0 %v1400
  %1417 = vmatpush.bf16.msra.mxu0 %v1399
  %1418 = vmatmul.bf16.gmra.mxu0 %v1408
  %v1419 = vpop.f32.mrf.mxu0
  %v1420 = vadd.f32 %v1379, %v1419
  %v1421 = vpop.f32.mrf.mxu0
  %v1422 = vadd.f32 %v1381, %v1421
  %1423 = vdwg.mxu0
  %v1424 = vmax.f32 %v1260, %v1265
  %v1425 = vmax.f32 %v1262, %v1267
  %v1426 = vmax.f32 %v1270, %v1275
  %v1427 = vmax.f32 %v1272, %v1277
  %v1428 = vmax.f32 %v1424, %v1426
  %v1429 = vmax.f32 %v1425, %v1427
  %v1430 = vadd.f32 %v1428, %v1307
  %v1431 = vadd.f32 %v1429, %v1307
  %v1432 = vmax.f32 %v1430, 0.0
  %v1433 = vmax.f32 %v1431, 0.0
  %v1434 = vpack.c.bf16 %v1433, %v1432
  %s1435 = scalar_lea.vmem %s3, 64
  %v1436 = vld [vmem:[%s1435] sm:$0xf]
  %v1437 = vld [vmem:[%s1435 + $0x4] sm:$0xf]
  %v1438 = vld [vmem:[%s1435 + $0x8] sm:$0xf]
  %v1439 = vld [vmem:[%s1435 + $0xc] sm:$0xf]
  %v1440 = vld [vmem:[%s1435 + $0x10] sm:$0xf]
  %v1441 = vld [vmem:[%s1435 + $0x14] sm:$0xf]
  %v1442 = vld [vmem:[%s1435 + $0x18] sm:$0xf]
  %v1443 = vld [vmem:[%s1435 + $0x1c] sm:$0xf]
  %v1452 = vunpack.c.l.b16 %v1436
  %v1453 = vunpack.c.l.b16 %v1437
  %v1454 = vunpack.c.l.b16 %v1438
  %v1455 = vunpack.c.l.b16 %v1439
  %v1456 = vunpack.c.l.b16 %v1440
  %v1457 = vunpack.c.l.b16 %v1441
  %v1458 = vunpack.c.l.b16 %v1442
  %v1459 = vunpack.c.l.b16 %v1443
  %v1460 = vpack.c.b16 %v1453, %v1452
  %v1461 = vpack.c.b16 %v1455, %v1454
  %v1462 = vpack.c.b16 %v1457, %v1456
  %v1463 = vpack.c.b16 %v1459, %v1458
  %v1469 = vsel %vm805, %v1434, 0
  %1471 = vmatpush.bf16.msra.mxu0 0
  %1472 = vmatpush.bf16.msra.mxu0 0
  %1473 = vmatpush.bf16.msra.mxu0 0
  %1474 = vmatpush.bf16.msra.mxu0 0
  %1475 = vmatpush.bf16.msra.mxu0 %v1463
  %1476 = vmatpush.bf16.msra.mxu0 %v1462
  %1477 = vmatpush.bf16.msra.mxu0 %v1461
  %1478 = vmatpush.bf16.msra.mxu0 %v1460
  %1479 = vmatmul.bf16.gmra.mxu0 %v1469
  %v1480 = vpop.f32.mrf.mxu0
  %v1481 = vadd.f32 0.0, %v1480
  %v1482 = vpop.f32.mrf.mxu0
  %v1483 = vadd.f32 0.0, %v1482
  %1484 = vdwg.mxu0
  %v1485 = vadd.f32 %v1420, %v1481
  %v1486 = vadd.f32 %v1422, %v1483
  %v1487 = vmax.f32 %v1280, %v1285
  %v1488 = vmax.f32 %v1282, %v1287
  %v1489 = vmax.f32 %v1290, %v1295
  %v1490 = vmax.f32 %v1292, %v1297
  %v1491 = vmax.f32 %v1487, %v1489
  %v1492 = vmax.f32 %v1488, %v1490
  %v1493 = vadd.f32 %v1491, %v1307
  %v1494 = vadd.f32 %v1492, %v1307
  %v1495 = vmax.f32 %v1493, 0.0
  %v1496 = vmax.f32 %v1494, 0.0
  %v1497 = vpack.c.bf16 %v1496, %v1495
  %s1498 = scalar_lea.vmem %s3, 96
  %v1499 = vld [vmem:[%s1498] sm:$0xf]
  %v1500 = vld [vmem:[%s1498 + $0x4] sm:$0xf]
  %v1501 = vld [vmem:[%s1498 + $0x8] sm:$0xf]
  %v1502 = vld [vmem:[%s1498 + $0xc] sm:$0xf]
  %v1503 = vld [vmem:[%s1498 + $0x10] sm:$0xf]
  %v1504 = vld [vmem:[%s1498 + $0x14] sm:$0xf]
  %v1505 = vld [vmem:[%s1498 + $0x18] sm:$0xf]
  %v1506 = vld [vmem:[%s1498 + $0x1c] sm:$0xf]
  %v1515 = vunpack.c.l.b16 %v1499
  %v1516 = vunpack.c.l.b16 %v1500
  %v1517 = vunpack.c.l.b16 %v1501
  %v1518 = vunpack.c.l.b16 %v1502
  %v1519 = vunpack.c.l.b16 %v1503
  %v1520 = vunpack.c.l.b16 %v1504
  %v1521 = vunpack.c.l.b16 %v1505
  %v1522 = vunpack.c.l.b16 %v1506
  %v1523 = vpack.c.b16 %v1516, %v1515
  %v1524 = vpack.c.b16 %v1518, %v1517
  %v1525 = vpack.c.b16 %v1520, %v1519
  %v1526 = vpack.c.b16 %v1522, %v1521
  %v1532 = vsel %vm805, %v1497, 0
  %1534 = vmatpush.bf16.msra.mxu0 0
  %1535 = vmatpush.bf16.msra.mxu0 0
  %1536 = vmatpush.bf16.msra.mxu0 0
  %1537 = vmatpush.bf16.msra.mxu0 0
  %1538 = vmatpush.bf16.msra.mxu0 %v1526
  %1539 = vmatpush.bf16.msra.mxu0 %v1525
  %1540 = vmatpush.bf16.msra.mxu0 %v1524
  %1541 = vmatpush.bf16.msra.mxu0 %v1523
  %1542 = vmatmul.bf16.gmra.mxu0 %v1532
  %v1543 = vpop.f32.mrf.mxu0
  %v1544 = vadd.f32 0.0, %v1543
  %v1545 = vpop.f32.mrf.mxu0
  %v1546 = vadd.f32 0.0, %v1545
  %1547 = vdwg.mxu0
  %v1548 = vadd.f32 %v1485, %v1544
  %v1549 = vadd.f32 %v1486, %v1546
  %v1550 = vld [vmem:[%s4] sm:$0x1]
  %v1552 = vperm.slane %v1550, 0
  %v1554 = vadd.f32 %v1548, %v1552
  %v1555 = vadd.f32 %v1549, %v1552
  %vm1556 = vcmask 80896
  %1557 = vst.msk [vmem:[%s5] sm:$0xff] %vm1556, %v1554
  %1558 = vst.msk [vmem:[%s5 + $0x8] sm:$0xff] %vm1556, %v1555
  // Predicated region
  $region22: #{net_forward.5} parent=0 // pred_check
    _
  $region23: #{net_forward.5} parent=0 // pred_check_branch
    %1560 = sbr.rel (0) target = $region25
  $region24: #{net_forward.5} parent=0 // pred_region
    _
  $region25: #{net_forward.5} parent=0 // pred_fallthru
    _
  // Predicated region
  $region26: #{net_forward.5} parent=0 // pred_check
    _
  $region27: #{net_forward.5} parent=0 // pred_check_branch
    %1562 = sbr.rel (0) target = $region29
  $region28: #{net_forward.5} parent=0 // pred_region
    _
  $region29: #{net_forward.5} parent=0 // pred_fallthru
    _

</llo_original>
